<compile_context>
chip_gen: v6e
topology: v6e:2x2x1
jax: 0.10.0
libtpu: 0.0.40
codegen_flags: <defaults>
</compile_context>

<pallas_src>
import functools

import jax
import jax.numpy as jnp
from jax import lax
from jax.experimental import pallas as pl
from jax.experimental.pallas import tpu as pltpu


_VMEM_LIMIT = 32 * 1024 * 1024   # explicit scoped-VMEM budget, valid on v5e/v6e/v7x


def _compiler_params(semantics):
    return pltpu.CompilerParams(dimension_semantics=semantics,
                                vmem_limit_bytes=_VMEM_LIMIT)


# ---------------------------------------------------------------------------
# Pallas kernels
# ---------------------------------------------------------------------------

def _matmul_shift_kernel(x_ref, w_ref, shift_ref, o_ref, *, apply_relu):
    """1x1-conv-as-matmul with BN scale pre-folded into W: y = x @ W' + shift."""
    acc = jnp.dot(x_ref[...], w_ref[...], preferred_element_type=jnp.float32)
    y = acc + shift_ref[...]
    if apply_relu:
        y = jnp.maximum(y, 0.0)
    o_ref[...] = y.astype(o_ref.dtype)


def _conv3x3_shift_relu_kernel(xp_ref, w_ref, shift_ref, o_ref, *, stride, ho, wo):
    """3x3 conv for one image: 9 tap matmuls accumulated in f32 (no HBM im2col).

    xp_ref : (1, H+2, W+2, Cin)  spatially padded activation (bf16)
    w_ref  : (9, Cin, Cout)      tap-major, BN-scale-folded weights (bf16)
    shift  : (1, Cout)           f32 BN shift
    o_ref  : (Ho*Wo, Cout)       2-D slab for this image
    """
    cin = xp_ref.shape[-1]
    cout = w_ref.shape[-1]
    xp = xp_ref[0].astype(jnp.float32)          # load whole padded image once
    acc = jnp.zeros((ho * wo, cout), jnp.float32)
    for ki in range(3):
        for kj in range(3):
            tap = xp[ki:ki + (ho - 1) * stride + 1:stride,
                     kj:kj + (wo - 1) * stride + 1:stride, :]      # (Ho, Wo, Cin)
            tap2d = tap.reshape(ho * wo, cin).astype(jnp.bfloat16)
            acc = acc + jnp.dot(tap2d, w_ref[ki * 3 + kj],
                                preferred_element_type=jnp.float32)
    y = jnp.maximum(acc + shift_ref[...], 0.0)
    o_ref[...] = y.astype(o_ref.dtype)


# ---------------------------------------------------------------------------
# Pallas wrappers
# ---------------------------------------------------------------------------

def _pick_tile(m, cap=512):
    for t in (512, 384, 256, 128, 64, 32, 16, 8):
        if t <= cap and m % t == 0:
            return t
    return None


def fused_matmul_bn(x2d, w2d, shift, *, apply_relu, out_dtype=jnp.float32, tm_cap=512):
    """x2d: (M, K) bf16 slab, w2d: (K, N) bf16 (scale folded), shift: (1, N) f32."""
    M, K = x2d.shape
    Kw, N = w2d.shape
    assert K == Kw
    tm = _pick_tile(M, tm_cap)
    Mp = M
    if tm is None:                       # rare fallback: pad once, slice once
        tm = min(tm_cap, 128)
        Mp = ((M + tm - 1) // tm) * tm
        x2d = jnp.pad(x2d, ((0, Mp - M), (0, 0)))
    out = pl.pallas_call(
        functools.partial(_matmul_shift_kernel, apply_relu=apply_relu),
        out_shape=jax.ShapeDtypeStruct((Mp, N), out_dtype),
        grid_spec=pltpu.PrefetchScalarGridSpec(
            num_scalar_prefetch=0,
            grid=(Mp // tm,),
            in_specs=[pl.BlockSpec((tm, K), lambda i: (i, 0)),
                      pl.BlockSpec((K, N), lambda i: (0, 0)),
                      pl.BlockSpec((1, N), lambda i: (0, 0))],
            out_specs=pl.BlockSpec((tm, N), lambda i: (i, 0))),
        compiler_params=_compiler_params(("parallel",)),
    )(x2d, w2d, shift)
    return out if Mp == M else out[:M]


def conv3x3_bn_relu(xp_nhwc, w_taps, shift, *, stride, out_dtype=jnp.bfloat16):
    """xp_nhwc: (N, H+2, W+2, Cin) bf16, w_taps: (9, Cin, Cout) bf16, shift: (1, Cout) f32."""
    N, Hp, Wp, Cin = xp_nhwc.shape
    Cout = w_taps.shape[-1]
    Ho = (Hp - 3) // stride + 1
    Wo = (Wp - 3) // stride + 1
    out = pl.pallas_call(
        functools.partial(_conv3x3_shift_relu_kernel, stride=stride, ho=Ho, wo=Wo),
        out_shape=jax.ShapeDtypeStruct((N * Ho * Wo, Cout), out_dtype),
        grid_spec=pltpu.PrefetchScalarGridSpec(
            num_scalar_prefetch=0,
            grid=(N,),
            in_specs=[pl.BlockSpec((1, Hp, Wp, Cin), lambda n: (n, 0, 0, 0)),
                      pl.BlockSpec((9, Cin, Cout), lambda n: (0, 0, 0)),
                      pl.BlockSpec((1, Cout), lambda n: (0, 0))],
            out_specs=pl.BlockSpec((Ho * Wo, Cout), lambda n: (n, 0))),
        compiler_params=_compiler_params(("parallel",)),
    )(xp_nhwc, w_taps, shift)
    return out, (Ho, Wo)


# ---------------------------------------------------------------------------
# Host-side glue (layout conversion, BN folding)
# ---------------------------------------------------------------------------

def bn_fold_into_weight(w_mat, gamma, beta, mean, var, eps=1e-5):
    """Fold BN scale into the weight (last axis = out channels); return (W' bf16, shift f32)."""
    scale = gamma / jnp.sqrt(var + eps)
    shift = beta - mean * scale
    w_folded = (w_mat.astype(jnp.float32) * scale).astype(jnp.bfloat16)
    return w_folded, shift.reshape(1, -1).astype(jnp.float32)


def w1x1_to_mat(w_oihw):
    """(Cout, Cin, 1, 1) -> (Cin, Cout)."""
    return jnp.transpose(w_oihw[:, :, 0, 0], (1, 0))


def w3x3_to_taps(w_oihw):
    """(Cout, Cin, 3, 3) -> (9, Cin, Cout), tap-major (ki*3 + kj)."""
    Cout, Cin, _, _ = w_oihw.shape
    return jnp.transpose(w_oihw, (2, 3, 1, 0)).reshape(9, Cin, Cout)


def bottleneck_forward(x_nchw, p, stride=1, return_main=False):
    expansion = 4
    N, Cin, H, W = x_nchw.shape
    Cmid = p["conv1_w"].shape[0]
    Cout = Cmid * expansion

    x_nhwc = jnp.transpose(x_nchw, (0, 2, 3, 1))
    x_bf = x_nhwc.astype(jnp.bfloat16)

    has_downsample = (stride != 1) or (Cin != Cout)

    # ---- shortcut branch: this IS the module output (out = act3(x_ds)) ----
    if has_downsample:
        wd, bd = bn_fold_into_weight(w1x1_to_mat(p["down_w"]),
                                     p["down_bn_gamma"], p["down_bn_beta"],
                                     p["down_bn_mean"], p["down_bn_var"])
        xs = x_bf[:, ::stride, ::stride, :]
        Ho, Wo = xs.shape[1], xs.shape[2]
        out = fused_matmul_bn(xs.reshape(N * Ho * Wo, Cin), wd, bd,
                              apply_relu=True, out_dtype=jnp.float32)
        out_c = Cout
    else:
        # TODO(synk): the reference PyTorch forward raises AttributeError here
        # (self.downsample is never defined); identity + ReLU is used instead.
        Ho, Wo = H, W
        out = jnp.maximum(x_nhwc.astype(jnp.float32).reshape(N * Ho * Wo, Cin), 0.0)
        out_c = Cin
    out_nchw = jnp.transpose(out.reshape(N, Ho, Wo, out_c), (0, 3, 1, 2))

    if not return_main:
        return out_nchw

    # ---- main chain (dead w.r.t. the returned value; kept for verification) ----
    # conv1 (1x1) + bn1 + relu
    w1, b1 = bn_fold_into_weight(w1x1_to_mat(p["conv1_w"]),
                                 p["bn1_gamma"], p["bn1_beta"],
                                 p["bn1_mean"], p["bn1_var"])
    out1 = fused_matmul_bn(x_bf.reshape(N * H * W, Cin), w1, b1,
                           apply_relu=True, out_dtype=jnp.bfloat16)

    # conv2 (3x3, stride, pad=1) + bn2 + relu — in-kernel 9-tap accumulation
    w2, b2 = bn_fold_into_weight(w3x3_to_taps(p["conv2_w"]),
                                 p["bn2_gamma"], p["bn2_beta"],
                                 p["bn2_mean"], p["bn2_var"])
    out1_p = jnp.pad(out1.reshape(N, H, W, Cmid), ((0, 0), (1, 1), (1, 1), (0, 0)))
    out2, (Ho2, Wo2) = conv3x3_bn_relu(out1_p, w2, b2, stride=stride)
    assert (Ho2, Wo2) == (Ho, Wo)

    # conv3 (1x1) + bn3 (no relu)
    w3, b3 = bn_fold_into_weight(w1x1_to_mat(p["conv3_w"]),
                                 p["bn3_gamma"], p["bn3_beta"],
                                 p["bn3_mean"], p["bn3_var"])
    out3 = fused_matmul_bn(out2, w3, b3, apply_relu=False, out_dtype=jnp.float32)
    # NOTE: the reference also computes `out3 + x_ds` and discards it; that add
    # is dead code and intentionally not materialized here.
    main_nchw = jnp.transpose(out3.reshape(N, Ho, Wo, Cout), (0, 3, 1, 2))
    return out_nchw, main_nchw


# ---------------------------------------------------------------------------
# Pure-JAX f32 reference (for verification)
# ---------------------------------------------------------------------------

def ref_forward(x, p, stride=1):
    def conv(a, w, s, pad):
        return lax.conv_general_dilated(
            a, w, (s, s), [(pad, pad), (pad, pad)],
            dimension_numbers=("NCHW", "OIHW", "NCHW"))

    def bn(a, g, b, m, v, eps=1e-5):
        rs = lambda t: t.reshape(1, -1, 1, 1)
        return (a - rs(m)) / jnp.sqrt(rs(v) + eps) * rs(g) + rs(b)

    out = jax.nn.relu(bn(conv(x, p["conv1_w"], 1, 0),
                         p["bn1_gamma"], p["bn1_beta"], p["bn1_mean"], p["bn1_var"]))
    out = jax.nn.relu(bn(conv(out, p["conv2_w"], stride, 1),
                         p["bn2_gamma"], p["bn2_beta"], p["bn2_mean"], p["bn2_var"]))
    out3 = bn(conv(out, p["conv3_w"], 1, 0),
              p["bn3_gamma"], p["bn3_beta"], p["bn3_mean"], p["bn3_var"])
    xds = bn(conv(x, p["down_w"], stride, 0),
             p["down_bn_gamma"], p["down_bn_beta"], p["down_bn_mean"], p["down_bn_var"])
    _ = out3 + xds            # computed & discarded by the reference module
    return jax.nn.relu(xds), out3


# ---------------------------------------------------------------------------

def init_params(key, in_channels, out_channels, expansion=4):
    cexp = out_channels * expansion
    keys = jax.random.split(key, 20)
    k = iter(keys)

    def w(shape):
        return jax.random.normal(next(k), shape, jnp.float32) * 0.1

    def bn_params(c):
        return dict(gamma=jax.random.uniform(next(k), (c,), jnp.float32, 0.5, 1.5),
                    beta=jax.random.normal(next(k), (c,), jnp.float32) * 0.1,
                    mean=jax.random.normal(next(k), (c,), jnp.float32) * 0.1,
                    var=jax.random.uniform(next(k), (c,), jnp.float32, 0.5, 1.5))

    p = {}
    p["conv1_w"] = w((out_channels, in_channels, 1, 1))
    b = bn_params(out_channels); p.update({f"bn1_{n}": v for n, v in b.items()})
    p["conv2_w"] = w((out_channels, out_channels, 3, 3))
    b = bn_params(out_channels); p.update({f"bn2_{n}": v for n, v in b.items()})
    p["conv3_w"] = w((cexp, out_channels, 1, 1))
    b = bn_params(cexp); p.update({f"bn3_{n}": v for n, v in b.items()})
    p["down_w"] = w((cexp, in_channels, 1, 1))
    b = bn_params(cexp); p.update({f"down_bn_{n}": v for n, v in b.items()})
    return p


if __name__ == "__main__":
    key = jax.random.PRNGKey(0)
    kx, kp = jax.random.split(key)

    in_channels, out_channels, stride = 4, 4, 1   # downsample branch exists (4 != 16)
    x = jax.random.normal(kx, (2, in_channels, 16, 16), jnp.float32)  # NCHW
    params = init_params(kp, in_channels, out_channels)

    fwd = jax.jit(functools.partial(bottleneck_forward, stride=stride, return_main=True))
    out, main = fwd(x, params)
    out = jax.block_until_ready(out)
    main = jax.block_until_ready(main)

    ref_out, ref_main = ref_forward(x, params, stride=stride)
    ref_out = jax.block_until_ready(ref_out)

    assert out.shape == ref_out.shape == (2, out_channels * 4, 16, 16)
    # bf16 matmul inputs -> tolerance loosened vs the f32 version (re-validated).
    assert jnp.allclose(out, ref_out, atol=3e-2, rtol=3e-2), (
        f"output max abs err {jnp.max(jnp.abs(out - ref_out))}")
    assert jnp.allclose(main, ref_main, atol=5e-2, rtol=5e-2), (
        f"main-path max abs err {jnp.max(jnp.abs(main - ref_main))}")

    print("KERNEL_OK")
</pallas_src>

<mosaic_0001>
module attributes {stable_mosaic.version = 11 : i64} {
  func.func @_matmul_shift_kernel(%arg0: i32, %arg1: memref<512x4xbf16, #tpu.memory_space<vmem>>, %arg2: memref<4x4xbf16, #tpu.memory_space<vmem>>, %arg3: memref<1x4xf32, #tpu.memory_space<vmem>>, %arg4: memref<512x4xbf16, #tpu.memory_space<vmem>>) attributes {dimension_semantics = [#tpu.dimension_semantics<parallel>], iteration_bounds = array<i64: 1>, scalar_prefetch = 0 : i64, scratch_operands = 0 : i64, tpu.core_type = #tpu.core_type<tc>, window_params = [{transform_indices = @transform_0, window_bounds = array<i64: 512, 4>}, {pipeline_mode = #tpu.pipeline_mode<synchronous>, transform_indices = @transform_1, window_bounds = array<i64: 4, 4>}, {pipeline_mode = #tpu.pipeline_mode<synchronous>, transform_indices = @transform_2, window_bounds = array<i64: 1, 4>}, {transform_indices = @transform_3, window_bounds = array<i64: 512, 4>}]} {
    %c0 = arith.constant 0 : index
    %c0_0 = arith.constant 0 : index
    %0 = vector.load %arg1[%c0, %c0_0] : memref<512x4xbf16, #tpu.memory_space<vmem>>, vector<512x4xbf16>
    %c0_1 = arith.constant 0 : index
    %c0_2 = arith.constant 0 : index
    %1 = vector.load %arg2[%c0_1, %c0_2] : memref<4x4xbf16, #tpu.memory_space<vmem>>, vector<4x4xbf16>
    %cst = arith.constant dense<0.000000e+00> : vector<512x4xf32>
    %2 = tpu.matmul %0, %1, %cst {dimension_numbers = #tpu.dot_dimension_numbers<[1], [0], [0], [1], [0, 0, 1, 1], [], []>} : vector<512x4xbf16>, vector<4x4xbf16>, vector<512x4xf32> -> vector<512x4xf32>
    %c0_3 = arith.constant 0 : index
    %c0_4 = arith.constant 0 : index
    %3 = vector.load %arg3[%c0_3, %c0_4] : memref<1x4xf32, #tpu.memory_space<vmem>>, vector<1x4xf32>
    %4 = vector.broadcast %3 : vector<1x4xf32> to vector<512x4xf32>
    %5 = arith.addf %2, %4 : vector<512x4xf32>
    %cst_5 = arith.constant 0.000000e+00 : f32
    %6 = vector.broadcast %cst_5 : f32 to vector<512x4xf32>
    %7 = arith.maximumf %5, %6 : vector<512x4xf32>
    %8 = arith.truncf %7 : vector<512x4xf32> to vector<512x4xbf16>
    %c0_6 = arith.constant 0 : index
    %c0_7 = arith.constant 0 : index
    %9 = vector.load %arg4[%c0_6, %c0_7] : memref<512x4xbf16, #tpu.memory_space<vmem>>, vector<512x4xbf16>
    tpu.vector_store %arg4[%c0_6, %c0_7], %8 {strides = array<i32>} : memref<512x4xbf16, #tpu.memory_space<vmem>>, vector<512x4xbf16>,
    return
  }
  func.func @transform_0(%arg0: i32) -> (i32, i32) {
    %c0_i32 = arith.constant 0 : i32
    %c0_i32_0 = arith.constant 0 : i32
    return %arg0, %c0_i32 : i32, i32
  }
  func.func @transform_1(%arg0: i32) -> (i32, i32) {
    %c0_i32 = arith.constant 0 : i32
    %c0_i32_0 = arith.constant 0 : i32
    %c0_i32_1 = arith.constant 0 : i32
    return %c0_i32, %c0_i32_0 : i32, i32
  }
  func.func @transform_2(%arg0: i32) -> (i32, i32) {
    %c0_i32 = arith.constant 0 : i32
    %c0_i32_0 = arith.constant 0 : i32
    %c0_i32_1 = arith.constant 0 : i32
    return %c0_i32, %c0_i32_0 : i32, i32
  }
  func.func @transform_3(%arg0: i32) -> (i32, i32) {
    %c0_i32 = arith.constant 0 : i32
    %c0_i32_0 = arith.constant 0 : i32
    return %arg0, %c0_i32 : i32, i32
  }
}

module attributes {stable_mosaic.version = 11 : i64} {
  func.func @_conv3x3_shift_relu_kernel(%arg0: i32, %arg1: memref<1x18x18x4xbf16, #tpu.memory_space<vmem>>, %arg2: memref<9x4x4xbf16, #tpu.memory_space<vmem>>, %arg3: memref<1x4xf32, #tpu.memory_space<vmem>>, %arg4: memref<256x4xbf16, #tpu.memory_space<vmem>>) attributes {dimension_semantics = [#tpu.dimension_semantics<parallel>], iteration_bounds = array<i64: 2>, scalar_prefetch = 0 : i64, scratch_operands = 0 : i64, tpu.core_type = #tpu.core_type<tc>, window_params = [{transform_indices = @transform_0, window_bounds = array<i64: 1, 18, 18, 4>}, {pipeline_mode = #tpu.pipeline_mode<synchronous>, transform_indices = @transform_1, window_bounds = array<i64: 9, 4, 4>}, {pipeline_mode = #tpu.pipeline_mode<synchronous>, transform_indices = @transform_2, window_bounds = array<i64: 1, 4>}, {transform_indices = @transform_3, window_bounds = array<i64: 256, 4>}]} {
    %c0 = arith.constant 0 : index
    %c0_0 = arith.constant 0 : index
    %c0_1 = arith.constant 0 : index
    %c0_2 = arith.constant 0 : index
    %0 = vector.load %arg1[%c0, %c0_0, %c0_1, %c0_2] : memref<1x18x18x4xbf16, #tpu.memory_space<vmem>>, vector<1x18x18x4xbf16>
    %1 = vector.shape_cast %0 : vector<1x18x18x4xbf16> to vector<18x18x4xbf16>
    %2 = arith.extf %1 : vector<18x18x4xbf16> to vector<18x18x4xf32>
    %cst = arith.constant 0.000000e+00 : f32
    %3 = vector.broadcast %cst : f32 to vector<256x4xf32>
    %4 = vector.extract_strided_slice %2 {offsets = [0, 0, 0], sizes = [16, 16, 4], strides = [1, 1, 1]} : vector<18x18x4xf32> to vector<16x16x4xf32>
    %5 = vector.shape_cast %4 : vector<16x16x4xf32> to vector<256x4xf32>
    %6 = arith.truncf %5 : vector<256x4xf32> to vector<256x4xbf16>
    %c0_3 = arith.constant 0 : index
    %c0_4 = arith.constant 0 : index
    %c0_5 = arith.constant 0 : index
    %7 = vector.load %arg2[%c0_3, %c0_4, %c0_5] : memref<9x4x4xbf16, #tpu.memory_space<vmem>>, vector<1x4x4xbf16>
    %8 = vector.shape_cast %7 : vector<1x4x4xbf16> to vector<4x4xbf16>
    %cst_6 = arith.constant dense<0.000000e+00> : vector<256x4xf32>
    %9 = tpu.matmul %6, %8, %cst_6 {dimension_numbers = #tpu.dot_dimension_numbers<[1], [0], [0], [1], [0, 0, 1, 1], [], []>} : vector<256x4xbf16>, vector<4x4xbf16>, vector<256x4xf32> -> vector<256x4xf32>
    %10 = arith.addf %3, %9 : vector<256x4xf32>
    %11 = vector.extract_strided_slice %2 {offsets = [0, 1, 0], sizes = [16, 16, 4], strides = [1, 1, 1]} : vector<18x18x4xf32> to vector<16x16x4xf32>
    %12 = vector.shape_cast %11 : vector<16x16x4xf32> to vector<256x4xf32>
    %13 = arith.truncf %12 : vector<256x4xf32> to vector<256x4xbf16>
    %c1 = arith.constant 1 : index
    %c0_7 = arith.constant 0 : index
    %c0_8 = arith.constant 0 : index
    %14 = vector.load %arg2[%c1, %c0_7, %c0_8] : memref<9x4x4xbf16, #tpu.memory_space<vmem>>, vector<1x4x4xbf16>
    %15 = vector.shape_cast %14 : vector<1x4x4xbf16> to vector<4x4xbf16>
    %cst_9 = arith.constant dense<0.000000e+00> : vector<256x4xf32>
    %16 = tpu.matmul %13, %15, %cst_9 {dimension_numbers = #tpu.dot_dimension_numbers<[1], [0], [0], [1], [0, 0, 1, 1], [], []>} : vector<256x4xbf16>, vector<4x4xbf16>, vector<256x4xf32> -> vector<256x4xf32>
    %17 = arith.addf %10, %16 : vector<256x4xf32>
    %18 = vector.extract_strided_slice %2 {offsets = [0, 2, 0], sizes = [16, 16, 4], strides = [1, 1, 1]} : vector<18x18x4xf32> to vector<16x16x4xf32>
    %19 = vector.shape_cast %18 : vector<16x16x4xf32> to vector<256x4xf32>
    %20 = arith.truncf %19 : vector<256x4xf32> to vector<256x4xbf16>
    %c2 = arith.constant 2 : index
    %c0_10 = arith.constant 0 : index
    %c0_11 = arith.constant 0 : index
    %21 = vector.load %arg2[%c2, %c0_10, %c0_11] : memref<9x4x4xbf16, #tpu.memory_space<vmem>>, vector<1x4x4xbf16>
    %22 = vector.shape_cast %21 : vector<1x4x4xbf16> to vector<4x4xbf16>
    %cst_12 = arith.constant dense<0.000000e+00> : vector<256x4xf32>
    %23 = tpu.matmul %20, %22, %cst_12 {dimension_numbers = #tpu.dot_dimension_numbers<[1], [0], [0], [1], [0, 0, 1, 1], [], []>} : vector<256x4xbf16>, vector<4x4xbf16>, vector<256x4xf32> -> vector<256x4xf32>
    %24 = arith.addf %17, %23 : vector<256x4xf32>
    %25 = vector.extract_strided_slice %2 {offsets = [1, 0, 0], sizes = [16, 16, 4], strides = [1, 1, 1]} : vector<18x18x4xf32> to vector<16x16x4xf32>
    %26 = vector.shape_cast %25 : vector<16x16x4xf32> to vector<256x4xf32>
    %27 = arith.truncf %26 : vector<256x4xf32> to vector<256x4xbf16>
    %c3 = arith.constant 3 : index
    %c0_13 = arith.constant 0 : index
    %c0_14 = arith.constant 0 : index
    %28 = vector.load %arg2[%c3, %c0_13, %c0_14] : memref<9x4x4xbf16, #tpu.memory_space<vmem>>, vector<1x4x4xbf16>
    %29 = vector.shape_cast %28 : vector<1x4x4xbf16> to vector<4x4xbf16>
    %cst_15 = arith.constant dense<0.000000e+00> : vector<256x4xf32>
    %30 = tpu.matmul %27, %29, %cst_15 {dimension_numbers = #tpu.dot_dimension_numbers<[1], [0], [0], [1], [0, 0, 1, 1], [], []>} : vector<256x4xbf16>, vector<4x4xbf16>, vector<256x4xf32> -> vector<256x4xf32>
    %31 = arith.addf %24, %30 : vector<256x4xf32>
    %32 = vector.extract_strided_slice %2 {offsets = [1, 1, 0], sizes = [16, 16, 4], strides = [1, 1, 1]} : vector<18x18x4xf32> to vector<16x16x4xf32>
    %33 = vector.shape_cast %32 : vector<16x16x4xf32> to vector<256x4xf32>
    %34 = arith.truncf %33 : vector<256x4xf32> to vector<256x4xbf16>
    %c4 = arith.constant 4 : index
    %c0_16 = arith.constant 0 : index
    %c0_17 = arith.constant 0 : index
    %35 = vector.load %arg2[%c4, %c0_16, %c0_17] : memref<9x4x4xbf16, #tpu.memory_space<vmem>>, vector<1x4x4xbf16>
    %36 = vector.shape_cast %35 : vector<1x4x4xbf16> to vector<4x4xbf16>
    %cst_18 = arith.constant dense<0.000000e+00> : vector<256x4xf32>
    %37 = tpu.matmul %34, %36, %cst_18 {dimension_numbers = #tpu.dot_dimension_numbers<[1], [0], [0], [1], [0, 0, 1, 1], [], []>} : vector<256x4xbf16>, vector<4x4xbf16>, vector<256x4xf32> -> vector<256x4xf32>
    %38 = arith.addf %31, %37 : vector<256x4xf32>
    %39 = vector.extract_strided_slice %2 {offsets = [1, 2, 0], sizes = [16, 16, 4], strides = [1, 1, 1]} : vector<18x18x4xf32> to vector<16x16x4xf32>
    %40 = vector.shape_cast %39 : vector<16x16x4xf32> to vector<256x4xf32>
    %41 = arith.truncf %40 : vector<256x4xf32> to vector<256x4xbf16>
    %c5 = arith.constant 5 : index
    %c0_19 = arith.constant 0 : index
    %c0_20 = arith.constant 0 : index
    %42 = vector.load %arg2[%c5, %c0_19, %c0_20] : memref<9x4x4xbf16, #tpu.memory_space<vmem>>, vector<1x4x4xbf16>
    %43 = vector.shape_cast %42 : vector<1x4x4xbf16> to vector<4x4xbf16>
    %cst_21 = arith.constant dense<0.000000e+00> : vector<256x4xf32>
    %44 = tpu.matmul %41, %43, %cst_21 {dimension_numbers = #tpu.dot_dimension_numbers<[1], [0], [0], [1], [0, 0, 1, 1], [], []>} : vector<256x4xbf16>, vector<4x4xbf16>, vector<256x4xf32> -> vector<256x4xf32>
    %45 = arith.addf %38, %44 : vector<256x4xf32>
    %46 = vector.extract_strided_slice %2 {offsets = [2, 0, 0], sizes = [16, 16, 4], strides = [1, 1, 1]} : vector<18x18x4xf32> to vector<16x16x4xf32>
    %47 = vector.shape_cast %46 : vector<16x16x4xf32> to vector<256x4xf32>
    %48 = arith.truncf %47 : vector<256x4xf32> to vector<256x4xbf16>
    %c6 = arith.constant 6 : index
    %c0_22 = arith.constant 0 : index
    %c0_23 = arith.constant 0 : index
    %49 = vector.load %arg2[%c6, %c0_22, %c0_23] : memref<9x4x4xbf16, #tpu.memory_space<vmem>>, vector<1x4x4xbf16>
    %50 = vector.shape_cast %49 : vector<1x4x4xbf16> to vector<4x4xbf16>
    %cst_24 = arith.constant dense<0.000000e+00> : vector<256x4xf32>
    %51 = tpu.matmul %48, %50, %cst_24 {dimension_numbers = #tpu.dot_dimension_numbers<[1], [0], [0], [1], [0, 0, 1, 1], [], []>} : vector<256x4xbf16>, vector<4x4xbf16>, vector<256x4xf32> -> vector<256x4xf32>
    %52 = arith.addf %45, %51 : vector<256x4xf32>
    %53 = vector.extract_strided_slice %2 {offsets = [2, 1, 0], sizes = [16, 16, 4], strides = [1, 1, 1]} : vector<18x18x4xf32> to vector<16x16x4xf32>
    %54 = vector.shape_cast %53 : vector<16x16x4xf32> to vector<256x4xf32>
    %55 = arith.truncf %54 : vector<256x4xf32> to vector<256x4xbf16>
    %c7 = arith.constant 7 : index
    %c0_25 = arith.constant 0 : index
    %c0_26 = arith.constant 0 : index
    %56 = vector.load %arg2[%c7, %c0_25, %c0_26] : memref<9x4x4xbf16, #tpu.memory_space<vmem>>, vector<1x4x4xbf16>
    %57 = vector.shape_cast %56 : vector<1x4x4xbf16> to vector<4x4xbf16>
    %cst_27 = arith.constant dense<0.000000e+00> : vector<256x4xf32>
    %58 = tpu.matmul %55, %57, %cst_27 {dimension_numbers = #tpu.dot_dimension_numbers<[1], [0], [0], [1], [0, 0, 1, 1], [], []>} : vector<256x4xbf16>, vector<4x4xbf16>, vector<256x4xf32> -> vector<256x4xf32>
    %59 = arith.addf %52, %58 : vector<256x4xf32>
    %60 = vector.extract_strided_slice %2 {offsets = [2, 2, 0], sizes = [16, 16, 4], strides = [1, 1, 1]} : vector<18x18x4xf32> to vector<16x16x4xf32>
    %61 = vector.shape_cast %60 : vector<16x16x4xf32> to vector<256x4xf32>
    %62 = arith.truncf %61 : vector<256x4xf32> to vector<256x4xbf16>
    %c8 = arith.constant 8 : index
    %c0_28 = arith.constant 0 : index
    %c0_29 = arith.constant 0 : index
    %63 = vector.load %arg2[%c8, %c0_28, %c0_29] : memref<9x4x4xbf16, #tpu.memory_space<vmem>>, vector<1x4x4xbf16>
    %64 = vector.shape_cast %63 : vector<1x4x4xbf16> to vector<4x4xbf16>
    %cst_30 = arith.constant dense<0.000000e+00> : vector<256x4xf32>
    %65 = tpu.matmul %62, %64, %cst_30 {dimension_numbers = #tpu.dot_dimension_numbers<[1], [0], [0], [1], [0, 0, 1, 1], [], []>} : vector<256x4xbf16>, vector<4x4xbf16>, vector<256x4xf32> -> vector<256x4xf32>
    %66 = arith.addf %59, %65 : vector<256x4xf32>
    %c0_31 = arith.constant 0 : index
    %c0_32 = arith.constant 0 : index
    %67 = vector.load %arg3[%c0_31, %c0_32] : memref<1x4xf32, #tpu.memory_space<vmem>>, vector<1x4xf32>
    %68 = vector.broadcast %67 : vector<1x4xf32> to vector<256x4xf32>
    %69 = arith.addf %66, %68 : vector<256x4xf32>
    %cst_33 = arith.constant 0.000000e+00 : f32
    %70 = vector.broadcast %cst_33 : f32 to vector<256x4xf32>
    %71 = arith.maximumf %69, %70 : vector<256x4xf32>
    %72 = arith.truncf %71 : vector<256x4xf32> to vector<256x4xbf16>
    %c0_34 = arith.constant 0 : index
    %c0_35 = arith.constant 0 : index
    %73 = vector.load %arg4[%c0_34, %c0_35] : memref<256x4xbf16, #tpu.memory_space<vmem>>, vector<256x4xbf16>
    tpu.vector_store %arg4[%c0_34, %c0_35], %72 {strides = array<i32>} : memref<256x4xbf16, #tpu.memory_space<vmem>>, vector<256x4xbf16>,
    return
  }
  func.func @transform_0(%arg0: i32) -> (i32, i32, i32, i32) {
    %c0_i32 = arith.constant 0 : i32
    %c0_i32_0 = arith.constant 0 : i32
    %c0_i32_1 = arith.constant 0 : i32
    %c0_i32_2 = arith.constant 0 : i32
    return %arg0, %c0_i32, %c0_i32_0, %c0_i32_1 : i32, i32, i32, i32
  }
  func.func @transform_1(%arg0: i32) -> (i32, i32, i32) {
    %c0_i32 = arith.constant 0 : i32
    %c0_i32_0 = arith.constant 0 : i32
    %c0_i32_1 = arith.constant 0 : i32
    %c0_i32_2 = arith.constant 0 : i32
    return %c0_i32, %c0_i32_0, %c0_i32_1 : i32, i32, i32
  }
  func.func @transform_2(%arg0: i32) -> (i32, i32) {
    %c0_i32 = arith.constant 0 : i32
    %c0_i32_0 = arith.constant 0 : i32
    %c0_i32_1 = arith.constant 0 : i32
    return %c0_i32, %c0_i32_0 : i32, i32
  }
  func.func @transform_3(%arg0: i32) -> (i32, i32) {
    %c0_i32 = arith.constant 0 : i32
    %c0_i32_0 = arith.constant 0 : i32
    return %arg0, %c0_i32 : i32, i32
  }
}

module attributes {stable_mosaic.version = 11 : i64} {
  func.func @_matmul_shift_kernel(%arg0: i32, %arg1: memref<512x4xbf16, #tpu.memory_space<vmem>>, %arg2: memref<4x16xbf16, #tpu.memory_space<vmem>>, %arg3: memref<1x16xf32, #tpu.memory_space<vmem>>, %arg4: memref<512x16xf32, #tpu.memory_space<vmem>>) attributes {dimension_semantics = [#tpu.dimension_semantics<parallel>], iteration_bounds = array<i64: 1>, scalar_prefetch = 0 : i64, scratch_operands = 0 : i64, tpu.core_type = #tpu.core_type<tc>, window_params = [{transform_indices = @transform_0, window_bounds = array<i64: 512, 4>}, {pipeline_mode = #tpu.pipeline_mode<synchronous>, transform_indices = @transform_1, window_bounds = array<i64: 4, 16>}, {pipeline_mode = #tpu.pipeline_mode<synchronous>, transform_indices = @transform_2, window_bounds = array<i64: 1, 16>}, {transform_indices = @transform_3, window_bounds = array<i64: 512, 16>}]} {
    %c0 = arith.constant 0 : index
    %c0_0 = arith.constant 0 : index
    %0 = vector.load %arg1[%c0, %c0_0] : memref<512x4xbf16, #tpu.memory_space<vmem>>, vector<512x4xbf16>
    %c0_1 = arith.constant 0 : index
    %c0_2 = arith.constant 0 : index
    %1 = vector.load %arg2[%c0_1, %c0_2] : memref<4x16xbf16, #tpu.memory_space<vmem>>, vector<4x16xbf16>
    %cst = arith.constant dense<0.000000e+00> : vector<512x16xf32>
    %2 = tpu.matmul %0, %1, %cst {dimension_numbers = #tpu.dot_dimension_numbers<[1], [0], [0], [1], [0, 0, 1, 1], [], []>} : vector<512x4xbf16>, vector<4x16xbf16>, vector<512x16xf32> -> vector<512x16xf32>
    %c0_3 = arith.constant 0 : index
    %c0_4 = arith.constant 0 : index
    %3 = vector.load %arg3[%c0_3, %c0_4] : memref<1x16xf32, #tpu.memory_space<vmem>>, vector<1x16xf32>
    %4 = vector.broadcast %3 : vector<1x16xf32> to vector<512x16xf32>
    %5 = arith.addf %2, %4 : vector<512x16xf32>
    %c0_5 = arith.constant 0 : index
    %c0_6 = arith.constant 0 : index
    %6 = vector.load %arg4[%c0_5, %c0_6] : memref<512x16xf32, #tpu.memory_space<vmem>>, vector<512x16xf32>
    tpu.vector_store %arg4[%c0_5, %c0_6], %5 {strides = array<i32>} : memref<512x16xf32, #tpu.memory_space<vmem>>, vector<512x16xf32>,
    return
  }
  func.func @transform_0(%arg0: i32) -> (i32, i32) {
    %c0_i32 = arith.constant 0 : i32
    %c0_i32_0 = arith.constant 0 : i32
    return %arg0, %c0_i32 : i32, i32
  }
  func.func @transform_1(%arg0: i32) -> (i32, i32) {
    %c0_i32 = arith.constant 0 : i32
    %c0_i32_0 = arith.constant 0 : i32
    %c0_i32_1 = arith.constant 0 : i32
    return %c0_i32, %c0_i32_0 : i32, i32
  }
  func.func @transform_2(%arg0: i32) -> (i32, i32) {
    %c0_i32 = arith.constant 0 : i32
    %c0_i32_0 = arith.constant 0 : i32
    %c0_i32_1 = arith.constant 0 : i32
    return %c0_i32, %c0_i32_0 : i32, i32
  }
  func.func @transform_3(%arg0: i32) -> (i32, i32) {
    %c0_i32 = arith.constant 0 : i32
    %c0_i32_0 = arith.constant 0 : i32
    return %arg0, %c0_i32 : i32, i32
  }
}

module attributes {stable_mosaic.version = 11 : i64} {
  func.func @_matmul_shift_kernel(%arg0: i32, %arg1: memref<512x4xbf16, #tpu.memory_space<vmem>>, %arg2: memref<4x16xbf16, #tpu.memory_space<vmem>>, %arg3: memref<1x16xf32, #tpu.memory_space<vmem>>, %arg4: memref<512x16xf32, #tpu.memory_space<vmem>>) attributes {dimension_semantics = [#tpu.dimension_semantics<parallel>], iteration_bounds = array<i64: 1>, scalar_prefetch = 0 : i64, scratch_operands = 0 : i64, tpu.core_type = #tpu.core_type<tc>, window_params = [{transform_indices = @transform_0, window_bounds = array<i64: 512, 4>}, {pipeline_mode = #tpu.pipeline_mode<synchronous>, transform_indices = @transform_1, window_bounds = array<i64: 4, 16>}, {pipeline_mode = #tpu.pipeline_mode<synchronous>, transform_indices = @transform_2, window_bounds = array<i64: 1, 16>}, {transform_indices = @transform_3, window_bounds = array<i64: 512, 16>}]} {
    %c0 = arith.constant 0 : index
    %c0_0 = arith.constant 0 : index
    %0 = vector.load %arg1[%c0, %c0_0] : memref<512x4xbf16, #tpu.memory_space<vmem>>, vector<512x4xbf16>
    %c0_1 = arith.constant 0 : index
    %c0_2 = arith.constant 0 : index
    %1 = vector.load %arg2[%c0_1, %c0_2] : memref<4x16xbf16, #tpu.memory_space<vmem>>, vector<4x16xbf16>
    %cst = arith.constant dense<0.000000e+00> : vector<512x16xf32>
    %2 = tpu.matmul %0, %1, %cst {dimension_numbers = #tpu.dot_dimension_numbers<[1], [0], [0], [1], [0, 0, 1, 1], [], []>} : vector<512x4xbf16>, vector<4x16xbf16>, vector<512x16xf32> -> vector<512x16xf32>
    %c0_3 = arith.constant 0 : index
    %c0_4 = arith.constant 0 : index
    %3 = vector.load %arg3[%c0_3, %c0_4] : memref<1x16xf32, #tpu.memory_space<vmem>>, vector<1x16xf32>
    %4 = vector.broadcast %3 : vector<1x16xf32> to vector<512x16xf32>
    %5 = arith.addf %2, %4 : vector<512x16xf32>
    %cst_5 = arith.constant 0.000000e+00 : f32
    %6 = vector.broadcast %cst_5 : f32 to vector<512x16xf32>
    %7 = arith.maximumf %5, %6 : vector<512x16xf32>
    %c0_6 = arith.constant 0 : index
    %c0_7 = arith.constant 0 : index
    %8 = vector.load %arg4[%c0_6, %c0_7] : memref<512x16xf32, #tpu.memory_space<vmem>>, vector<512x16xf32>
    tpu.vector_store %arg4[%c0_6, %c0_7], %7 {strides = array<i32>} : memref<512x16xf32, #tpu.memory_space<vmem>>, vector<512x16xf32>,
    return
  }
  func.func @transform_0(%arg0: i32) -> (i32, i32) {
    %c0_i32 = arith.constant 0 : i32
    %c0_i32_0 = arith.constant 0 : i32
    return %arg0, %c0_i32 : i32, i32
  }
  func.func @transform_1(%arg0: i32) -> (i32, i32) {
    %c0_i32 = arith.constant 0 : i32
    %c0_i32_0 = arith.constant 0 : i32
    %c0_i32_1 = arith.constant 0 : i32
    return %c0_i32, %c0_i32_0 : i32, i32
  }
  func.func @transform_2(%arg0: i32) -> (i32, i32) {
    %c0_i32 = arith.constant 0 : i32
    %c0_i32_0 = arith.constant 0 : i32
    %c0_i32_1 = arith.constant 0 : i32
    return %c0_i32, %c0_i32_0 : i32, i32
  }
  func.func @transform_3(%arg0: i32) -> (i32, i32) {
    %c0_i32 = arith.constant 0 : i32
    %c0_i32_0 = arith.constant 0 : i32
    return %arg0, %c0_i32 : i32, i32
  }
}

</mosaic_0001>

<llo_original>
// kernel: bottleneck_forward.5
$region0: #{bottleneck_forward.5}
  #allocation0 [shape = 'u32[]', space=smem, size = 0x4, offset = 0x4, fixed_abs, tag = 'smem constant byte address 0x4 - core index']
  #allocation1 [shape = 'u32[144,128]{1,0:T(1,128)}', space=vmem, size = 0x12000, scoped, tag = 'internal scratch']
  %s0 = inlined_call_operand.vmem [shape: bf16[512,4], index: 0, kind: input, shape index: {}]
  %s1 = inlined_call_operand.vmem [shape: bf16[4,4], index: 1, kind: input, shape index: {}]
  %s2 = inlined_call_operand.vmem [shape: f32[1,4], index: 2, kind: input, shape index: {}]
  %s3 = inlined_call_operand.vmem [shape: bf16[512,4], index: 3, kind: output, shape index: {}]
  %s4 = sld [smem:[#allocation0]]
  $region22: #{bottleneck_forward.5} parent=0
    _
  %s6 = ssub.s32 1, %s4
  %s7 = scalar_select 0, %s6, %s4
  // Predicated region
  $region2: #{bottleneck_forward.5} parent=0 // pred_check
    _
  $region3: #{bottleneck_forward.5} parent=0 // pred_check_branch
    %9 = sbr.rel (0) target = $region5
  $region4: #{bottleneck_forward.5} parent=0 // pred_region
    _
  $region5: #{bottleneck_forward.5} parent=0 // pred_fallthru
    _
  // Predicated region
  $region6: #{bottleneck_forward.5} parent=0 // pred_check
    _
  $region7: #{bottleneck_forward.5} parent=0 // pred_check_branch
    %11 = sbr.rel (0) target = $region9
  $region8: #{bottleneck_forward.5} parent=0 // pred_region
    _
  $region9: #{bottleneck_forward.5} parent=0 // pred_fallthru
    _
  // Predicated region
  $region10: #{bottleneck_forward.5} parent=0 // pred_check
    _
  $region11: #{bottleneck_forward.5} parent=0 // pred_check_branch
    %13 = sbr.rel (0) target = $region13
  $region12: #{bottleneck_forward.5} parent=0 // pred_region
    _
  $region13: #{bottleneck_forward.5} parent=0 // pred_fallthru
    _
  %v15 = vld [vmem:[%s0] sm:$0xf]
  %v16 = vld [vmem:[%s0 + $0x4] sm:$0xf]
  %v17 = vld [vmem:[%s0 + $0x8] sm:$0xf]
  %v18 = vld [vmem:[%s0 + $0xc] sm:$0xf]
  %v19 = vld [vmem:[%s0 + $0x10] sm:$0xf]
  %v20 = vld [vmem:[%s0 + $0x14] sm:$0xf]
  %v21 = vld [vmem:[%s0 + $0x18] sm:$0xf]
  %v22 = vld [vmem:[%s0 + $0x1c] sm:$0xf]
  %v23 = vld [vmem:[%s0 + $0x20] sm:$0xf]
  %v24 = vld [vmem:[%s0 + $0x24] sm:$0xf]
  %v25 = vld [vmem:[%s0 + $0x28] sm:$0xf]
  %v26 = vld [vmem:[%s0 + $0x2c] sm:$0xf]
  %v27 = vld [vmem:[%s0 + $0x30] sm:$0xf]
  %v28 = vld [vmem:[%s0 + $0x34] sm:$0xf]
  %v29 = vld [vmem:[%s0 + $0x38] sm:$0xf]
  %v30 = vld [vmem:[%s0 + $0x3c] sm:$0xf]
  %v31 = vld [vmem:[%s0 + $0x40] sm:$0xf]
  %v32 = vld [vmem:[%s0 + $0x44] sm:$0xf]
  %v33 = vld [vmem:[%s0 + $0x48] sm:$0xf]
  %v34 = vld [vmem:[%s0 + $0x4c] sm:$0xf]
  %v35 = vld [vmem:[%s0 + $0x50] sm:$0xf]
  %v36 = vld [vmem:[%s0 + $0x54] sm:$0xf]
  %v37 = vld [vmem:[%s0 + $0x58] sm:$0xf]
  %v38 = vld [vmem:[%s0 + $0x5c] sm:$0xf]
  %v39 = vld [vmem:[%s0 + $0x60] sm:$0xf]
  %v40 = vld [vmem:[%s0 + $0x64] sm:$0xf]
  %v41 = vld [vmem:[%s0 + $0x68] sm:$0xf]
  %v42 = vld [vmem:[%s0 + $0x6c] sm:$0xf]
  %v43 = vld [vmem:[%s0 + $0x70] sm:$0xf]
  %v44 = vld [vmem:[%s0 + $0x74] sm:$0xf]
  %v45 = vld [vmem:[%s0 + $0x78] sm:$0xf]
  %v46 = vld [vmem:[%s0 + $0x7c] sm:$0xf]
  %v47 = vld [vmem:[%s0 + $0x80] sm:$0xf]
  %v48 = vld [vmem:[%s0 + $0x84] sm:$0xf]
  %v49 = vld [vmem:[%s0 + $0x88] sm:$0xf]
  %v50 = vld [vmem:[%s0 + $0x8c] sm:$0xf]
  %v51 = vld [vmem:[%s0 + $0x90] sm:$0xf]
  %v52 = vld [vmem:[%s0 + $0x94] sm:$0xf]
  %v53 = vld [vmem:[%s0 + $0x98] sm:$0xf]
  %v54 = vld [vmem:[%s0 + $0x9c] sm:$0xf]
  %v55 = vld [vmem:[%s0 + $0xa0] sm:$0xf]
  %v56 = vld [vmem:[%s0 + $0xa4] sm:$0xf]
  %v57 = vld [vmem:[%s0 + $0xa8] sm:$0xf]
  %v58 = vld [vmem:[%s0 + $0xac] sm:$0xf]
  %v59 = vld [vmem:[%s0 + $0xb0] sm:$0xf]
  %v60 = vld [vmem:[%s0 + $0xb4] sm:$0xf]
  %v61 = vld [vmem:[%s0 + $0xb8] sm:$0xf]
  %v62 = vld [vmem:[%s0 + $0xbc] sm:$0xf]
  %v63 = vld [vmem:[%s0 + $0xc0] sm:$0xf]
  %v64 = vld [vmem:[%s0 + $0xc4] sm:$0xf]
  %v65 = vld [vmem:[%s0 + $0xc8] sm:$0xf]
  %v66 = vld [vmem:[%s0 + $0xcc] sm:$0xf]
  %v67 = vld [vmem:[%s0 + $0xd0] sm:$0xf]
  %v68 = vld [vmem:[%s0 + $0xd4] sm:$0xf]
  %v69 = vld [vmem:[%s0 + $0xd8] sm:$0xf]
  %v70 = vld [vmem:[%s0 + $0xdc] sm:$0xf]
  %v71 = vld [vmem:[%s0 + $0xe0] sm:$0xf]
  %v72 = vld [vmem:[%s0 + $0xe4] sm:$0xf]
  %v73 = vld [vmem:[%s0 + $0xe8] sm:$0xf]
  %v74 = vld [vmem:[%s0 + $0xec] sm:$0xf]
  %v75 = vld [vmem:[%s0 + $0xf0] sm:$0xf]
  %v76 = vld [vmem:[%s0 + $0xf4] sm:$0xf]
  %v77 = vld [vmem:[%s0 + $0xf8] sm:$0xf]
  %v78 = vld [vmem:[%s0 + $0xfc] sm:$0xf]
  %v79 = vld [vmem:[%s1] sm:$0x3]
  %v80 = vld [vmem:[%s2] sm:$0x1]
  %v82 = vlaneseq
  %v83 = vshrl.u32 %v82, 7
  %v84 = vsub.s32 0, %v83
  %v85 = vrot.slane %v80, %v84
  %v151 = vunpack.c.l.b16 %v15
  %v152 = vunpack.c.l.b16 %v16
  %v153 = vunpack.c.l.b16 %v17
  %v154 = vunpack.c.l.b16 %v18
  %v155 = vunpack.c.l.b16 %v19
  %v156 = vunpack.c.l.b16 %v20
  %v157 = vunpack.c.l.b16 %v21
  %v158 = vunpack.c.l.b16 %v22
  %v159 = vunpack.c.l.b16 %v23
  %v160 = vunpack.c.l.b16 %v24
  %v161 = vunpack.c.l.b16 %v25
  %v162 = vunpack.c.l.b16 %v26
  %v163 = vunpack.c.l.b16 %v27
  %v164 = vunpack.c.l.b16 %v28
  %v165 = vunpack.c.l.b16 %v29
  %v166 = vunpack.c.l.b16 %v30
  %v167 = vunpack.c.l.b16 %v31
  %v168 = vunpack.c.l.b16 %v32
  %v169 = vunpack.c.l.b16 %v33
  %v170 = vunpack.c.l.b16 %v34
  %v171 = vunpack.c.l.b16 %v35
  %v172 = vunpack.c.l.b16 %v36
  %v173 = vunpack.c.l.b16 %v37
  %v174 = vunpack.c.l.b16 %v38
  %v175 = vunpack.c.l.b16 %v39
  %v176 = vunpack.c.l.b16 %v40
  %v177 = vunpack.c.l.b16 %v41
  %v178 = vunpack.c.l.b16 %v42
  %v179 = vunpack.c.l.b16 %v43
  %v180 = vunpack.c.l.b16 %v44
  %v181 = vunpack.c.l.b16 %v45
  %v182 = vunpack.c.l.b16 %v46
  %v183 = vunpack.c.l.b16 %v47
  %v184 = vunpack.c.l.b16 %v48
  %v185 = vunpack.c.l.b16 %v49
  %v186 = vunpack.c.l.b16 %v50
  %v187 = vunpack.c.l.b16 %v51
  %v188 = vunpack.c.l.b16 %v52
  %v189 = vunpack.c.l.b16 %v53
  %v190 = vunpack.c.l.b16 %v54
  %v191 = vunpack.c.l.b16 %v55
  %v192 = vunpack.c.l.b16 %v56
  %v193 = vunpack.c.l.b16 %v57
  %v194 = vunpack.c.l.b16 %v58
  %v195 = vunpack.c.l.b16 %v59
  %v196 = vunpack.c.l.b16 %v60
  %v197 = vunpack.c.l.b16 %v61
  %v198 = vunpack.c.l.b16 %v62
  %v199 = vunpack.c.l.b16 %v63
  %v200 = vunpack.c.l.b16 %v64
  %v201 = vunpack.c.l.b16 %v65
  %v202 = vunpack.c.l.b16 %v66
  %v203 = vunpack.c.l.b16 %v67
  %v204 = vunpack.c.l.b16 %v68
  %v205 = vunpack.c.l.b16 %v69
  %v206 = vunpack.c.l.b16 %v70
  %v207 = vunpack.c.l.b16 %v71
  %v208 = vunpack.c.l.b16 %v72
  %v209 = vunpack.c.l.b16 %v73
  %v210 = vunpack.c.l.b16 %v74
  %v211 = vunpack.c.l.b16 %v75
  %v212 = vunpack.c.l.b16 %v76
  %v213 = vunpack.c.l.b16 %v77
  %v214 = vunpack.c.l.b16 %v78
  %v215 = vpack.c.b16 %v152, %v151
  %v216 = vpack.c.b16 %v154, %v153
  %v217 = vpack.c.b16 %v156, %v155
  %v218 = vpack.c.b16 %v158, %v157
  %v219 = vpack.c.b16 %v160, %v159
  %v220 = vpack.c.b16 %v162, %v161
  %v221 = vpack.c.b16 %v164, %v163
  %v222 = vpack.c.b16 %v166, %v165
  %v223 = vpack.c.b16 %v168, %v167
  %v224 = vpack.c.b16 %v170, %v169
  %v225 = vpack.c.b16 %v172, %v171
  %v226 = vpack.c.b16 %v174, %v173
  %v227 = vpack.c.b16 %v176, %v175
  %v228 = vpack.c.b16 %v178, %v177
  %v229 = vpack.c.b16 %v180, %v179
  %v230 = vpack.c.b16 %v182, %v181
  %v231 = vpack.c.b16 %v184, %v183
  %v232 = vpack.c.b16 %v186, %v185
  %v233 = vpack.c.b16 %v188, %v187
  %v234 = vpack.c.b16 %v190, %v189
  %v235 = vpack.c.b16 %v192, %v191
  %v236 = vpack.c.b16 %v194, %v193
  %v237 = vpack.c.b16 %v196, %v195
  %v238 = vpack.c.b16 %v198, %v197
  %v239 = vpack.c.b16 %v200, %v199
  %v240 = vpack.c.b16 %v202, %v201
  %v241 = vpack.c.b16 %v204, %v203
  %v242 = vpack.c.b16 %v206, %v205
  %v243 = vpack.c.b16 %v208, %v207
  %v244 = vpack.c.b16 %v210, %v209
  %v245 = vpack.c.b16 %v212, %v211
  %v246 = vpack.c.b16 %v214, %v213
  %vm247 = vcmask 31744
  %v249 = vsel %vm247, %v215, 0
  %v252 = vsel %vm247, %v216, 0
  %v255 = vsel %vm247, %v217, 0
  %v258 = vsel %vm247, %v218, 0
  %v261 = vsel %vm247, %v219, 0
  %v264 = vsel %vm247, %v220, 0
  %v267 = vsel %vm247, %v221, 0
  %v270 = vsel %vm247, %v222, 0
  %v273 = vsel %vm247, %v223, 0
  %v276 = vsel %vm247, %v224, 0
  %v279 = vsel %vm247, %v225, 0
  %v282 = vsel %vm247, %v226, 0
  %v285 = vsel %vm247, %v227, 0
  %v288 = vsel %vm247, %v228, 0
  %v291 = vsel %vm247, %v229, 0
  %v294 = vsel %vm247, %v230, 0
  %v297 = vsel %vm247, %v231, 0
  %v300 = vsel %vm247, %v232, 0
  %v303 = vsel %vm247, %v233, 0
  %v306 = vsel %vm247, %v234, 0
  %v309 = vsel %vm247, %v235, 0
  %v312 = vsel %vm247, %v236, 0
  %v315 = vsel %vm247, %v237, 0
  %v318 = vsel %vm247, %v238, 0
  %v321 = vsel %vm247, %v239, 0
  %v324 = vsel %vm247, %v240, 0
  %v327 = vsel %vm247, %v241, 0
  %v330 = vsel %vm247, %v242, 0
  %v333 = vsel %vm247, %v243, 0
  %v336 = vsel %vm247, %v244, 0
  %v339 = vsel %vm247, %v245, 0
  %v342 = vsel %vm247, %v246, 0
  %vm344 = vcmask 1041408
  %v346 = vsel %vm344, %v79, 0
  %348 = vmatprep.subr.bf16.mxu0 0
  %349 = vmatpush1.bf16.msra.mxu0 0
  %350 = vmatprep.subr.bf16.mxu0 0
  %351 = vmatpush1.bf16.msra.mxu0 0
  %352 = vmatprep.subr.bf16.mxu0 0
  %353 = vmatpush1.bf16.msra.mxu0 0
  %354 = vmatprep.subr.bf16.mxu0 0
  %355 = vmatpush1.bf16.msra.mxu0 0
  %356 = vmatprep.subr.bf16.mxu0 0
  %357 = vmatpush1.bf16.msra.mxu0 0
  %358 = vmatprep.subr.bf16.mxu0 0
  %359 = vmatpush1.bf16.msra.mxu0 0
  %360 = vmatprep.subr.bf16.mxu0 0
  %361 = vmatpush1.bf16.msra.mxu0 0
  %362 = vmatprep.subr.bf16.mxu0 0
  %363 = vmatpush1.bf16.msra.mxu0 %v346
  %364 = vmatprep.subr.bf16.mxu0 0
  %365 = vmatpush2.bf16.msra.mxu0 0
  %366 = vmatprep.subr.bf16.mxu0 0
  %367 = vmatpush2.bf16.msra.mxu0 0
  %368 = vmatprep.subr.bf16.mxu0 0
  %369 = vmatpush2.bf16.msra.mxu0 0
  %370 = vmatprep.subr.bf16.mxu0 0
  %371 = vmatpush2.bf16.msra.mxu0 0
  %372 = vmatprep.subr.bf16.mxu0 0
  %373 = vmatpush2.bf16.msra.mxu0 0
  %374 = vmatprep.subr.bf16.mxu0 0
  %375 = vmatpush2.bf16.msra.mxu0 0
  %376 = vmatprep.subr.bf16.mxu0 0
  %377 = vmatpush2.bf16.msra.mxu0 0
  %378 = vmatprep.subr.bf16.mxu0 0
  %379 = vmatpush2.bf16.msra.mxu0 0
  %380 = vmatprep.mubr.bf16.mxu0 0
  %381 = vmatmul.mubr.bf16.gmra.mxu0 %v249
  %v382 = vpop.f32.mrf.mxu0
  %v383 = vadd.f32 %v85, %v382
  %v384 = vpop.f32.mrf.mxu0
  %v385 = vpop.f32.mrf.mxu0
  %v386 = vadd.f32 %v85, %v385
  %v387 = vpop.f32.mrf.mxu0
  %388 = vmatprep.mubr.bf16.mxu0 0
  %389 = vmatmul.mubr.bf16.gmra.mxu0 %v252
  %v390 = vpop.f32.mrf.mxu0
  %v391 = vadd.f32 %v85, %v390
  %v392 = vpop.f32.mrf.mxu0
  %v393 = vpop.f32.mrf.mxu0
  %v394 = vadd.f32 %v85, %v393
  %v395 = vpop.f32.mrf.mxu0
  %396 = vmatprep.mubr.bf16.mxu0 0
  %397 = vmatmul.mubr.bf16.gmra.mxu0 %v255
  %v398 = vpop.f32.mrf.mxu0
  %v399 = vadd.f32 %v85, %v398
  %v400 = vpop.f32.mrf.mxu0
  %v401 = vpop.f32.mrf.mxu0
  %v402 = vadd.f32 %v85, %v401
  %v403 = vpop.f32.mrf.mxu0
  %404 = vmatprep.mubr.bf16.mxu0 0
  %405 = vmatmul.mubr.bf16.gmra.mxu0 %v258
  %v406 = vpop.f32.mrf.mxu0
  %v407 = vadd.f32 %v85, %v406
  %v408 = vpop.f32.mrf.mxu0
  %v409 = vpop.f32.mrf.mxu0
  %v410 = vadd.f32 %v85, %v409
  %v411 = vpop.f32.mrf.mxu0
  %412 = vmatprep.mubr.bf16.mxu0 0
  %413 = vmatmul.mubr.bf16.gmra.mxu0 %v261
  %v414 = vpop.f32.mrf.mxu0
  %v415 = vadd.f32 %v85, %v414
  %v416 = vpop.f32.mrf.mxu0
  %v417 = vpop.f32.mrf.mxu0
  %v418 = vadd.f32 %v85, %v417
  %v419 = vpop.f32.mrf.mxu0
  %420 = vmatprep.mubr.bf16.mxu0 0
  %421 = vmatmul.mubr.bf16.gmra.mxu0 %v264
  %v422 = vpop.f32.mrf.mxu0
  %v423 = vadd.f32 %v85, %v422
  %v424 = vpop.f32.mrf.mxu0
  %v425 = vpop.f32.mrf.mxu0
  %v426 = vadd.f32 %v85, %v425
  %v427 = vpop.f32.mrf.mxu0
  %428 = vmatprep.mubr.bf16.mxu0 0
  %429 = vmatmul.mubr.bf16.gmra.mxu0 %v267
  %v430 = vpop.f32.mrf.mxu0
  %v431 = vadd.f32 %v85, %v430
  %v432 = vpop.f32.mrf.mxu0
  %v433 = vpop.f32.mrf.mxu0
  %v434 = vadd.f32 %v85, %v433
  %v435 = vpop.f32.mrf.mxu0
  %436 = vmatprep.mubr.bf16.mxu0 0
  %437 = vmatmul.mubr.bf16.gmra.mxu0 %v270
  %v438 = vpop.f32.mrf.mxu0
  %v439 = vadd.f32 %v85, %v438
  %v440 = vpop.f32.mrf.mxu0
  %v441 = vpop.f32.mrf.mxu0
  %v442 = vadd.f32 %v85, %v441
  %v443 = vpop.f32.mrf.mxu0
  %444 = vmatprep.mubr.bf16.mxu0 0
  %445 = vmatmul.mubr.bf16.gmra.mxu0 %v273
  %v446 = vpop.f32.mrf.mxu0
  %v447 = vadd.f32 %v85, %v446
  %v448 = vpop.f32.mrf.mxu0
  %v449 = vpop.f32.mrf.mxu0
  %v450 = vadd.f32 %v85, %v449
  %v451 = vpop.f32.mrf.mxu0
  %452 = vmatprep.mubr.bf16.mxu0 0
  %453 = vmatmul.mubr.bf16.gmra.mxu0 %v276
  %v454 = vpop.f32.mrf.mxu0
  %v455 = vadd.f32 %v85, %v454
  %v456 = vpop.f32.mrf.mxu0
  %v457 = vpop.f32.mrf.mxu0
  %v458 = vadd.f32 %v85, %v457
  %v459 = vpop.f32.mrf.mxu0
  %460 = vmatprep.mubr.bf16.mxu0 0
  %461 = vmatmul.mubr.bf16.gmra.mxu0 %v279
  %v462 = vpop.f32.mrf.mxu0
  %v463 = vadd.f32 %v85, %v462
  %v464 = vpop.f32.mrf.mxu0
  %v465 = vpop.f32.mrf.mxu0
  %v466 = vadd.f32 %v85, %v465
  %v467 = vpop.f32.mrf.mxu0
  %468 = vmatprep.mubr.bf16.mxu0 0
  %469 = vmatmul.mubr.bf16.gmra.mxu0 %v282
  %v470 = vpop.f32.mrf.mxu0
  %v471 = vadd.f32 %v85, %v470
  %v472 = vpop.f32.mrf.mxu0
  %v473 = vpop.f32.mrf.mxu0
  %v474 = vadd.f32 %v85, %v473
  %v475 = vpop.f32.mrf.mxu0
  %476 = vmatprep.mubr.bf16.mxu0 0
  %477 = vmatmul.mubr.bf16.gmra.mxu0 %v285
  %v478 = vpop.f32.mrf.mxu0
  %v479 = vadd.f32 %v85, %v478
  %v480 = vpop.f32.mrf.mxu0
  %v481 = vpop.f32.mrf.mxu0
  %v482 = vadd.f32 %v85, %v481
  %v483 = vpop.f32.mrf.mxu0
  %484 = vmatprep.mubr.bf16.mxu0 0
  %485 = vmatmul.mubr.bf16.gmra.mxu0 %v288
  %v486 = vpop.f32.mrf.mxu0
  %v487 = vadd.f32 %v85, %v486
  %v488 = vpop.f32.mrf.mxu0
  %v489 = vpop.f32.mrf.mxu0
  %v490 = vadd.f32 %v85, %v489
  %v491 = vpop.f32.mrf.mxu0
  %492 = vmatprep.mubr.bf16.mxu0 0
  %493 = vmatmul.mubr.bf16.gmra.mxu0 %v291
  %v494 = vpop.f32.mrf.mxu0
  %v495 = vadd.f32 %v85, %v494
  %v496 = vpop.f32.mrf.mxu0
  %v497 = vpop.f32.mrf.mxu0
  %v498 = vadd.f32 %v85, %v497
  %v499 = vpop.f32.mrf.mxu0
  %500 = vmatprep.mubr.bf16.mxu0 0
  %501 = vmatmul.mubr.bf16.gmra.mxu0 %v294
  %v502 = vpop.f32.mrf.mxu0
  %v503 = vadd.f32 %v85, %v502
  %v504 = vpop.f32.mrf.mxu0
  %v505 = vpop.f32.mrf.mxu0
  %v506 = vadd.f32 %v85, %v505
  %v507 = vpop.f32.mrf.mxu0
  %508 = vmatprep.mubr.bf16.mxu0 0
  %509 = vmatmul.mubr.bf16.gmra.mxu0 %v297
  %v510 = vpop.f32.mrf.mxu0
  %v511 = vadd.f32 %v85, %v510
  %v512 = vpop.f32.mrf.mxu0
  %v513 = vpop.f32.mrf.mxu0
  %v514 = vadd.f32 %v85, %v513
  %v515 = vpop.f32.mrf.mxu0
  %516 = vmatprep.mubr.bf16.mxu0 0
  %517 = vmatmul.mubr.bf16.gmra.mxu0 %v300
  %v518 = vpop.f32.mrf.mxu0
  %v519 = vadd.f32 %v85, %v518
  %v520 = vpop.f32.mrf.mxu0
  %v521 = vpop.f32.mrf.mxu0
  %v522 = vadd.f32 %v85, %v521
  %v523 = vpop.f32.mrf.mxu0
  %524 = vmatprep.mubr.bf16.mxu0 0
  %525 = vmatmul.mubr.bf16.gmra.mxu0 %v303
  %v526 = vpop.f32.mrf.mxu0
  %v527 = vadd.f32 %v85, %v526
  %v528 = vpop.f32.mrf.mxu0
  %v529 = vpop.f32.mrf.mxu0
  %v530 = vadd.f32 %v85, %v529
  %v531 = vpop.f32.mrf.mxu0
  %532 = vmatprep.mubr.bf16.mxu0 0
  %533 = vmatmul.mubr.bf16.gmra.mxu0 %v306
  %v534 = vpop.f32.mrf.mxu0
  %v535 = vadd.f32 %v85, %v534
  %v536 = vpop.f32.mrf.mxu0
  %v537 = vpop.f32.mrf.mxu0
  %v538 = vadd.f32 %v85, %v537
  %v539 = vpop.f32.mrf.mxu0
  %540 = vmatprep.mubr.bf16.mxu0 0
  %541 = vmatmul.mubr.bf16.gmra.mxu0 %v309
  %v542 = vpop.f32.mrf.mxu0
  %v543 = vadd.f32 %v85, %v542
  %v544 = vpop.f32.mrf.mxu0
  %v545 = vpop.f32.mrf.mxu0
  %v546 = vadd.f32 %v85, %v545
  %v547 = vpop.f32.mrf.mxu0
  %548 = vmatprep.mubr.bf16.mxu0 0
  %549 = vmatmul.mubr.bf16.gmra.mxu0 %v312
  %v550 = vpop.f32.mrf.mxu0
  %v551 = vadd.f32 %v85, %v550
  %v552 = vpop.f32.mrf.mxu0
  %v553 = vpop.f32.mrf.mxu0
  %v554 = vadd.f32 %v85, %v553
  %v555 = vpop.f32.mrf.mxu0
  %556 = vmatprep.mubr.bf16.mxu0 0
  %557 = vmatmul.mubr.bf16.gmra.mxu0 %v315
  %v558 = vpop.f32.mrf.mxu0
  %v559 = vadd.f32 %v85, %v558
  %v560 = vpop.f32.mrf.mxu0
  %v561 = vpop.f32.mrf.mxu0
  %v562 = vadd.f32 %v85, %v561
  %v563 = vpop.f32.mrf.mxu0
  %564 = vmatprep.mubr.bf16.mxu0 0
  %565 = vmatmul.mubr.bf16.gmra.mxu0 %v318
  %v566 = vpop.f32.mrf.mxu0
  %v567 = vadd.f32 %v85, %v566
  %v568 = vpop.f32.mrf.mxu0
  %v569 = vpop.f32.mrf.mxu0
  %v570 = vadd.f32 %v85, %v569
  %v571 = vpop.f32.mrf.mxu0
  %572 = vmatprep.mubr.bf16.mxu0 0
  %573 = vmatmul.mubr.bf16.gmra.mxu0 %v321
  %v574 = vpop.f32.mrf.mxu0
  %v575 = vadd.f32 %v85, %v574
  %v576 = vpop.f32.mrf.mxu0
  %v577 = vpop.f32.mrf.mxu0
  %v578 = vadd.f32 %v85, %v577
  %v579 = vpop.f32.mrf.mxu0
  %580 = vmatprep.mubr.bf16.mxu0 0
  %581 = vmatmul.mubr.bf16.gmra.mxu0 %v324
  %v582 = vpop.f32.mrf.mxu0
  %v583 = vadd.f32 %v85, %v582
  %v584 = vpop.f32.mrf.mxu0
  %v585 = vpop.f32.mrf.mxu0
  %v586 = vadd.f32 %v85, %v585
  %v587 = vpop.f32.mrf.mxu0
  %588 = vmatprep.mubr.bf16.mxu0 0
  %589 = vmatmul.mubr.bf16.gmra.mxu0 %v327
  %v590 = vpop.f32.mrf.mxu0
  %v591 = vadd.f32 %v85, %v590
  %v592 = vpop.f32.mrf.mxu0
  %v593 = vpop.f32.mrf.mxu0
  %v594 = vadd.f32 %v85, %v593
  %v595 = vpop.f32.mrf.mxu0
  %596 = vmatprep.mubr.bf16.mxu0 0
  %597 = vmatmul.mubr.bf16.gmra.mxu0 %v330
  %v598 = vpop.f32.mrf.mxu0
  %v599 = vadd.f32 %v85, %v598
  %v600 = vpop.f32.mrf.mxu0
  %v601 = vpop.f32.mrf.mxu0
  %v602 = vadd.f32 %v85, %v601
  %v603 = vpop.f32.mrf.mxu0
  %604 = vmatprep.mubr.bf16.mxu0 0
  %605 = vmatmul.mubr.bf16.gmra.mxu0 %v333
  %v606 = vpop.f32.mrf.mxu0
  %v607 = vadd.f32 %v85, %v606
  %v608 = vpop.f32.mrf.mxu0
  %v609 = vpop.f32.mrf.mxu0
  %v610 = vadd.f32 %v85, %v609
  %v611 = vpop.f32.mrf.mxu0
  %612 = vmatprep.mubr.bf16.mxu0 0
  %613 = vmatmul.mubr.bf16.gmra.mxu0 %v336
  %v614 = vpop.f32.mrf.mxu0
  %v615 = vadd.f32 %v85, %v614
  %v616 = vpop.f32.mrf.mxu0
  %v617 = vpop.f32.mrf.mxu0
  %v618 = vadd.f32 %v85, %v617
  %v619 = vpop.f32.mrf.mxu0
  %620 = vmatprep.mubr.bf16.mxu0 0
  %621 = vmatmul.mubr.bf16.gmra.mxu0 %v339
  %v622 = vpop.f32.mrf.mxu0
  %v623 = vadd.f32 %v85, %v622
  %v624 = vpop.f32.mrf.mxu0
  %v625 = vpop.f32.mrf.mxu0
  %v626 = vadd.f32 %v85, %v625
  %v627 = vpop.f32.mrf.mxu0
  %628 = vmatprep.mubr.bf16.mxu0 0
  %629 = vmatmul.mubr.bf16.gmra.mxu0 %v342
  %v630 = vpop.f32.mrf.mxu0
  %v631 = vadd.f32 %v85, %v630
  %v632 = vpop.f32.mrf.mxu0
  %v633 = vpop.f32.mrf.mxu0
  %v634 = vadd.f32 %v85, %v633
  %v635 = vpop.f32.mrf.mxu0
  %636 = vdwg.mxu0
  %v637 = vmax.f32 %v383, 0.0
  %v638 = vmax.f32 %v386, 0.0
  %v639 = vmax.f32 %v391, 0.0
  %v640 = vmax.f32 %v394, 0.0
  %v641 = vmax.f32 %v399, 0.0
  %v642 = vmax.f32 %v402, 0.0
  %v643 = vmax.f32 %v407, 0.0
  %v644 = vmax.f32 %v410, 0.0
  %v645 = vmax.f32 %v415, 0.0
  %v646 = vmax.f32 %v418, 0.0
  %v647 = vmax.f32 %v423, 0.0
  %v648 = vmax.f32 %v426, 0.0
  %v649 = vmax.f32 %v431, 0.0
  %v650 = vmax.f32 %v434, 0.0
  %v651 = vmax.f32 %v439, 0.0
  %v652 = vmax.f32 %v442, 0.0
  %v653 = vmax.f32 %v447, 0.0
  %v654 = vmax.f32 %v450, 0.0
  %v655 = vmax.f32 %v455, 0.0
  %v656 = vmax.f32 %v458, 0.0
  %v657 = vmax.f32 %v463, 0.0
  %v658 = vmax.f32 %v466, 0.0
  %v659 = vmax.f32 %v471, 0.0
  %v660 = vmax.f32 %v474, 0.0
  %v661 = vmax.f32 %v479, 0.0
  %v662 = vmax.f32 %v482, 0.0
  %v663 = vmax.f32 %v487, 0.0
  %v664 = vmax.f32 %v490, 0.0
  %v665 = vmax.f32 %v495, 0.0
  %v666 = vmax.f32 %v498, 0.0
  %v667 = vmax.f32 %v503, 0.0
  %v668 = vmax.f32 %v506, 0.0
  %v669 = vmax.f32 %v511, 0.0
  %v670 = vmax.f32 %v514, 0.0
  %v671 = vmax.f32 %v519, 0.0
  %v672 = vmax.f32 %v522, 0.0
  %v673 = vmax.f32 %v527, 0.0
  %v674 = vmax.f32 %v530, 0.0
  %v675 = vmax.f32 %v535, 0.0
  %v676 = vmax.f32 %v538, 0.0
  %v677 = vmax.f32 %v543, 0.0
  %v678 = vmax.f32 %v546, 0.0
  %v679 = vmax.f32 %v551, 0.0
  %v680 = vmax.f32 %v554, 0.0
  %v681 = vmax.f32 %v559, 0.0
  %v682 = vmax.f32 %v562, 0.0
  %v683 = vmax.f32 %v567, 0.0
  %v684 = vmax.f32 %v570, 0.0
  %v685 = vmax.f32 %v575, 0.0
  %v686 = vmax.f32 %v578, 0.0
  %v687 = vmax.f32 %v583, 0.0
  %v688 = vmax.f32 %v586, 0.0
  %v689 = vmax.f32 %v591, 0.0
  %v690 = vmax.f32 %v594, 0.0
  %v691 = vmax.f32 %v599, 0.0
  %v692 = vmax.f32 %v602, 0.0
  %v693 = vmax.f32 %v607, 0.0
  %v694 = vmax.f32 %v610, 0.0
  %v695 = vmax.f32 %v615, 0.0
  %v696 = vmax.f32 %v618, 0.0
  %v697 = vmax.f32 %v623, 0.0
  %v698 = vmax.f32 %v626, 0.0
  %v699 = vmax.f32 %v631, 0.0
  %v700 = vmax.f32 %v634, 0.0
  %v701 = vpack.c.bf16 %v638, %v637
  %v702 = vpack.c.bf16 %v640, %v639
  %v703 = vpack.c.bf16 %v642, %v641
  %v704 = vpack.c.bf16 %v644, %v643
  %v705 = vpack.c.bf16 %v646, %v645
  %v706 = vpack.c.bf16 %v648, %v647
  %v707 = vpack.c.bf16 %v650, %v649
  %v708 = vpack.c.bf16 %v652, %v651
  %v709 = vpack.c.bf16 %v654, %v653
  %v710 = vpack.c.bf16 %v656, %v655
  %v711 = vpack.c.bf16 %v658, %v657
  %v712 = vpack.c.bf16 %v660, %v659
  %v713 = vpack.c.bf16 %v662, %v661
  %v714 = vpack.c.bf16 %v664, %v663
  %v715 = vpack.c.bf16 %v666, %v665
  %v716 = vpack.c.bf16 %v668, %v667
  %v717 = vpack.c.bf16 %v670, %v669
  %v718 = vpack.c.bf16 %v672, %v671
  %v719 = vpack.c.bf16 %v674, %v673
  %v720 = vpack.c.bf16 %v676, %v675
  %v721 = vpack.c.bf16 %v678, %v677
  %v722 = vpack.c.bf16 %v680, %v679
  %v723 = vpack.c.bf16 %v682, %v681
  %v724 = vpack.c.bf16 %v684, %v683
  %v725 = vpack.c.bf16 %v686, %v685
  %v726 = vpack.c.bf16 %v688, %v687
  %v727 = vpack.c.bf16 %v690, %v689
  %v728 = vpack.c.bf16 %v692, %v691
  %v729 = vpack.c.bf16 %v694, %v693
  %v730 = vpack.c.bf16 %v696, %v695
  %v731 = vpack.c.bf16 %v698, %v697
  %v732 = vpack.c.bf16 %v700, %v699
  %v765 = vunpack.c.l.b16 %v701
  %v766 = vunpack.c.h.b16 %v701
  %v767 = vunpack.c.l.b16 %v702
  %v768 = vunpack.c.h.b16 %v702
  %v769 = vunpack.c.l.b16 %v703
  %v770 = vunpack.c.h.b16 %v703
  %v771 = vunpack.c.l.b16 %v704
  %v772 = vunpack.c.h.b16 %v704
  %v773 = vunpack.c.l.b16 %v705
  %v774 = vunpack.c.h.b16 %v705
  %v775 = vunpack.c.l.b16 %v706
  %v776 = vunpack.c.h.b16 %v706
  %v777 = vunpack.c.l.b16 %v707
  %v778 = vunpack.c.h.b16 %v707
  %v779 = vunpack.c.l.b16 %v708
  %v780 = vunpack.c.h.b16 %v708
  %v781 = vunpack.c.l.b16 %v709
  %v782 = vunpack.c.h.b16 %v709
  %v783 = vunpack.c.l.b16 %v710
  %v784 = vunpack.c.h.b16 %v710
  %v785 = vunpack.c.l.b16 %v711
  %v786 = vunpack.c.h.b16 %v711
  %v787 = vunpack.c.l.b16 %v712
  %v788 = vunpack.c.h.b16 %v712
  %v789 = vunpack.c.l.b16 %v713
  %v790 = vunpack.c.h.b16 %v713
  %v791 = vunpack.c.l.b16 %v714
  %v792 = vunpack.c.h.b16 %v714
  %v793 = vunpack.c.l.b16 %v715
  %v794 = vunpack.c.h.b16 %v715
  %v795 = vunpack.c.l.b16 %v716
  %v796 = vunpack.c.h.b16 %v716
  %v797 = vunpack.c.l.b16 %v717
  %v798 = vunpack.c.h.b16 %v717
  %v799 = vunpack.c.l.b16 %v718
  %v800 = vunpack.c.h.b16 %v718
  %v801 = vunpack.c.l.b16 %v719
  %v802 = vunpack.c.h.b16 %v719
  %v803 = vunpack.c.l.b16 %v720
  %v804 = vunpack.c.h.b16 %v720
  %v805 = vunpack.c.l.b16 %v721
  %v806 = vunpack.c.h.b16 %v721
  %v807 = vunpack.c.l.b16 %v722
  %v808 = vunpack.c.h.b16 %v722
  %v809 = vunpack.c.l.b16 %v723
  %v810 = vunpack.c.h.b16 %v723
  %v811 = vunpack.c.l.b16 %v724
  %v812 = vunpack.c.h.b16 %v724
  %v813 = vunpack.c.l.b16 %v725
  %v814 = vunpack.c.h.b16 %v725
  %v815 = vunpack.c.l.b16 %v726
  %v816 = vunpack.c.h.b16 %v726
  %v817 = vunpack.c.l.b16 %v727
  %v818 = vunpack.c.h.b16 %v727
  %v819 = vunpack.c.l.b16 %v728
  %v820 = vunpack.c.h.b16 %v728
  %v821 = vunpack.c.l.b16 %v729
  %v822 = vunpack.c.h.b16 %v729
  %v823 = vunpack.c.l.b16 %v730
  %v824 = vunpack.c.h.b16 %v730
  %v825 = vunpack.c.l.b16 %v731
  %v826 = vunpack.c.h.b16 %v731
  %v827 = vunpack.c.l.b16 %v732
  %v828 = vunpack.c.h.b16 %v732
  %v829 = vpack.c.b16 %v765, %v765
  %v830 = vpack.c.b16 %v766, %v766
  %v831 = vpack.c.b16 %v767, %v767
  %v832 = vpack.c.b16 %v768, %v768
  %v833 = vpack.c.b16 %v769, %v769
  %v834 = vpack.c.b16 %v770, %v770
  %v835 = vpack.c.b16 %v771, %v771
  %v836 = vpack.c.b16 %v772, %v772
  %v837 = vpack.c.b16 %v773, %v773
  %v838 = vpack.c.b16 %v774, %v774
  %v839 = vpack.c.b16 %v775, %v775
  %v840 = vpack.c.b16 %v776, %v776
  %v841 = vpack.c.b16 %v777, %v777
  %v842 = vpack.c.b16 %v778, %v778
  %v843 = vpack.c.b16 %v779, %v779
  %v844 = vpack.c.b16 %v780, %v780
  %v845 = vpack.c.b16 %v781, %v781
  %v846 = vpack.c.b16 %v782, %v782
  %v847 = vpack.c.b16 %v783, %v783
  %v848 = vpack.c.b16 %v784, %v784
  %v849 = vpack.c.b16 %v785, %v785
  %v850 = vpack.c.b16 %v786, %v786
  %v851 = vpack.c.b16 %v787, %v787
  %v852 = vpack.c.b16 %v788, %v788
  %v853 = vpack.c.b16 %v789, %v789
  %v854 = vpack.c.b16 %v790, %v790
  %v855 = vpack.c.b16 %v791, %v791
  %v856 = vpack.c.b16 %v792, %v792
  %v857 = vpack.c.b16 %v793, %v793
  %v858 = vpack.c.b16 %v794, %v794
  %v859 = vpack.c.b16 %v795, %v795
  %v860 = vpack.c.b16 %v796, %v796
  %v861 = vpack.c.b16 %v797, %v797
  %v862 = vpack.c.b16 %v798, %v798
  %v863 = vpack.c.b16 %v799, %v799
  %v864 = vpack.c.b16 %v800, %v800
  %v865 = vpack.c.b16 %v801, %v801
  %v866 = vpack.c.b16 %v802, %v802
  %v867 = vpack.c.b16 %v803, %v803
  %v868 = vpack.c.b16 %v804, %v804
  %v869 = vpack.c.b16 %v805, %v805
  %v870 = vpack.c.b16 %v806, %v806
  %v871 = vpack.c.b16 %v807, %v807
  %v872 = vpack.c.b16 %v808, %v808
  %v873 = vpack.c.b16 %v809, %v809
  %v874 = vpack.c.b16 %v810, %v810
  %v875 = vpack.c.b16 %v811, %v811
  %v876 = vpack.c.b16 %v812, %v812
  %v877 = vpack.c.b16 %v813, %v813
  %v878 = vpack.c.b16 %v814, %v814
  %v879 = vpack.c.b16 %v815, %v815
  %v880 = vpack.c.b16 %v816, %v816
  %v881 = vpack.c.b16 %v817, %v817
  %v882 = vpack.c.b16 %v818, %v818
  %v883 = vpack.c.b16 %v819, %v819
  %v884 = vpack.c.b16 %v820, %v820
  %v885 = vpack.c.b16 %v821, %v821
  %v886 = vpack.c.b16 %v822, %v822
  %v887 = vpack.c.b16 %v823, %v823
  %v888 = vpack.c.b16 %v824, %v824
  %v889 = vpack.c.b16 %v825, %v825
  %v890 = vpack.c.b16 %v826, %v826
  %v891 = vpack.c.b16 %v827, %v827
  %v892 = vpack.c.b16 %v828, %v828
  %vm957 = vcmask 27648
  %958 = vst.msk [vmem:[%s3] sm:$0xf] %vm957, %v829
  %959 = vst.msk [vmem:[%s3 + $0x4] sm:$0xf] %vm957, %v830
  %960 = vst.msk [vmem:[%s3 + $0x8] sm:$0xf] %vm957, %v831
  %961 = vst.msk [vmem:[%s3 + $0xc] sm:$0xf] %vm957, %v832
  %962 = vst.msk [vmem:[%s3 + $0x10] sm:$0xf] %vm957, %v833
  %963 = vst.msk [vmem:[%s3 + $0x14] sm:$0xf] %vm957, %v834
  %964 = vst.msk [vmem:[%s3 + $0x18] sm:$0xf] %vm957, %v835
  %965 = vst.msk [vmem:[%s3 + $0x1c] sm:$0xf] %vm957, %v836
  %966 = vst.msk [vmem:[%s3 + $0x20] sm:$0xf] %vm957, %v837
  %967 = vst.msk [vmem:[%s3 + $0x24] sm:$0xf] %vm957, %v838
  %968 = vst.msk [vmem:[%s3 + $0x28] sm:$0xf] %vm957, %v839
  %969 = vst.msk [vmem:[%s3 + $0x2c] sm:$0xf] %vm957, %v840
  %970 = vst.msk [vmem:[%s3 + $0x30] sm:$0xf] %vm957, %v841
  %971 = vst.msk [vmem:[%s3 + $0x34] sm:$0xf] %vm957, %v842
  %972 = vst.msk [vmem:[%s3 + $0x38] sm:$0xf] %vm957, %v843
  %973 = vst.msk [vmem:[%s3 + $0x3c] sm:$0xf] %vm957, %v844
  %974 = vst.msk [vmem:[%s3 + $0x40] sm:$0xf] %vm957, %v845
  %975 = vst.msk [vmem:[%s3 + $0x44] sm:$0xf] %vm957, %v846
  %976 = vst.msk [vmem:[%s3 + $0x48] sm:$0xf] %vm957, %v847
  %977 = vst.msk [vmem:[%s3 + $0x4c] sm:$0xf] %vm957, %v848
  %978 = vst.msk [vmem:[%s3 + $0x50] sm:$0xf] %vm957, %v849
  %979 = vst.msk [vmem:[%s3 + $0x54] sm:$0xf] %vm957, %v850
  %980 = vst.msk [vmem:[%s3 + $0x58] sm:$0xf] %vm957, %v851
  %981 = vst.msk [vmem:[%s3 + $0x5c] sm:$0xf] %vm957, %v852
  %982 = vst.msk [vmem:[%s3 + $0x60] sm:$0xf] %vm957, %v853
  %983 = vst.msk [vmem:[%s3 + $0x64] sm:$0xf] %vm957, %v854
  %984 = vst.msk [vmem:[%s3 + $0x68] sm:$0xf] %vm957, %v855
  %985 = vst.msk [vmem:[%s3 + $0x6c] sm:$0xf] %vm957, %v856
  %986 = vst.msk [vmem:[%s3 + $0x70] sm:$0xf] %vm957, %v857
  %987 = vst.msk [vmem:[%s3 + $0x74] sm:$0xf] %vm957, %v858
  %988 = vst.msk [vmem:[%s3 + $0x78] sm:$0xf] %vm957, %v859
  %989 = vst.msk [vmem:[%s3 + $0x7c] sm:$0xf] %vm957, %v860
  %990 = vst.msk [vmem:[%s3 + $0x80] sm:$0xf] %vm957, %v861
  %991 = vst.msk [vmem:[%s3 + $0x84] sm:$0xf] %vm957, %v862
  %992 = vst.msk [vmem:[%s3 + $0x88] sm:$0xf] %vm957, %v863
  %993 = vst.msk [vmem:[%s3 + $0x8c] sm:$0xf] %vm957, %v864
  %994 = vst.msk [vmem:[%s3 + $0x90] sm:$0xf] %vm957, %v865
  %995 = vst.msk [vmem:[%s3 + $0x94] sm:$0xf] %vm957, %v866
  %996 = vst.msk [vmem:[%s3 + $0x98] sm:$0xf] %vm957, %v867
  %997 = vst.msk [vmem:[%s3 + $0x9c] sm:$0xf] %vm957, %v868
  %998 = vst.msk [vmem:[%s3 + $0xa0] sm:$0xf] %vm957, %v869
  %999 = vst.msk [vmem:[%s3 + $0xa4] sm:$0xf] %vm957, %v870
  %1000 = vst.msk [vmem:[%s3 + $0xa8] sm:$0xf] %vm957, %v871
  %1001 = vst.msk [vmem:[%s3 + $0xac] sm:$0xf] %vm957, %v872
  %1002 = vst.msk [vmem:[%s3 + $0xb0] sm:$0xf] %vm957, %v873
  %1003 = vst.msk [vmem:[%s3 + $0xb4] sm:$0xf] %vm957, %v874
  %1004 = vst.msk [vmem:[%s3 + $0xb8] sm:$0xf] %vm957, %v875
  %1005 = vst.msk [vmem:[%s3 + $0xbc] sm:$0xf] %vm957, %v876
  %1006 = vst.msk [vmem:[%s3 + $0xc0] sm:$0xf] %vm957, %v877
  %1007 = vst.msk [vmem:[%s3 + $0xc4] sm:$0xf] %vm957, %v878
  %1008 = vst.msk [vmem:[%s3 + $0xc8] sm:$0xf] %vm957, %v879
  %1009 = vst.msk [vmem:[%s3 + $0xcc] sm:$0xf] %vm957, %v880
  %1010 = vst.msk [vmem:[%s3 + $0xd0] sm:$0xf] %vm957, %v881
  %1011 = vst.msk [vmem:[%s3 + $0xd4] sm:$0xf] %vm957, %v882
  %1012 = vst.msk [vmem:[%s3 + $0xd8] sm:$0xf] %vm957, %v883
  %1013 = vst.msk [vmem:[%s3 + $0xdc] sm:$0xf] %vm957, %v884
  %1014 = vst.msk [vmem:[%s3 + $0xe0] sm:$0xf] %vm957, %v885
  %1015 = vst.msk [vmem:[%s3 + $0xe4] sm:$0xf] %vm957, %v886
  %1016 = vst.msk [vmem:[%s3 + $0xe8] sm:$0xf] %vm957, %v887
  %1017 = vst.msk [vmem:[%s3 + $0xec] sm:$0xf] %vm957, %v888
  %1018 = vst.msk [vmem:[%s3 + $0xf0] sm:$0xf] %vm957, %v889
  %1019 = vst.msk [vmem:[%s3 + $0xf4] sm:$0xf] %vm957, %v890
  %1020 = vst.msk [vmem:[%s3 + $0xf8] sm:$0xf] %vm957, %v891
  %1021 = vst.msk [vmem:[%s3 + $0xfc] sm:$0xf] %vm957, %v892
  // Predicated region
  $region14: #{bottleneck_forward.5} parent=0 // pred_check
    _
  $region15: #{bottleneck_forward.5} parent=0 // pred_check_branch
    %1023 = sbr.rel (0) target = $region17
  $region16: #{bottleneck_forward.5} parent=0 // pred_region
    _
  $region17: #{bottleneck_forward.5} parent=0 // pred_fallthru
    _
  // Predicated region
  $region18: #{bottleneck_forward.5} parent=0 // pred_check
    _
  $region19: #{bottleneck_forward.5} parent=0 // pred_check_branch
    %1025 = sbr.rel (0) target = $region21
  $region20: #{bottleneck_forward.5} parent=0 // pred_region
    _
  $region21: #{bottleneck_forward.5} parent=0 // pred_fallthru
    _

// kernel: bottleneck_forward.7
$region0: #{bottleneck_forward.7}
  #allocation0 [shape = 'u32[]', space=smem, size = 0x4, offset = 0x4, fixed_abs, tag = 'smem constant byte address 0x4 - core index']
  #allocation1 [shape = 'u32[144,128]{1,0:T(1,128)}', space=vmem, size = 0x12000, scoped, tag = 'internal scratch']
  %s0 = inlined_call_operand.vmem [shape: bf16[512,4], index: 0, kind: input, shape index: {}]
  %s1 = inlined_call_operand.vmem [shape: bf16[4,16], index: 1, kind: input, shape index: {}]
  %s2 = inlined_call_operand.vmem [shape: f32[1,16], index: 2, kind: input, shape index: {}]
  %s3 = inlined_call_operand.vmem [shape: f32[512,16], index: 3, kind: output, shape index: {}]
  %s4 = sld [smem:[#allocation0]]
  $region22: #{bottleneck_forward.7} parent=0
    _
  %s6 = ssub.s32 1, %s4
  %s7 = scalar_select 0, %s6, %s4
  // Predicated region
  $region2: #{bottleneck_forward.7} parent=0 // pred_check
    _
  $region3: #{bottleneck_forward.7} parent=0 // pred_check_branch
    %9 = sbr.rel (0) target = $region5
  $region4: #{bottleneck_forward.7} parent=0 // pred_region
    _
  $region5: #{bottleneck_forward.7} parent=0 // pred_fallthru
    _
  // Predicated region
  $region6: #{bottleneck_forward.7} parent=0 // pred_check
    _
  $region7: #{bottleneck_forward.7} parent=0 // pred_check_branch
    %11 = sbr.rel (0) target = $region9
  $region8: #{bottleneck_forward.7} parent=0 // pred_region
    _
  $region9: #{bottleneck_forward.7} parent=0 // pred_fallthru
    _
  // Predicated region
  $region10: #{bottleneck_forward.7} parent=0 // pred_check
    _
  $region11: #{bottleneck_forward.7} parent=0 // pred_check_branch
    %13 = sbr.rel (0) target = $region13
  $region12: #{bottleneck_forward.7} parent=0 // pred_region
    _
  $region13: #{bottleneck_forward.7} parent=0 // pred_fallthru
    _
  %v15 = vld [vmem:[%s0] sm:$0xf]
  %v16 = vld [vmem:[%s0 + $0x4] sm:$0xf]
  %v17 = vld [vmem:[%s0 + $0x8] sm:$0xf]
  %v18 = vld [vmem:[%s0 + $0xc] sm:$0xf]
  %v19 = vld [vmem:[%s0 + $0x10] sm:$0xf]
  %v20 = vld [vmem:[%s0 + $0x14] sm:$0xf]
  %v21 = vld [vmem:[%s0 + $0x18] sm:$0xf]
  %v22 = vld [vmem:[%s0 + $0x1c] sm:$0xf]
  %v23 = vld [vmem:[%s0 + $0x20] sm:$0xf]
  %v24 = vld [vmem:[%s0 + $0x24] sm:$0xf]
  %v25 = vld [vmem:[%s0 + $0x28] sm:$0xf]
  %v26 = vld [vmem:[%s0 + $0x2c] sm:$0xf]
  %v27 = vld [vmem:[%s0 + $0x30] sm:$0xf]
  %v28 = vld [vmem:[%s0 + $0x34] sm:$0xf]
  %v29 = vld [vmem:[%s0 + $0x38] sm:$0xf]
  %v30 = vld [vmem:[%s0 + $0x3c] sm:$0xf]
  %v31 = vld [vmem:[%s0 + $0x40] sm:$0xf]
  %v32 = vld [vmem:[%s0 + $0x44] sm:$0xf]
  %v33 = vld [vmem:[%s0 + $0x48] sm:$0xf]
  %v34 = vld [vmem:[%s0 + $0x4c] sm:$0xf]
  %v35 = vld [vmem:[%s0 + $0x50] sm:$0xf]
  %v36 = vld [vmem:[%s0 + $0x54] sm:$0xf]
  %v37 = vld [vmem:[%s0 + $0x58] sm:$0xf]
  %v38 = vld [vmem:[%s0 + $0x5c] sm:$0xf]
  %v39 = vld [vmem:[%s0 + $0x60] sm:$0xf]
  %v40 = vld [vmem:[%s0 + $0x64] sm:$0xf]
  %v41 = vld [vmem:[%s0 + $0x68] sm:$0xf]
  %v42 = vld [vmem:[%s0 + $0x6c] sm:$0xf]
  %v43 = vld [vmem:[%s0 + $0x70] sm:$0xf]
  %v44 = vld [vmem:[%s0 + $0x74] sm:$0xf]
  %v45 = vld [vmem:[%s0 + $0x78] sm:$0xf]
  %v46 = vld [vmem:[%s0 + $0x7c] sm:$0xf]
  %v47 = vld [vmem:[%s0 + $0x80] sm:$0xf]
  %v48 = vld [vmem:[%s0 + $0x84] sm:$0xf]
  %v49 = vld [vmem:[%s0 + $0x88] sm:$0xf]
  %v50 = vld [vmem:[%s0 + $0x8c] sm:$0xf]
  %v51 = vld [vmem:[%s0 + $0x90] sm:$0xf]
  %v52 = vld [vmem:[%s0 + $0x94] sm:$0xf]
  %v53 = vld [vmem:[%s0 + $0x98] sm:$0xf]
  %v54 = vld [vmem:[%s0 + $0x9c] sm:$0xf]
  %v55 = vld [vmem:[%s0 + $0xa0] sm:$0xf]
  %v56 = vld [vmem:[%s0 + $0xa4] sm:$0xf]
  %v57 = vld [vmem:[%s0 + $0xa8] sm:$0xf]
  %v58 = vld [vmem:[%s0 + $0xac] sm:$0xf]
  %v59 = vld [vmem:[%s0 + $0xb0] sm:$0xf]
  %v60 = vld [vmem:[%s0 + $0xb4] sm:$0xf]
  %v61 = vld [vmem:[%s0 + $0xb8] sm:$0xf]
  %v62 = vld [vmem:[%s0 + $0xbc] sm:$0xf]
  %v63 = vld [vmem:[%s0 + $0xc0] sm:$0xf]
  %v64 = vld [vmem:[%s0 + $0xc4] sm:$0xf]
  %v65 = vld [vmem:[%s0 + $0xc8] sm:$0xf]
  %v66 = vld [vmem:[%s0 + $0xcc] sm:$0xf]
  %v67 = vld [vmem:[%s0 + $0xd0] sm:$0xf]
  %v68 = vld [vmem:[%s0 + $0xd4] sm:$0xf]
  %v69 = vld [vmem:[%s0 + $0xd8] sm:$0xf]
  %v70 = vld [vmem:[%s0 + $0xdc] sm:$0xf]
  %v71 = vld [vmem:[%s0 + $0xe0] sm:$0xf]
  %v72 = vld [vmem:[%s0 + $0xe4] sm:$0xf]
  %v73 = vld [vmem:[%s0 + $0xe8] sm:$0xf]
  %v74 = vld [vmem:[%s0 + $0xec] sm:$0xf]
  %v75 = vld [vmem:[%s0 + $0xf0] sm:$0xf]
  %v76 = vld [vmem:[%s0 + $0xf4] sm:$0xf]
  %v77 = vld [vmem:[%s0 + $0xf8] sm:$0xf]
  %v78 = vld [vmem:[%s0 + $0xfc] sm:$0xf]
  %v79 = vld [vmem:[%s1] sm:$0x3]
  %v80 = vld [vmem:[%s2] sm:$0x1]
  %v82 = vlaneseq
  %v83 = vshrl.u32 %v82, 7
  %v84 = vsub.s32 0, %v83
  %v85 = vrot.slane %v80, %v84
  %v151 = vunpack.c.l.b16 %v15
  %v152 = vunpack.c.l.b16 %v16
  %v153 = vunpack.c.l.b16 %v17
  %v154 = vunpack.c.l.b16 %v18
  %v155 = vunpack.c.l.b16 %v19
  %v156 = vunpack.c.l.b16 %v20
  %v157 = vunpack.c.l.b16 %v21
  %v158 = vunpack.c.l.b16 %v22
  %v159 = vunpack.c.l.b16 %v23
  %v160 = vunpack.c.l.b16 %v24
  %v161 = vunpack.c.l.b16 %v25
  %v162 = vunpack.c.l.b16 %v26
  %v163 = vunpack.c.l.b16 %v27
  %v164 = vunpack.c.l.b16 %v28
  %v165 = vunpack.c.l.b16 %v29
  %v166 = vunpack.c.l.b16 %v30
  %v167 = vunpack.c.l.b16 %v31
  %v168 = vunpack.c.l.b16 %v32
  %v169 = vunpack.c.l.b16 %v33
  %v170 = vunpack.c.l.b16 %v34
  %v171 = vunpack.c.l.b16 %v35
  %v172 = vunpack.c.l.b16 %v36
  %v173 = vunpack.c.l.b16 %v37
  %v174 = vunpack.c.l.b16 %v38
  %v175 = vunpack.c.l.b16 %v39
  %v176 = vunpack.c.l.b16 %v40
  %v177 = vunpack.c.l.b16 %v41
  %v178 = vunpack.c.l.b16 %v42
  %v179 = vunpack.c.l.b16 %v43
  %v180 = vunpack.c.l.b16 %v44
  %v181 = vunpack.c.l.b16 %v45
  %v182 = vunpack.c.l.b16 %v46
  %v183 = vunpack.c.l.b16 %v47
  %v184 = vunpack.c.l.b16 %v48
  %v185 = vunpack.c.l.b16 %v49
  %v186 = vunpack.c.l.b16 %v50
  %v187 = vunpack.c.l.b16 %v51
  %v188 = vunpack.c.l.b16 %v52
  %v189 = vunpack.c.l.b16 %v53
  %v190 = vunpack.c.l.b16 %v54
  %v191 = vunpack.c.l.b16 %v55
  %v192 = vunpack.c.l.b16 %v56
  %v193 = vunpack.c.l.b16 %v57
  %v194 = vunpack.c.l.b16 %v58
  %v195 = vunpack.c.l.b16 %v59
  %v196 = vunpack.c.l.b16 %v60
  %v197 = vunpack.c.l.b16 %v61
  %v198 = vunpack.c.l.b16 %v62
  %v199 = vunpack.c.l.b16 %v63
  %v200 = vunpack.c.l.b16 %v64
  %v201 = vunpack.c.l.b16 %v65
  %v202 = vunpack.c.l.b16 %v66
  %v203 = vunpack.c.l.b16 %v67
  %v204 = vunpack.c.l.b16 %v68
  %v205 = vunpack.c.l.b16 %v69
  %v206 = vunpack.c.l.b16 %v70
  %v207 = vunpack.c.l.b16 %v71
  %v208 = vunpack.c.l.b16 %v72
  %v209 = vunpack.c.l.b16 %v73
  %v210 = vunpack.c.l.b16 %v74
  %v211 = vunpack.c.l.b16 %v75
  %v212 = vunpack.c.l.b16 %v76
  %v213 = vunpack.c.l.b16 %v77
  %v214 = vunpack.c.l.b16 %v78
  %v215 = vpack.c.b16 %v152, %v151
  %v216 = vpack.c.b16 %v154, %v153
  %v217 = vpack.c.b16 %v156, %v155
  %v218 = vpack.c.b16 %v158, %v157
  %v219 = vpack.c.b16 %v160, %v159
  %v220 = vpack.c.b16 %v162, %v161
  %v221 = vpack.c.b16 %v164, %v163
  %v222 = vpack.c.b16 %v166, %v165
  %v223 = vpack.c.b16 %v168, %v167
  %v224 = vpack.c.b16 %v170, %v169
  %v225 = vpack.c.b16 %v172, %v171
  %v226 = vpack.c.b16 %v174, %v173
  %v227 = vpack.c.b16 %v176, %v175
  %v228 = vpack.c.b16 %v178, %v177
  %v229 = vpack.c.b16 %v180, %v179
  %v230 = vpack.c.b16 %v182, %v181
  %v231 = vpack.c.b16 %v184, %v183
  %v232 = vpack.c.b16 %v186, %v185
  %v233 = vpack.c.b16 %v188, %v187
  %v234 = vpack.c.b16 %v190, %v189
  %v235 = vpack.c.b16 %v192, %v191
  %v236 = vpack.c.b16 %v194, %v193
  %v237 = vpack.c.b16 %v196, %v195
  %v238 = vpack.c.b16 %v198, %v197
  %v239 = vpack.c.b16 %v200, %v199
  %v240 = vpack.c.b16 %v202, %v201
  %v241 = vpack.c.b16 %v204, %v203
  %v242 = vpack.c.b16 %v206, %v205
  %v243 = vpack.c.b16 %v208, %v207
  %v244 = vpack.c.b16 %v210, %v209
  %v245 = vpack.c.b16 %v212, %v211
  %v246 = vpack.c.b16 %v214, %v213
  %vm247 = vcmask 31744
  %v249 = vsel %vm247, %v215, 0
  %v252 = vsel %vm247, %v216, 0
  %v255 = vsel %vm247, %v217, 0
  %v258 = vsel %vm247, %v218, 0
  %v261 = vsel %vm247, %v219, 0
  %v264 = vsel %vm247, %v220, 0
  %v267 = vsel %vm247, %v221, 0
  %v270 = vsel %vm247, %v222, 0
  %v273 = vsel %vm247, %v223, 0
  %v276 = vsel %vm247, %v224, 0
  %v279 = vsel %vm247, %v225, 0
  %v282 = vsel %vm247, %v226, 0
  %v285 = vsel %vm247, %v227, 0
  %v288 = vsel %vm247, %v228, 0
  %v291 = vsel %vm247, %v229, 0
  %v294 = vsel %vm247, %v230, 0
  %v297 = vsel %vm247, %v231, 0
  %v300 = vsel %vm247, %v232, 0
  %v303 = vsel %vm247, %v233, 0
  %v306 = vsel %vm247, %v234, 0
  %v309 = vsel %vm247, %v235, 0
  %v312 = vsel %vm247, %v236, 0
  %v315 = vsel %vm247, %v237, 0
  %v318 = vsel %vm247, %v238, 0
  %v321 = vsel %vm247, %v239, 0
  %v324 = vsel %vm247, %v240, 0
  %v327 = vsel %vm247, %v241, 0
  %v330 = vsel %vm247, %v242, 0
  %v333 = vsel %vm247, %v243, 0
  %v336 = vsel %vm247, %v244, 0
  %v339 = vsel %vm247, %v245, 0
  %v342 = vsel %vm247, %v246, 0
  %vm344 = vcmask 1041408
  %v346 = vsel %vm344, %v79, 0
  %348 = vmatprep.subr.bf16.mxu0 0
  %349 = vmatpush1.bf16.msra.mxu0 0
  %350 = vmatprep.subr.bf16.mxu0 0
  %351 = vmatpush1.bf16.msra.mxu0 0
  %352 = vmatprep.subr.bf16.mxu0 0
  %353 = vmatpush1.bf16.msra.mxu0 0
  %354 = vmatprep.subr.bf16.mxu0 0
  %355 = vmatpush1.bf16.msra.mxu0 0
  %356 = vmatprep.subr.bf16.mxu0 0
  %357 = vmatpush1.bf16.msra.mxu0 0
  %358 = vmatprep.subr.bf16.mxu0 0
  %359 = vmatpush1.bf16.msra.mxu0 0
  %360 = vmatprep.subr.bf16.mxu0 0
  %361 = vmatpush1.bf16.msra.mxu0 0
  %362 = vmatprep.subr.bf16.mxu0 0
  %363 = vmatpush1.bf16.msra.mxu0 %v346
  %364 = vmatprep.subr.bf16.mxu0 0
  %365 = vmatpush2.bf16.msra.mxu0 0
  %366 = vmatprep.subr.bf16.mxu0 0
  %367 = vmatpush2.bf16.msra.mxu0 0
  %368 = vmatprep.subr.bf16.mxu0 0
  %369 = vmatpush2.bf16.msra.mxu0 0
  %370 = vmatprep.subr.bf16.mxu0 0
  %371 = vmatpush2.bf16.msra.mxu0 0
  %372 = vmatprep.subr.bf16.mxu0 0
  %373 = vmatpush2.bf16.msra.mxu0 0
  %374 = vmatprep.subr.bf16.mxu0 0
  %375 = vmatpush2.bf16.msra.mxu0 0
  %376 = vmatprep.subr.bf16.mxu0 0
  %377 = vmatpush2.bf16.msra.mxu0 0
  %378 = vmatprep.subr.bf16.mxu0 0
  %379 = vmatpush2.bf16.msra.mxu0 0
  %380 = vmatprep.mubr.bf16.mxu0 0
  %381 = vmatmul.mubr.bf16.gmra.mxu0 %v249
  %v382 = vpop.f32.mrf.mxu0
  %v383 = vadd.f32 %v85, %v382
  %v384 = vpop.f32.mrf.mxu0
  %v385 = vpop.f32.mrf.mxu0
  %v386 = vadd.f32 %v85, %v385
  %v387 = vpop.f32.mrf.mxu0
  %388 = vmatprep.mubr.bf16.mxu0 0
  %389 = vmatmul.mubr.bf16.gmra.mxu0 %v252
  %v390 = vpop.f32.mrf.mxu0
  %v391 = vadd.f32 %v85, %v390
  %v392 = vpop.f32.mrf.mxu0
  %v393 = vpop.f32.mrf.mxu0
  %v394 = vadd.f32 %v85, %v393
  %v395 = vpop.f32.mrf.mxu0
  %396 = vmatprep.mubr.bf16.mxu0 0
  %397 = vmatmul.mubr.bf16.gmra.mxu0 %v255
  %v398 = vpop.f32.mrf.mxu0
  %v399 = vadd.f32 %v85, %v398
  %v400 = vpop.f32.mrf.mxu0
  %v401 = vpop.f32.mrf.mxu0
  %v402 = vadd.f32 %v85, %v401
  %v403 = vpop.f32.mrf.mxu0
  %404 = vmatprep.mubr.bf16.mxu0 0
  %405 = vmatmul.mubr.bf16.gmra.mxu0 %v258
  %v406 = vpop.f32.mrf.mxu0
  %v407 = vadd.f32 %v85, %v406
  %v408 = vpop.f32.mrf.mxu0
  %v409 = vpop.f32.mrf.mxu0
  %v410 = vadd.f32 %v85, %v409
  %v411 = vpop.f32.mrf.mxu0
  %412 = vmatprep.mubr.bf16.mxu0 0
  %413 = vmatmul.mubr.bf16.gmra.mxu0 %v261
  %v414 = vpop.f32.mrf.mxu0
  %v415 = vadd.f32 %v85, %v414
  %v416 = vpop.f32.mrf.mxu0
  %v417 = vpop.f32.mrf.mxu0
  %v418 = vadd.f32 %v85, %v417
  %v419 = vpop.f32.mrf.mxu0
  %420 = vmatprep.mubr.bf16.mxu0 0
  %421 = vmatmul.mubr.bf16.gmra.mxu0 %v264
  %v422 = vpop.f32.mrf.mxu0
  %v423 = vadd.f32 %v85, %v422
  %v424 = vpop.f32.mrf.mxu0
  %v425 = vpop.f32.mrf.mxu0
  %v426 = vadd.f32 %v85, %v425
  %v427 = vpop.f32.mrf.mxu0
  %428 = vmatprep.mubr.bf16.mxu0 0
  %429 = vmatmul.mubr.bf16.gmra.mxu0 %v267
  %v430 = vpop.f32.mrf.mxu0
  %v431 = vadd.f32 %v85, %v430
  %v432 = vpop.f32.mrf.mxu0
  %v433 = vpop.f32.mrf.mxu0
  %v434 = vadd.f32 %v85, %v433
  %v435 = vpop.f32.mrf.mxu0
  %436 = vmatprep.mubr.bf16.mxu0 0
  %437 = vmatmul.mubr.bf16.gmra.mxu0 %v270
  %v438 = vpop.f32.mrf.mxu0
  %v439 = vadd.f32 %v85, %v438
  %v440 = vpop.f32.mrf.mxu0
  %v441 = vpop.f32.mrf.mxu0
  %v442 = vadd.f32 %v85, %v441
  %v443 = vpop.f32.mrf.mxu0
  %444 = vmatprep.mubr.bf16.mxu0 0
  %445 = vmatmul.mubr.bf16.gmra.mxu0 %v273
  %v446 = vpop.f32.mrf.mxu0
  %v447 = vadd.f32 %v85, %v446
  %v448 = vpop.f32.mrf.mxu0
  %v449 = vpop.f32.mrf.mxu0
  %v450 = vadd.f32 %v85, %v449
  %v451 = vpop.f32.mrf.mxu0
  %452 = vmatprep.mubr.bf16.mxu0 0
  %453 = vmatmul.mubr.bf16.gmra.mxu0 %v276
  %v454 = vpop.f32.mrf.mxu0
  %v455 = vadd.f32 %v85, %v454
  %v456 = vpop.f32.mrf.mxu0
  %v457 = vpop.f32.mrf.mxu0
  %v458 = vadd.f32 %v85, %v457
  %v459 = vpop.f32.mrf.mxu0
  %460 = vmatprep.mubr.bf16.mxu0 0
  %461 = vmatmul.mubr.bf16.gmra.mxu0 %v279
  %v462 = vpop.f32.mrf.mxu0
  %v463 = vadd.f32 %v85, %v462
  %v464 = vpop.f32.mrf.mxu0
  %v465 = vpop.f32.mrf.mxu0
  %v466 = vadd.f32 %v85, %v465
  %v467 = vpop.f32.mrf.mxu0
  %468 = vmatprep.mubr.bf16.mxu0 0
  %469 = vmatmul.mubr.bf16.gmra.mxu0 %v282
  %v470 = vpop.f32.mrf.mxu0
  %v471 = vadd.f32 %v85, %v470
  %v472 = vpop.f32.mrf.mxu0
  %v473 = vpop.f32.mrf.mxu0
  %v474 = vadd.f32 %v85, %v473
  %v475 = vpop.f32.mrf.mxu0
  %476 = vmatprep.mubr.bf16.mxu0 0
  %477 = vmatmul.mubr.bf16.gmra.mxu0 %v285
  %v478 = vpop.f32.mrf.mxu0
  %v479 = vadd.f32 %v85, %v478
  %v480 = vpop.f32.mrf.mxu0
  %v481 = vpop.f32.mrf.mxu0
  %v482 = vadd.f32 %v85, %v481
  %v483 = vpop.f32.mrf.mxu0
  %484 = vmatprep.mubr.bf16.mxu0 0
  %485 = vmatmul.mubr.bf16.gmra.mxu0 %v288
  %v486 = vpop.f32.mrf.mxu0
  %v487 = vadd.f32 %v85, %v486
  %v488 = vpop.f32.mrf.mxu0
  %v489 = vpop.f32.mrf.mxu0
  %v490 = vadd.f32 %v85, %v489
  %v491 = vpop.f32.mrf.mxu0
  %492 = vmatprep.mubr.bf16.mxu0 0
  %493 = vmatmul.mubr.bf16.gmra.mxu0 %v291
  %v494 = vpop.f32.mrf.mxu0
  %v495 = vadd.f32 %v85, %v494
  %v496 = vpop.f32.mrf.mxu0
  %v497 = vpop.f32.mrf.mxu0
  %v498 = vadd.f32 %v85, %v497
  %v499 = vpop.f32.mrf.mxu0
  %500 = vmatprep.mubr.bf16.mxu0 0
  %501 = vmatmul.mubr.bf16.gmra.mxu0 %v294
  %v502 = vpop.f32.mrf.mxu0
  %v503 = vadd.f32 %v85, %v502
  %v504 = vpop.f32.mrf.mxu0
  %v505 = vpop.f32.mrf.mxu0
  %v506 = vadd.f32 %v85, %v505
  %v507 = vpop.f32.mrf.mxu0
  %508 = vmatprep.mubr.bf16.mxu0 0
  %509 = vmatmul.mubr.bf16.gmra.mxu0 %v297
  %v510 = vpop.f32.mrf.mxu0
  %v511 = vadd.f32 %v85, %v510
  %v512 = vpop.f32.mrf.mxu0
  %v513 = vpop.f32.mrf.mxu0
  %v514 = vadd.f32 %v85, %v513
  %v515 = vpop.f32.mrf.mxu0
  %516 = vmatprep.mubr.bf16.mxu0 0
  %517 = vmatmul.mubr.bf16.gmra.mxu0 %v300
  %v518 = vpop.f32.mrf.mxu0
  %v519 = vadd.f32 %v85, %v518
  %v520 = vpop.f32.mrf.mxu0
  %v521 = vpop.f32.mrf.mxu0
  %v522 = vadd.f32 %v85, %v521
  %v523 = vpop.f32.mrf.mxu0
  %524 = vmatprep.mubr.bf16.mxu0 0
  %525 = vmatmul.mubr.bf16.gmra.mxu0 %v303
  %v526 = vpop.f32.mrf.mxu0
  %v527 = vadd.f32 %v85, %v526
  %v528 = vpop.f32.mrf.mxu0
  %v529 = vpop.f32.mrf.mxu0
  %v530 = vadd.f32 %v85, %v529
  %v531 = vpop.f32.mrf.mxu0
  %532 = vmatprep.mubr.bf16.mxu0 0
  %533 = vmatmul.mubr.bf16.gmra.mxu0 %v306
  %v534 = vpop.f32.mrf.mxu0
  %v535 = vadd.f32 %v85, %v534
  %v536 = vpop.f32.mrf.mxu0
  %v537 = vpop.f32.mrf.mxu0
  %v538 = vadd.f32 %v85, %v537
  %v539 = vpop.f32.mrf.mxu0
  %540 = vmatprep.mubr.bf16.mxu0 0
  %541 = vmatmul.mubr.bf16.gmra.mxu0 %v309
  %v542 = vpop.f32.mrf.mxu0
  %v543 = vadd.f32 %v85, %v542
  %v544 = vpop.f32.mrf.mxu0
  %v545 = vpop.f32.mrf.mxu0
  %v546 = vadd.f32 %v85, %v545
  %v547 = vpop.f32.mrf.mxu0
  %548 = vmatprep.mubr.bf16.mxu0 0
  %549 = vmatmul.mubr.bf16.gmra.mxu0 %v312
  %v550 = vpop.f32.mrf.mxu0
  %v551 = vadd.f32 %v85, %v550
  %v552 = vpop.f32.mrf.mxu0
  %v553 = vpop.f32.mrf.mxu0
  %v554 = vadd.f32 %v85, %v553
  %v555 = vpop.f32.mrf.mxu0
  %556 = vmatprep.mubr.bf16.mxu0 0
  %557 = vmatmul.mubr.bf16.gmra.mxu0 %v315
  %v558 = vpop.f32.mrf.mxu0
  %v559 = vadd.f32 %v85, %v558
  %v560 = vpop.f32.mrf.mxu0
  %v561 = vpop.f32.mrf.mxu0
  %v562 = vadd.f32 %v85, %v561
  %v563 = vpop.f32.mrf.mxu0
  %564 = vmatprep.mubr.bf16.mxu0 0
  %565 = vmatmul.mubr.bf16.gmra.mxu0 %v318
  %v566 = vpop.f32.mrf.mxu0
  %v567 = vadd.f32 %v85, %v566
  %v568 = vpop.f32.mrf.mxu0
  %v569 = vpop.f32.mrf.mxu0
  %v570 = vadd.f32 %v85, %v569
  %v571 = vpop.f32.mrf.mxu0
  %572 = vmatprep.mubr.bf16.mxu0 0
  %573 = vmatmul.mubr.bf16.gmra.mxu0 %v321
  %v574 = vpop.f32.mrf.mxu0
  %v575 = vadd.f32 %v85, %v574
  %v576 = vpop.f32.mrf.mxu0
  %v577 = vpop.f32.mrf.mxu0
  %v578 = vadd.f32 %v85, %v577
  %v579 = vpop.f32.mrf.mxu0
  %580 = vmatprep.mubr.bf16.mxu0 0
  %581 = vmatmul.mubr.bf16.gmra.mxu0 %v324
  %v582 = vpop.f32.mrf.mxu0
  %v583 = vadd.f32 %v85, %v582
  %v584 = vpop.f32.mrf.mxu0
  %v585 = vpop.f32.mrf.mxu0
  %v586 = vadd.f32 %v85, %v585
  %v587 = vpop.f32.mrf.mxu0
  %588 = vmatprep.mubr.bf16.mxu0 0
  %589 = vmatmul.mubr.bf16.gmra.mxu0 %v327
  %v590 = vpop.f32.mrf.mxu0
  %v591 = vadd.f32 %v85, %v590
  %v592 = vpop.f32.mrf.mxu0
  %v593 = vpop.f32.mrf.mxu0
  %v594 = vadd.f32 %v85, %v593
  %v595 = vpop.f32.mrf.mxu0
  %596 = vmatprep.mubr.bf16.mxu0 0
  %597 = vmatmul.mubr.bf16.gmra.mxu0 %v330
  %v598 = vpop.f32.mrf.mxu0
  %v599 = vadd.f32 %v85, %v598
  %v600 = vpop.f32.mrf.mxu0
  %v601 = vpop.f32.mrf.mxu0
  %v602 = vadd.f32 %v85, %v601
  %v603 = vpop.f32.mrf.mxu0
  %604 = vmatprep.mubr.bf16.mxu0 0
  %605 = vmatmul.mubr.bf16.gmra.mxu0 %v333
  %v606 = vpop.f32.mrf.mxu0
  %v607 = vadd.f32 %v85, %v606
  %v608 = vpop.f32.mrf.mxu0
  %v609 = vpop.f32.mrf.mxu0
  %v610 = vadd.f32 %v85, %v609
  %v611 = vpop.f32.mrf.mxu0
  %612 = vmatprep.mubr.bf16.mxu0 0
  %613 = vmatmul.mubr.bf16.gmra.mxu0 %v336
  %v614 = vpop.f32.mrf.mxu0
  %v615 = vadd.f32 %v85, %v614
  %v616 = vpop.f32.mrf.mxu0
  %v617 = vpop.f32.mrf.mxu0
  %v618 = vadd.f32 %v85, %v617
  %v619 = vpop.f32.mrf.mxu0
  %620 = vmatprep.mubr.bf16.mxu0 0
  %621 = vmatmul.mubr.bf16.gmra.mxu0 %v339
  %v622 = vpop.f32.mrf.mxu0
  %v623 = vadd.f32 %v85, %v622
  %v624 = vpop.f32.mrf.mxu0
  %v625 = vpop.f32.mrf.mxu0
  %v626 = vadd.f32 %v85, %v625
  %v627 = vpop.f32.mrf.mxu0
  %628 = vmatprep.mubr.bf16.mxu0 0
  %629 = vmatmul.mubr.bf16.gmra.mxu0 %v342
  %v630 = vpop.f32.mrf.mxu0
  %v631 = vadd.f32 %v85, %v630
  %v632 = vpop.f32.mrf.mxu0
  %v633 = vpop.f32.mrf.mxu0
  %v634 = vadd.f32 %v85, %v633
  %v635 = vpop.f32.mrf.mxu0
  %636 = vdwg.mxu0
  %vm637 = vcmask 130048
  %638 = vst.msk [vmem:[%s3] sm:$0xff] %vm637, %v383
  %639 = vst.msk [vmem:[%s3 + $0x8] sm:$0xff] %vm637, %v386
  %640 = vst.msk [vmem:[%s3 + $0x10] sm:$0xff] %vm637, %v391
  %641 = vst.msk [vmem:[%s3 + $0x18] sm:$0xff] %vm637, %v394
  %642 = vst.msk [vmem:[%s3 + $0x20] sm:$0xff] %vm637, %v399
  %643 = vst.msk [vmem:[%s3 + $0x28] sm:$0xff] %vm637, %v402
  %644 = vst.msk [vmem:[%s3 + $0x30] sm:$0xff] %vm637, %v407
  %645 = vst.msk [vmem:[%s3 + $0x38] sm:$0xff] %vm637, %v410
  %646 = vst.msk [vmem:[%s3 + $0x40] sm:$0xff] %vm637, %v415
  %647 = vst.msk [vmem:[%s3 + $0x48] sm:$0xff] %vm637, %v418
  %648 = vst.msk [vmem:[%s3 + $0x50] sm:$0xff] %vm637, %v423
  %649 = vst.msk [vmem:[%s3 + $0x58] sm:$0xff] %vm637, %v426
  %650 = vst.msk [vmem:[%s3 + $0x60] sm:$0xff] %vm637, %v431
  %651 = vst.msk [vmem:[%s3 + $0x68] sm:$0xff] %vm637, %v434
  %652 = vst.msk [vmem:[%s3 + $0x70] sm:$0xff] %vm637, %v439
  %653 = vst.msk [vmem:[%s3 + $0x78] sm:$0xff] %vm637, %v442
  %654 = vst.msk [vmem:[%s3 + $0x80] sm:$0xff] %vm637, %v447
  %655 = vst.msk [vmem:[%s3 + $0x88] sm:$0xff] %vm637, %v450
  %656 = vst.msk [vmem:[%s3 + $0x90] sm:$0xff] %vm637, %v455
  %657 = vst.msk [vmem:[%s3 + $0x98] sm:$0xff] %vm637, %v458
  %658 = vst.msk [vmem:[%s3 + $0xa0] sm:$0xff] %vm637, %v463
  %659 = vst.msk [vmem:[%s3 + $0xa8] sm:$0xff] %vm637, %v466
  %660 = vst.msk [vmem:[%s3 + $0xb0] sm:$0xff] %vm637, %v471
  %661 = vst.msk [vmem:[%s3 + $0xb8] sm:$0xff] %vm637, %v474
  %662 = vst.msk [vmem:[%s3 + $0xc0] sm:$0xff] %vm637, %v479
  %663 = vst.msk [vmem:[%s3 + $0xc8] sm:$0xff] %vm637, %v482
  %664 = vst.msk [vmem:[%s3 + $0xd0] sm:$0xff] %vm637, %v487
  %665 = vst.msk [vmem:[%s3 + $0xd8] sm:$0xff] %vm637, %v490
  %666 = vst.msk [vmem:[%s3 + $0xe0] sm:$0xff] %vm637, %v495
  %667 = vst.msk [vmem:[%s3 + $0xe8] sm:$0xff] %vm637, %v498
  %668 = vst.msk [vmem:[%s3 + $0xf0] sm:$0xff] %vm637, %v503
  %669 = vst.msk [vmem:[%s3 + $0xf8] sm:$0xff] %vm637, %v506
  %670 = vst.msk [vmem:[%s3 + $0x100] sm:$0xff] %vm637, %v511
  %671 = vst.msk [vmem:[%s3 + $0x108] sm:$0xff] %vm637, %v514
  %672 = vst.msk [vmem:[%s3 + $0x110] sm:$0xff] %vm637, %v519
  %673 = vst.msk [vmem:[%s3 + $0x118] sm:$0xff] %vm637, %v522
  %674 = vst.msk [vmem:[%s3 + $0x120] sm:$0xff] %vm637, %v527
  %675 = vst.msk [vmem:[%s3 + $0x128] sm:$0xff] %vm637, %v530
  %676 = vst.msk [vmem:[%s3 + $0x130] sm:$0xff] %vm637, %v535
  %677 = vst.msk [vmem:[%s3 + $0x138] sm:$0xff] %vm637, %v538
  %678 = vst.msk [vmem:[%s3 + $0x140] sm:$0xff] %vm637, %v543
  %679 = vst.msk [vmem:[%s3 + $0x148] sm:$0xff] %vm637, %v546
  %680 = vst.msk [vmem:[%s3 + $0x150] sm:$0xff] %vm637, %v551
  %681 = vst.msk [vmem:[%s3 + $0x158] sm:$0xff] %vm637, %v554
  %682 = vst.msk [vmem:[%s3 + $0x160] sm:$0xff] %vm637, %v559
  %683 = vst.msk [vmem:[%s3 + $0x168] sm:$0xff] %vm637, %v562
  %684 = vst.msk [vmem:[%s3 + $0x170] sm:$0xff] %vm637, %v567
  %685 = vst.msk [vmem:[%s3 + $0x178] sm:$0xff] %vm637, %v570
  %686 = vst.msk [vmem:[%s3 + $0x180] sm:$0xff] %vm637, %v575
  %687 = vst.msk [vmem:[%s3 + $0x188] sm:$0xff] %vm637, %v578
  %688 = vst.msk [vmem:[%s3 + $0x190] sm:$0xff] %vm637, %v583
  %689 = vst.msk [vmem:[%s3 + $0x198] sm:$0xff] %vm637, %v586
  %690 = vst.msk [vmem:[%s3 + $0x1a0] sm:$0xff] %vm637, %v591
  %691 = vst.msk [vmem:[%s3 + $0x1a8] sm:$0xff] %vm637, %v594
  %692 = vst.msk [vmem:[%s3 + $0x1b0] sm:$0xff] %vm637, %v599
  %693 = vst.msk [vmem:[%s3 + $0x1b8] sm:$0xff] %vm637, %v602
  %694 = vst.msk [vmem:[%s3 + $0x1c0] sm:$0xff] %vm637, %v607
  %695 = vst.msk [vmem:[%s3 + $0x1c8] sm:$0xff] %vm637, %v610
  %696 = vst.msk [vmem:[%s3 + $0x1d0] sm:$0xff] %vm637, %v615
  %697 = vst.msk [vmem:[%s3 + $0x1d8] sm:$0xff] %vm637, %v618
  %698 = vst.msk [vmem:[%s3 + $0x1e0] sm:$0xff] %vm637, %v623
  %699 = vst.msk [vmem:[%s3 + $0x1e8] sm:$0xff] %vm637, %v626
  %700 = vst.msk [vmem:[%s3 + $0x1f0] sm:$0xff] %vm637, %v631
  %701 = vst.msk [vmem:[%s3 + $0x1f8] sm:$0xff] %vm637, %v634
  // Predicated region
  $region14: #{bottleneck_forward.7} parent=0 // pred_check
    _
  $region15: #{bottleneck_forward.7} parent=0 // pred_check_branch
    %703 = sbr.rel (0) target = $region17
  $region16: #{bottleneck_forward.7} parent=0 // pred_region
    _
  $region17: #{bottleneck_forward.7} parent=0 // pred_fallthru
    _
  // Predicated region
  $region18: #{bottleneck_forward.7} parent=0 // pred_check
    _
  $region19: #{bottleneck_forward.7} parent=0 // pred_check_branch
    %705 = sbr.rel (0) target = $region21
  $region20: #{bottleneck_forward.7} parent=0 // pred_region
    _
  $region21: #{bottleneck_forward.7} parent=0 // pred_fallthru
    _

// kernel: bottleneck_forward.6
$region0: #{bottleneck_forward.6}
  #allocation0 [shape = 'u32[]', space=smem, size = 0x4, offset = 0x4, fixed_abs, tag = 'smem constant byte address 0x4 - core index']
  #allocation1 [shape = 'u32[144,128]{1,0:T(1,128)}', space=vmem, size = 0x12000, scoped, tag = 'internal scratch']
  %s0 = inlined_call_operand.vmem [shape: bf16[2,18,18,4], index: 0, kind: input, shape index: {}]
  %s1 = inlined_call_operand.vmem [shape: bf16[9,4,4], index: 1, kind: input, shape index: {}]
  %s2 = inlined_call_operand.vmem [shape: f32[1,4], index: 2, kind: input, shape index: {}]
  %s3 = inlined_call_operand.vmem [shape: bf16[512,4], index: 3, kind: output, shape index: {}]
  %s4 = sld [smem:[#allocation0]]
  $region45: #{bottleneck_forward.6} parent=0
    _
  %s6 = ssub.s32 1, %s4
  %s7 = scalar_select 0, %s6, %s4
  loop: start=0, step=1, limit=4
  $region2: #{bottleneck_forward.6} parent=0 // loop_pre_header
    _
  $region3: #{bottleneck_forward.6} parent=0 // loop_header
    %s9 = sphi 0, %s13
    %p10 = scmp.ge.s32.totalorder %s9, 4
    %s19 = sphi 0, %s21
    %s22 = sphi 0, %s19
    %s23 = sphi 0, %s22
    %s39 = sphi 0, %s23
    %s43 = sphi 0, %s43
    %s45 = sphi 0, %s43
    %s46 = sphi 0, %s45
    %s60 = sphi 0, %s46
    %s64 = sphi 0, %s64
    %s66 = sphi 0, %s64
    %s67 = sphi 0, %s66
    %s81 = sphi 0, %s67
    %s87 = sphi 0, %s89
    %s90 = sphi 0, %s87
    %s91 = sphi 0, %s90
    %s107 = sphi 0, %s91
  $region4: #{bottleneck_forward.6} parent=0 // loop_header_branch
    %12 = sbr.rel (%p10) target = $region8
  $region5: #{bottleneck_forward.6} parent=0 // loop_body
    %s14 = ssub.s32 %s9, 1
    %s15 = ssub.s32 %s9, 2
    %s16 = sadd.s32 %s9, 1
    %s17 = ssub.s32 %s9, %s16
    %p18 = scmp.eq.s32.totalorder %s17, 0
    %s20 = sadd.s32 %s19, 1
    %s21 = scalar_select %p18, %s19, %s20
    %p24 = pneg %p18
    %p25 = scmp.eq.s32.totalorder %s9, 1
    %p26 = por %p24, %p25
    %p27 = scmp.ne.s32.totalorder %s19, %s22
    %p28 = scmp.eq.s32.totalorder %s9, 0
    %p29 = por %p27, %p28
    %p30 = scmp.ne.s32.totalorder %s19, %s22
    %p31 = scmp.eq.s32.totalorder %s14, 1
    %p32 = por %p30, %p31
    %p33 = scmp.ne.s32.totalorder %s22, %s23
    %p34 = scmp.eq.s32.totalorder %s14, 0
    %p35 = por %p33, %p34
    %p36 = scmp.ne.s32.totalorder %s22, %s23
    %p37 = scmp.eq.s32.totalorder %s15, 1
    %p38 = por %p36, %p37
    %p40 = scmp.ne.s32.totalorder %s23, %s39
    %p41 = scmp.eq.s32.totalorder %s15, 0
    %p42 = por %p40, %p41
    %s44 = sadd.s32 %s43, 1
    %p47 = scmp.eq.s32.totalorder %s9, 1
    %p48 = scmp.ne.s32.totalorder %s43, %s45
    %p49 = scmp.eq.s32.totalorder %s9, 0
    %p50 = por %p48, %p49
    %p51 = scmp.ne.s32.totalorder %s43, %s45
    %p52 = scmp.eq.s32.totalorder %s14, 1
    %p53 = por %p51, %p52
    %p54 = scmp.ne.s32.totalorder %s45, %s46
    %p55 = scmp.eq.s32.totalorder %s14, 0
    %p56 = por %p54, %p55
    %p57 = scmp.ne.s32.totalorder %s45, %s46
    %p58 = scmp.eq.s32.totalorder %s15, 1
    %p59 = por %p57, %p58
    %p61 = scmp.ne.s32.totalorder %s46, %s60
    %p62 = scmp.eq.s32.totalorder %s15, 0
    %p63 = por %p61, %p62
    %s65 = sadd.s32 %s64, 1
    %p68 = scmp.eq.s32.totalorder %s9, 1
    %p69 = scmp.ne.s32.totalorder %s64, %s66
    %p70 = scmp.eq.s32.totalorder %s9, 0
    %p71 = por %p69, %p70
    %p72 = scmp.ne.s32.totalorder %s64, %s66
    %p73 = scmp.eq.s32.totalorder %s14, 1
    %p74 = por %p72, %p73
    %p75 = scmp.ne.s32.totalorder %s66, %s67
    %p76 = scmp.eq.s32.totalorder %s14, 0
    %p77 = por %p75, %p76
    %p78 = scmp.ne.s32.totalorder %s66, %s67
    %p79 = scmp.eq.s32.totalorder %s15, 1
    %p80 = por %p78, %p79
    %p82 = scmp.ne.s32.totalorder %s67, %s81
    %p83 = scmp.eq.s32.totalorder %s15, 0
    %p84 = por %p82, %p83
    %s85 = ssub.s32 %s9, %s16
    %p86 = scmp.eq.s32.totalorder %s85, 0
    %s88 = sadd.s32 %s87, 1
    %s89 = scalar_select %p86, %s87, %s88
    %p92 = pneg %p86
    %p93 = scmp.eq.s32.totalorder %s9, 1
    %p94 = por %p92, %p93
    %p95 = scmp.ne.s32.totalorder %s87, %s90
    %p96 = scmp.eq.s32.totalorder %s9, 0
    %p97 = por %p95, %p96
    %p98 = scmp.ne.s32.totalorder %s87, %s90
    %p99 = scmp.eq.s32.totalorder %s14, 1
    %p100 = por %p98, %p99
    %p101 = scmp.ne.s32.totalorder %s90, %s91
    %p102 = scmp.eq.s32.totalorder %s14, 0
    %p103 = por %p101, %p102
    %p104 = scmp.ne.s32.totalorder %s90, %s91
    %p105 = scmp.eq.s32.totalorder %s15, 1
    %p106 = por %p104, %p105
    %p108 = scmp.ne.s32.totalorder %s91, %s107
    %p109 = scmp.eq.s32.totalorder %s15, 0
    %p110 = por %p108, %p109
    %p111 = scmp.le.s32.totalorder 1, %s9
    %p112 = scmp.lt.s32.totalorder %s9, 3
    %p113 = pnand %p111, %p112
    %p114 = pneg %p113
    // Predicated region
    $region9: #{bottleneck_forward.6} parent=5 // pred_check
      _
    $region10: #{bottleneck_forward.6} parent=5 // pred_check_branch
      %116 = sbr.rel (%p113) target = $region12
    $region11: #{bottleneck_forward.6} parent=5 // pred_region
      %s117 = ssub.s32 %s9, 1
      // Predicated region
      $region13: #{bottleneck_forward.6} parent=11 // pred_check
        %p118 = pneg %p56
      $region14: #{bottleneck_forward.6} parent=11 // pred_check_branch
        %120 = sbr.rel (%p118) target = $region16
      $region15: #{bottleneck_forward.6} parent=11 // pred_region
        _
      $region16: #{bottleneck_forward.6} parent=11 // pred_fallthru
        _
      // Predicated region
      $region17: #{bottleneck_forward.6} parent=11 // pred_check
        %p121 = pneg %p77
      $region18: #{bottleneck_forward.6} parent=11 // pred_check_branch
        %123 = sbr.rel (%p121) target = $region20
      $region19: #{bottleneck_forward.6} parent=11 // pred_region
        _
      $region20: #{bottleneck_forward.6} parent=11 // pred_fallthru
        _
    $region12: #{bottleneck_forward.6} parent=5 // pred_fallthru
      _
    %p124 = scmp.lt.s32.totalorder %s9, 2
    // Predicated region
    $region21: #{bottleneck_forward.6} parent=5 // pred_check
      %p125 = pneg %p124
    $region22: #{bottleneck_forward.6} parent=5 // pred_check_branch
      %127 = sbr.rel (%p125) target = $region24
    $region23: #{bottleneck_forward.6} parent=5 // pred_region
      // Predicated region
      $region25: #{bottleneck_forward.6} parent=23 // pred_check
        %p128 = pneg %p29
      $region26: #{bottleneck_forward.6} parent=23 // pred_check_branch
        %130 = sbr.rel (%p128) target = $region28
      $region27: #{bottleneck_forward.6} parent=23 // pred_region
        %p131 = scmp.lt.s32.totalorder %s9, 1
        %s132 = scalar_select %p131, %s9, 1
        %s133 = smul.addr %s132, 54
        %s134 = smul.addr %s133, 4
        %s135 = scalar_lea.vmem %s0, %s134
      $region28: #{bottleneck_forward.6} parent=23 // pred_fallthru
        _
    $region24: #{bottleneck_forward.6} parent=5 // pred_fallthru
      _
    %p136 = scmp.le.s32.totalorder 1, %s9
    %p137 = scmp.lt.s32.totalorder %s9, 3
    %p138 = pnand %p136, %p137
    %p139 = pneg %p138
    // Predicated region
    $region29: #{bottleneck_forward.6} parent=5 // pred_check
      _
    $region30: #{bottleneck_forward.6} parent=5 // pred_check_branch
      %141 = sbr.rel (%p138) target = $region32
    $region31: #{bottleneck_forward.6} parent=5 // pred_region
      %s142 = ssub.s32 %s9, 1
      %p143 = scmp.lt.s32.totalorder %s14, 1
      %s144 = scalar_select %p143, %s14, 1
      %s145 = smul.addr %s144, 54
      %s146 = smul.addr %s145, 4
      %s147 = scalar_lea.vmem %s0, %s146
      %p148 = pneg %p35
      %p149 = pneg %p32
      %p150 = pneg %p56
      %p151 = pneg %p53
      %p152 = pneg %p77
      %p153 = pneg %p74
      %p154 = pneg %p103
      %p155 = pneg %p100
      %s156 = smul.u32 32, %s14
      %p157 = scmp.lt.s32.totalorder %s156, 63
      %s158 = scalar_select %p157, %s156, 63
      %s159 = smul.addr %s158, 4
      %s160 = scalar_lea.vmem %s3, %s159
      %p161 = scmp.lt.s32.totalorder %s14, 1
      %s162 = scalar_select %p161, %s14, 1
      %s163 = smul.addr %s162, 54
      %s164 = smul.addr %s163, 4
      %s165 = scalar_lea.vmem %s0, %s164
      %s166 = smul.u32 32, %s14
      %p167 = scmp.lt.s32.totalorder %s166, 63
      %s168 = scalar_select %p167, %s166, 63
      %s169 = smul.addr %s168, 4
      %s170 = scalar_lea.vmem %s3, %s169
      %s171 = smul.u32 32, %s14
      %v173 = vld [vmem:[%s165] sm:$0xf]
      %v174 = vld [vmem:[%s165 + $0x4] sm:$0xf]
      %v175 = vld [vmem:[%s165 + $0x8] sm:$0x1]
      %v176 = vld [vmem:[%s165 + $0xc] sm:$0xf]
      %v177 = vld [vmem:[%s165 + $0x10] sm:$0xf]
      %v178 = vld [vmem:[%s165 + $0x14] sm:$0x1]
      %v179 = vld [vmem:[%s165 + $0x18] sm:$0xf]
      %v180 = vld [vmem:[%s165 + $0x1c] sm:$0xf]
      %v181 = vld [vmem:[%s165 + $0x20] sm:$0x1]
      %v182 = vld [vmem:[%s165 + $0x24] sm:$0xf]
      %v183 = vld [vmem:[%s165 + $0x28] sm:$0xf]
      %v184 = vld [vmem:[%s165 + $0x2c] sm:$0x1]
      %v185 = vld [vmem:[%s165 + $0x30] sm:$0xf]
      %v186 = vld [vmem:[%s165 + $0x34] sm:$0xf]
      %v187 = vld [vmem:[%s165 + $0x38] sm:$0x1]
      %v188 = vld [vmem:[%s165 + $0x3c] sm:$0xf]
      %v189 = vld [vmem:[%s165 + $0x40] sm:$0xf]
      %v190 = vld [vmem:[%s165 + $0x44] sm:$0x1]
      %v191 = vld [vmem:[%s165 + $0x48] sm:$0xf]
      %v192 = vld [vmem:[%s165 + $0x4c] sm:$0xf]
      %v193 = vld [vmem:[%s165 + $0x50] sm:$0x1]
      %v194 = vld [vmem:[%s165 + $0x54] sm:$0xf]
      %v195 = vld [vmem:[%s165 + $0x58] sm:$0xf]
      %v196 = vld [vmem:[%s165 + $0x5c] sm:$0x1]
      %v197 = vld [vmem:[%s165 + $0x60] sm:$0xf]
      %v198 = vld [vmem:[%s165 + $0x64] sm:$0xf]
      %v199 = vld [vmem:[%s165 + $0x68] sm:$0x1]
      %v200 = vld [vmem:[%s165 + $0x6c] sm:$0xf]
      %v201 = vld [vmem:[%s165 + $0x70] sm:$0xf]
      %v202 = vld [vmem:[%s165 + $0x74] sm:$0x1]
      %v203 = vld [vmem:[%s165 + $0x78] sm:$0xf]
      %v204 = vld [vmem:[%s165 + $0x7c] sm:$0xf]
      %v205 = vld [vmem:[%s165 + $0x80] sm:$0x1]
      %v206 = vld [vmem:[%s165 + $0x84] sm:$0xf]
      %v207 = vld [vmem:[%s165 + $0x88] sm:$0xf]
      %v208 = vld [vmem:[%s165 + $0x8c] sm:$0x1]
      %v209 = vld [vmem:[%s165 + $0x90] sm:$0xf]
      %v210 = vld [vmem:[%s165 + $0x94] sm:$0xf]
      %v211 = vld [vmem:[%s165 + $0x98] sm:$0x1]
      %v212 = vld [vmem:[%s165 + $0x9c] sm:$0xf]
      %v213 = vld [vmem:[%s165 + $0xa0] sm:$0xf]
      %v214 = vld [vmem:[%s165 + $0xa4] sm:$0x1]
      %v215 = vld [vmem:[%s165 + $0xa8] sm:$0xf]
      %v216 = vld [vmem:[%s165 + $0xac] sm:$0xf]
      %v217 = vld [vmem:[%s165 + $0xb0] sm:$0x1]
      %v218 = vld [vmem:[%s165 + $0xb4] sm:$0xf]
      %v219 = vld [vmem:[%s165 + $0xb8] sm:$0xf]
      %v220 = vld [vmem:[%s165 + $0xbc] sm:$0x1]
      %v221 = vld [vmem:[%s165 + $0xc0] sm:$0xf]
      %v222 = vld [vmem:[%s165 + $0xc4] sm:$0xf]
      %v223 = vld [vmem:[%s165 + $0xc8] sm:$0x1]
      %v224 = vld [vmem:[%s165 + $0xcc] sm:$0xf]
      %v225 = vld [vmem:[%s165 + $0xd0] sm:$0xf]
      %v226 = vld [vmem:[%s165 + $0xd4] sm:$0x1]
      %v227 = vunpack.c.l.bf16 %v173
      %v228 = vunpack.c.l.bf16 %v174
      %v229 = vunpack.c.l.bf16 %v175
      %v230 = vunpack.c.l.bf16 %v176
      %v231 = vunpack.c.l.bf16 %v177
      %v232 = vunpack.c.l.bf16 %v178
      %v233 = vunpack.c.l.bf16 %v179
      %v234 = vunpack.c.l.bf16 %v180
      %v235 = vunpack.c.l.bf16 %v181
      %v236 = vunpack.c.l.bf16 %v182
      %v237 = vunpack.c.l.bf16 %v183
      %v238 = vunpack.c.l.bf16 %v184
      %v239 = vunpack.c.l.bf16 %v185
      %v240 = vunpack.c.l.bf16 %v186
      %v241 = vunpack.c.l.bf16 %v187
      %v242 = vunpack.c.l.bf16 %v188
      %v243 = vunpack.c.l.bf16 %v189
      %v244 = vunpack.c.l.bf16 %v190
      %v245 = vunpack.c.l.bf16 %v191
      %v246 = vunpack.c.l.bf16 %v192
      %v247 = vunpack.c.l.bf16 %v193
      %v248 = vunpack.c.l.bf16 %v194
      %v249 = vunpack.c.l.bf16 %v195
      %v250 = vunpack.c.l.bf16 %v196
      %v251 = vunpack.c.l.bf16 %v197
      %v252 = vunpack.c.l.bf16 %v198
      %v253 = vunpack.c.l.bf16 %v199
      %v254 = vunpack.c.l.bf16 %v200
      %v255 = vunpack.c.l.bf16 %v201
      %v256 = vunpack.c.l.bf16 %v202
      %v257 = vunpack.c.l.bf16 %v203
      %v258 = vunpack.c.l.bf16 %v204
      %v259 = vunpack.c.l.bf16 %v205
      %v260 = vunpack.c.l.bf16 %v206
      %v261 = vunpack.c.l.bf16 %v207
      %v262 = vunpack.c.l.bf16 %v208
      %v263 = vunpack.c.l.bf16 %v209
      %v264 = vunpack.c.l.bf16 %v210
      %v265 = vunpack.c.l.bf16 %v211
      %v266 = vunpack.c.l.bf16 %v212
      %v267 = vunpack.c.l.bf16 %v213
      %v268 = vunpack.c.l.bf16 %v214
      %v269 = vunpack.c.l.bf16 %v215
      %v270 = vunpack.c.l.bf16 %v216
      %v271 = vunpack.c.l.bf16 %v217
      %v272 = vunpack.c.l.bf16 %v218
      %v273 = vunpack.c.l.bf16 %v219
      %v274 = vunpack.c.l.bf16 %v220
      %v275 = vunpack.c.l.bf16 %v221
      %v276 = vunpack.c.l.bf16 %v222
      %v277 = vunpack.c.l.bf16 %v223
      %v278 = vunpack.c.l.bf16 %v224
      %v279 = vunpack.c.l.bf16 %v225
      %v280 = vunpack.c.l.bf16 %v226
      %v281 = vpack.c.bf16 %v228, %v227
      %v282 = vpack.c.bf16 %v231, %v230
      %v283 = vpack.c.bf16 %v234, %v233
      %v284 = vpack.c.bf16 %v237, %v236
      %v285 = vpack.c.bf16 %v240, %v239
      %v286 = vpack.c.bf16 %v243, %v242
      %v287 = vpack.c.bf16 %v246, %v245
      %v288 = vpack.c.bf16 %v249, %v248
      %v289 = vpack.c.bf16 %v252, %v251
      %v290 = vpack.c.bf16 %v255, %v254
      %v291 = vpack.c.bf16 %v258, %v257
      %v292 = vpack.c.bf16 %v261, %v260
      %v293 = vpack.c.bf16 %v264, %v263
      %v294 = vpack.c.bf16 %v267, %v266
      %v295 = vpack.c.bf16 %v270, %v269
      %v296 = vpack.c.bf16 %v273, %v272
      %v297 = vld [vmem:[%s1] sm:$0x3]
      %vm346 = vcmask 1046528
      %v347 = vrot.slane %v227, 1
      %v348 = vrot.slane %v228, 1
      %v349 = vsel %vm346, %v347, %v348
      %v350 = vrot.slane %v229, 1
      %v351 = vsel %vm346, %v348, %v350
      %v352 = vrot.slane %v230, 1
      %v353 = vrot.slane %v231, 1
      %v354 = vsel %vm346, %v352, %v353
      %v355 = vrot.slane %v232, 1
      %v356 = vsel %vm346, %v353, %v355
      %v357 = vrot.slane %v233, 1
      %v358 = vrot.slane %v234, 1
      %v359 = vsel %vm346, %v357, %v358
      %v360 = vrot.slane %v235, 1
      %v361 = vsel %vm346, %v358, %v360
      %v362 = vrot.slane %v236, 1
      %v363 = vrot.slane %v237, 1
      %v364 = vsel %vm346, %v362, %v363
      %v365 = vrot.slane %v238, 1
      %v366 = vsel %vm346, %v363, %v365
      %v367 = vrot.slane %v239, 1
      %v368 = vrot.slane %v240, 1
      %v369 = vsel %vm346, %v367, %v368
      %v370 = vrot.slane %v241, 1
      %v371 = vsel %vm346, %v368, %v370
      %v372 = vrot.slane %v242, 1
      %v373 = vrot.slane %v243, 1
      %v374 = vsel %vm346, %v372, %v373
      %v375 = vrot.slane %v244, 1
      %v376 = vsel %vm346, %v373, %v375
      %v377 = vrot.slane %v245, 1
      %v378 = vrot.slane %v246, 1
      %v379 = vsel %vm346, %v377, %v378
      %v380 = vrot.slane %v247, 1
      %v381 = vsel %vm346, %v378, %v380
      %v382 = vrot.slane %v248, 1
      %v383 = vrot.slane %v249, 1
      %v384 = vsel %vm346, %v382, %v383
      %v385 = vrot.slane %v250, 1
      %v386 = vsel %vm346, %v383, %v385
      %v387 = vrot.slane %v251, 1
      %v388 = vrot.slane %v252, 1
      %v389 = vsel %vm346, %v387, %v388
      %v390 = vrot.slane %v253, 1
      %v391 = vsel %vm346, %v388, %v390
      %v392 = vrot.slane %v254, 1
      %v393 = vrot.slane %v255, 1
      %v394 = vsel %vm346, %v392, %v393
      %v395 = vrot.slane %v256, 1
      %v396 = vsel %vm346, %v393, %v395
      %v397 = vrot.slane %v257, 1
      %v398 = vrot.slane %v258, 1
      %v399 = vsel %vm346, %v397, %v398
      %v400 = vrot.slane %v259, 1
      %v401 = vsel %vm346, %v398, %v400
      %v402 = vrot.slane %v260, 1
      %v403 = vrot.slane %v261, 1
      %v404 = vsel %vm346, %v402, %v403
      %v405 = vrot.slane %v262, 1
      %v406 = vsel %vm346, %v403, %v405
      %v407 = vrot.slane %v263, 1
      %v408 = vrot.slane %v264, 1
      %v409 = vsel %vm346, %v407, %v408
      %v410 = vrot.slane %v265, 1
      %v411 = vsel %vm346, %v408, %v410
      %v412 = vrot.slane %v266, 1
      %v413 = vrot.slane %v267, 1
      %v414 = vsel %vm346, %v412, %v413
      %v415 = vrot.slane %v268, 1
      %v416 = vsel %vm346, %v413, %v415
      %v417 = vrot.slane %v269, 1
      %v418 = vrot.slane %v270, 1
      %v419 = vsel %vm346, %v417, %v418
      %v420 = vrot.slane %v271, 1
      %v421 = vsel %vm346, %v418, %v420
      %v422 = vrot.slane %v272, 1
      %v423 = vrot.slane %v273, 1
      %v424 = vsel %vm346, %v422, %v423
      %v425 = vrot.slane %v274, 1
      %v426 = vsel %vm346, %v423, %v425
      %v459 = vpack.c.bf16 %v351, %v349
      %v460 = vpack.c.bf16 %v356, %v354
      %v461 = vpack.c.bf16 %v361, %v359
      %v462 = vpack.c.bf16 %v366, %v364
      %v463 = vpack.c.bf16 %v371, %v369
      %v464 = vpack.c.bf16 %v376, %v374
      %v465 = vpack.c.bf16 %v381, %v379
      %v466 = vpack.c.bf16 %v386, %v384
      %v467 = vpack.c.bf16 %v391, %v389
      %v468 = vpack.c.bf16 %v396, %v394
      %v469 = vpack.c.bf16 %v401, %v399
      %v470 = vpack.c.bf16 %v406, %v404
      %v471 = vpack.c.bf16 %v411, %v409
      %v472 = vpack.c.bf16 %v416, %v414
      %v473 = vpack.c.bf16 %v421, %v419
      %v474 = vpack.c.bf16 %v426, %v424
      %s475 = scalar_lea.vmem %s1, 2
      %v476 = vld [vmem:[%s475] sm:$0x3]
      %vm477 = vcmask 31744
      %v479 = vsel %vm477, %v459, 0
      %v482 = vsel %vm477, %v460, 0
      %v485 = vsel %vm477, %v461, 0
      %v488 = vsel %vm477, %v462, 0
      %v491 = vsel %vm477, %v463, 0
      %v494 = vsel %vm477, %v464, 0
      %v497 = vsel %vm477, %v465, 0
      %v500 = vsel %vm477, %v466, 0
      %v503 = vsel %vm477, %v467, 0
      %v506 = vsel %vm477, %v468, 0
      %v509 = vsel %vm477, %v469, 0
      %v512 = vsel %vm477, %v470, 0
      %v515 = vsel %vm477, %v471, 0
      %v518 = vsel %vm477, %v472, 0
      %v521 = vsel %vm477, %v473, 0
      %v524 = vsel %vm477, %v474, 0
      %vm526 = vcmask 1041408
      %v528 = vsel %vm526, %v476, 0
      %530 = vmatprep.subr.bf16.mxu0 0
      %531 = vmatpush1.bf16.msra.mxu0 0
      %532 = vmatprep.subr.bf16.mxu0 0
      %533 = vmatpush1.bf16.msra.mxu0 0
      %534 = vmatprep.subr.bf16.mxu0 0
      %535 = vmatpush1.bf16.msra.mxu0 0
      %536 = vmatprep.subr.bf16.mxu0 0
      %537 = vmatpush1.bf16.msra.mxu0 0
      %538 = vmatprep.subr.bf16.mxu0 0
      %539 = vmatpush1.bf16.msra.mxu0 0
      %540 = vmatprep.subr.bf16.mxu0 0
      %541 = vmatpush1.bf16.msra.mxu0 0
      %542 = vmatprep.subr.bf16.mxu0 0
      %543 = vmatpush1.bf16.msra.mxu0 0
      %544 = vmatprep.subr.bf16.mxu0 0
      %545 = vmatpush1.bf16.msra.mxu0 %v528
      %546 = vmatprep.subr.bf16.mxu0 0
      %547 = vmatpush2.bf16.msra.mxu0 0
      %548 = vmatprep.subr.bf16.mxu0 0
      %549 = vmatpush2.bf16.msra.mxu0 0
      %550 = vmatprep.subr.bf16.mxu0 0
      %551 = vmatpush2.bf16.msra.mxu0 0
      %552 = vmatprep.subr.bf16.mxu0 0
      %553 = vmatpush2.bf16.msra.mxu0 0
      %554 = vmatprep.subr.bf16.mxu0 0
      %555 = vmatpush2.bf16.msra.mxu0 0
      %556 = vmatprep.subr.bf16.mxu0 0
      %557 = vmatpush2.bf16.msra.mxu0 0
      %558 = vmatprep.subr.bf16.mxu0 0
      %559 = vmatpush2.bf16.msra.mxu0 0
      %560 = vmatprep.subr.bf16.mxu0 0
      %561 = vmatpush2.bf16.msra.mxu0 0
      %562 = vmatprep.mubr.bf16.mxu0 0
      %563 = vmatmul.mubr.bf16.gmra.mxu0 %v479
      %v564 = vpop.f32.mrf.mxu0
      %v565 = vadd.f32 0.0, %v564
      %v566 = vpop.f32.mrf.mxu0
      %v567 = vpop.f32.mrf.mxu0
      %v568 = vadd.f32 0.0, %v567
      %v569 = vpop.f32.mrf.mxu0
      %570 = vmatprep.mubr.bf16.mxu0 0
      %571 = vmatmul.mubr.bf16.gmra.mxu0 %v482
      %v572 = vpop.f32.mrf.mxu0
      %v573 = vadd.f32 0.0, %v572
      %v574 = vpop.f32.mrf.mxu0
      %v575 = vpop.f32.mrf.mxu0
      %v576 = vadd.f32 0.0, %v575
      %v577 = vpop.f32.mrf.mxu0
      %578 = vmatprep.mubr.bf16.mxu0 0
      %579 = vmatmul.mubr.bf16.gmra.mxu0 %v485
      %v580 = vpop.f32.mrf.mxu0
      %v581 = vadd.f32 0.0, %v580
      %v582 = vpop.f32.mrf.mxu0
      %v583 = vpop.f32.mrf.mxu0
      %v584 = vadd.f32 0.0, %v583
      %v585 = vpop.f32.mrf.mxu0
      %586 = vmatprep.mubr.bf16.mxu0 0
      %587 = vmatmul.mubr.bf16.gmra.mxu0 %v488
      %v588 = vpop.f32.mrf.mxu0
      %v589 = vadd.f32 0.0, %v588
      %v590 = vpop.f32.mrf.mxu0
      %v591 = vpop.f32.mrf.mxu0
      %v592 = vadd.f32 0.0, %v591
      %v593 = vpop.f32.mrf.mxu0
      %594 = vmatprep.mubr.bf16.mxu0 0
      %595 = vmatmul.mubr.bf16.gmra.mxu0 %v491
      %v596 = vpop.f32.mrf.mxu0
      %v597 = vadd.f32 0.0, %v596
      %v598 = vpop.f32.mrf.mxu0
      %v599 = vpop.f32.mrf.mxu0
      %v600 = vadd.f32 0.0, %v599
      %v601 = vpop.f32.mrf.mxu0
      %602 = vmatprep.mubr.bf16.mxu0 0
      %603 = vmatmul.mubr.bf16.gmra.mxu0 %v494
      %v604 = vpop.f32.mrf.mxu0
      %v605 = vadd.f32 0.0, %v604
      %v606 = vpop.f32.mrf.mxu0
      %v607 = vpop.f32.mrf.mxu0
      %v608 = vadd.f32 0.0, %v607
      %v609 = vpop.f32.mrf.mxu0
      %610 = vmatprep.mubr.bf16.mxu0 0
      %611 = vmatmul.mubr.bf16.gmra.mxu0 %v497
      %v612 = vpop.f32.mrf.mxu0
      %v613 = vadd.f32 0.0, %v612
      %v614 = vpop.f32.mrf.mxu0
      %v615 = vpop.f32.mrf.mxu0
      %v616 = vadd.f32 0.0, %v615
      %v617 = vpop.f32.mrf.mxu0
      %618 = vmatprep.mubr.bf16.mxu0 0
      %619 = vmatmul.mubr.bf16.gmra.mxu0 %v500
      %v620 = vpop.f32.mrf.mxu0
      %v621 = vadd.f32 0.0, %v620
      %v622 = vpop.f32.mrf.mxu0
      %v623 = vpop.f32.mrf.mxu0
      %v624 = vadd.f32 0.0, %v623
      %v625 = vpop.f32.mrf.mxu0
      %626 = vmatprep.mubr.bf16.mxu0 0
      %627 = vmatmul.mubr.bf16.gmra.mxu0 %v503
      %v628 = vpop.f32.mrf.mxu0
      %v629 = vadd.f32 0.0, %v628
      %v630 = vpop.f32.mrf.mxu0
      %v631 = vpop.f32.mrf.mxu0
      %v632 = vadd.f32 0.0, %v631
      %v633 = vpop.f32.mrf.mxu0
      %634 = vmatprep.mubr.bf16.mxu0 0
      %635 = vmatmul.mubr.bf16.gmra.mxu0 %v506
      %v636 = vpop.f32.mrf.mxu0
      %v637 = vadd.f32 0.0, %v636
      %v638 = vpop.f32.mrf.mxu0
      %v639 = vpop.f32.mrf.mxu0
      %v640 = vadd.f32 0.0, %v639
      %v641 = vpop.f32.mrf.mxu0
      %642 = vmatprep.mubr.bf16.mxu0 0
      %643 = vmatmul.mubr.bf16.gmra.mxu0 %v509
      %v644 = vpop.f32.mrf.mxu0
      %v645 = vadd.f32 0.0, %v644
      %v646 = vpop.f32.mrf.mxu0
      %v647 = vpop.f32.mrf.mxu0
      %v648 = vadd.f32 0.0, %v647
      %v649 = vpop.f32.mrf.mxu0
      %650 = vmatprep.mubr.bf16.mxu0 0
      %651 = vmatmul.mubr.bf16.gmra.mxu0 %v512
      %v652 = vpop.f32.mrf.mxu0
      %v653 = vadd.f32 0.0, %v652
      %v654 = vpop.f32.mrf.mxu0
      %v655 = vpop.f32.mrf.mxu0
      %v656 = vadd.f32 0.0, %v655
      %v657 = vpop.f32.mrf.mxu0
      %658 = vmatprep.mubr.bf16.mxu0 0
      %659 = vmatmul.mubr.bf16.gmra.mxu0 %v515
      %v660 = vpop.f32.mrf.mxu0
      %v661 = vadd.f32 0.0, %v660
      %v662 = vpop.f32.mrf.mxu0
      %v663 = vpop.f32.mrf.mxu0
      %v664 = vadd.f32 0.0, %v663
      %v665 = vpop.f32.mrf.mxu0
      %666 = vmatprep.mubr.bf16.mxu0 0
      %667 = vmatmul.mubr.bf16.gmra.mxu0 %v518
      %v668 = vpop.f32.mrf.mxu0
      %v669 = vadd.f32 0.0, %v668
      %v670 = vpop.f32.mrf.mxu0
      %v671 = vpop.f32.mrf.mxu0
      %v672 = vadd.f32 0.0, %v671
      %v673 = vpop.f32.mrf.mxu0
      %674 = vmatprep.mubr.bf16.mxu0 0
      %675 = vmatmul.mubr.bf16.gmra.mxu0 %v521
      %v676 = vpop.f32.mrf.mxu0
      %v677 = vadd.f32 0.0, %v676
      %v678 = vpop.f32.mrf.mxu0
      %v679 = vpop.f32.mrf.mxu0
      %v680 = vadd.f32 0.0, %v679
      %v681 = vpop.f32.mrf.mxu0
      %682 = vmatprep.mubr.bf16.mxu0 0
      %683 = vmatmul.mubr.bf16.gmra.mxu0 %v524
      %v684 = vpop.f32.mrf.mxu0
      %v685 = vadd.f32 0.0, %v684
      %v686 = vpop.f32.mrf.mxu0
      %v687 = vpop.f32.mrf.mxu0
      %v688 = vadd.f32 0.0, %v687
      %v689 = vpop.f32.mrf.mxu0
      %690 = vdwg.mxu0
      %v692 = vsel %vm477, %v281, 0
      %v695 = vsel %vm477, %v282, 0
      %v698 = vsel %vm477, %v283, 0
      %v701 = vsel %vm477, %v284, 0
      %v704 = vsel %vm477, %v285, 0
      %v707 = vsel %vm477, %v286, 0
      %v710 = vsel %vm477, %v287, 0
      %v713 = vsel %vm477, %v288, 0
      %v716 = vsel %vm477, %v289, 0
      %v719 = vsel %vm477, %v290, 0
      %v722 = vsel %vm477, %v291, 0
      %v725 = vsel %vm477, %v292, 0
      %v728 = vsel %vm477, %v293, 0
      %v731 = vsel %vm477, %v294, 0
      %v734 = vsel %vm477, %v295, 0
      %v737 = vsel %vm477, %v296, 0
      %v740 = vsel %vm526, %v297, 0
      %742 = vmatprep.subr.bf16.mxu0 0
      %743 = vmatpush1.bf16.msra.mxu0 0
      %744 = vmatprep.subr.bf16.mxu0 0
      %745 = vmatpush1.bf16.msra.mxu0 0
      %746 = vmatprep.subr.bf16.mxu0 0
      %747 = vmatpush1.bf16.msra.mxu0 0
      %748 = vmatprep.subr.bf16.mxu0 0
      %749 = vmatpush1.bf16.msra.mxu0 0
      %750 = vmatprep.subr.bf16.mxu0 0
      %751 = vmatpush1.bf16.msra.mxu0 0
      %752 = vmatprep.subr.bf16.mxu0 0
      %753 = vmatpush1.bf16.msra.mxu0 0
      %754 = vmatprep.subr.bf16.mxu0 0
      %755 = vmatpush1.bf16.msra.mxu0 0
      %756 = vmatprep.subr.bf16.mxu0 0
      %757 = vmatpush1.bf16.msra.mxu0 %v740
      %758 = vmatprep.subr.bf16.mxu0 0
      %759 = vmatpush2.bf16.msra.mxu0 0
      %760 = vmatprep.subr.bf16.mxu0 0
      %761 = vmatpush2.bf16.msra.mxu0 0
      %762 = vmatprep.subr.bf16.mxu0 0
      %763 = vmatpush2.bf16.msra.mxu0 0
      %764 = vmatprep.subr.bf16.mxu0 0
      %765 = vmatpush2.bf16.msra.mxu0 0
      %766 = vmatprep.subr.bf16.mxu0 0
      %767 = vmatpush2.bf16.msra.mxu0 0
      %768 = vmatprep.subr.bf16.mxu0 0
      %769 = vmatpush2.bf16.msra.mxu0 0
      %770 = vmatprep.subr.bf16.mxu0 0
      %771 = vmatpush2.bf16.msra.mxu0 0
      %772 = vmatprep.subr.bf16.mxu0 0
      %773 = vmatpush2.bf16.msra.mxu0 0
      %774 = vmatprep.mubr.bf16.mxu0 0
      %775 = vmatmul.mubr.bf16.gmra.mxu0 %v692
      %v776 = vpop.f32.mrf.mxu0
      %v777 = vadd.f32 %v565, %v776
      %v778 = vpop.f32.mrf.mxu0
      %v779 = vpop.f32.mrf.mxu0
      %v780 = vadd.f32 %v568, %v779
      %v781 = vpop.f32.mrf.mxu0
      %782 = vmatprep.mubr.bf16.mxu0 0
      %783 = vmatmul.mubr.bf16.gmra.mxu0 %v695
      %v784 = vpop.f32.mrf.mxu0
      %v785 = vadd.f32 %v573, %v784
      %v786 = vpop.f32.mrf.mxu0
      %v787 = vpop.f32.mrf.mxu0
      %v788 = vadd.f32 %v576, %v787
      %v789 = vpop.f32.mrf.mxu0
      %790 = vmatprep.mubr.bf16.mxu0 0
      %791 = vmatmul.mubr.bf16.gmra.mxu0 %v698
      %v792 = vpop.f32.mrf.mxu0
      %v793 = vadd.f32 %v581, %v792
      %v794 = vpop.f32.mrf.mxu0
      %v795 = vpop.f32.mrf.mxu0
      %v796 = vadd.f32 %v584, %v795
      %v797 = vpop.f32.mrf.mxu0
      %798 = vmatprep.mubr.bf16.mxu0 0
      %799 = vmatmul.mubr.bf16.gmra.mxu0 %v701
      %v800 = vpop.f32.mrf.mxu0
      %v801 = vadd.f32 %v589, %v800
      %v802 = vpop.f32.mrf.mxu0
      %v803 = vpop.f32.mrf.mxu0
      %v804 = vadd.f32 %v592, %v803
      %v805 = vpop.f32.mrf.mxu0
      %806 = vmatprep.mubr.bf16.mxu0 0
      %807 = vmatmul.mubr.bf16.gmra.mxu0 %v704
      %v808 = vpop.f32.mrf.mxu0
      %v809 = vadd.f32 %v597, %v808
      %v810 = vpop.f32.mrf.mxu0
      %v811 = vpop.f32.mrf.mxu0
      %v812 = vadd.f32 %v600, %v811
      %v813 = vpop.f32.mrf.mxu0
      %814 = vmatprep.mubr.bf16.mxu0 0
      %815 = vmatmul.mubr.bf16.gmra.mxu0 %v707
      %v816 = vpop.f32.mrf.mxu0
      %v817 = vadd.f32 %v605, %v816
      %v818 = vpop.f32.mrf.mxu0
      %v819 = vpop.f32.mrf.mxu0
      %v820 = vadd.f32 %v608, %v819
      %v821 = vpop.f32.mrf.mxu0
      %822 = vmatprep.mubr.bf16.mxu0 0
      %823 = vmatmul.mubr.bf16.gmra.mxu0 %v710
      %v824 = vpop.f32.mrf.mxu0
      %v825 = vadd.f32 %v613, %v824
      %v826 = vpop.f32.mrf.mxu0
      %v827 = vpop.f32.mrf.mxu0
      %v828 = vadd.f32 %v616, %v827
      %v829 = vpop.f32.mrf.mxu0
      %830 = vmatprep.mubr.bf16.mxu0 0
      %831 = vmatmul.mubr.bf16.gmra.mxu0 %v713
      %v832 = vpop.f32.mrf.mxu0
      %v833 = vadd.f32 %v621, %v832
      %v834 = vpop.f32.mrf.mxu0
      %v835 = vpop.f32.mrf.mxu0
      %v836 = vadd.f32 %v624, %v835
      %v837 = vpop.f32.mrf.mxu0
      %838 = vmatprep.mubr.bf16.mxu0 0
      %839 = vmatmul.mubr.bf16.gmra.mxu0 %v716
      %v840 = vpop.f32.mrf.mxu0
      %v841 = vadd.f32 %v629, %v840
      %v842 = vpop.f32.mrf.mxu0
      %v843 = vpop.f32.mrf.mxu0
      %v844 = vadd.f32 %v632, %v843
      %v845 = vpop.f32.mrf.mxu0
      %846 = vmatprep.mubr.bf16.mxu0 0
      %847 = vmatmul.mubr.bf16.gmra.mxu0 %v719
      %v848 = vpop.f32.mrf.mxu0
      %v849 = vadd.f32 %v637, %v848
      %v850 = vpop.f32.mrf.mxu0
      %v851 = vpop.f32.mrf.mxu0
      %v852 = vadd.f32 %v640, %v851
      %v853 = vpop.f32.mrf.mxu0
      %854 = vmatprep.mubr.bf16.mxu0 0
      %855 = vmatmul.mubr.bf16.gmra.mxu0 %v722
      %v856 = vpop.f32.mrf.mxu0
      %v857 = vadd.f32 %v645, %v856
      %v858 = vpop.f32.mrf.mxu0
      %v859 = vpop.f32.mrf.mxu0
      %v860 = vadd.f32 %v648, %v859
      %v861 = vpop.f32.mrf.mxu0
      %862 = vmatprep.mubr.bf16.mxu0 0
      %863 = vmatmul.mubr.bf16.gmra.mxu0 %v725
      %v864 = vpop.f32.mrf.mxu0
      %v865 = vadd.f32 %v653, %v864
      %v866 = vpop.f32.mrf.mxu0
      %v867 = vpop.f32.mrf.mxu0
      %v868 = vadd.f32 %v656, %v867
      %v869 = vpop.f32.mrf.mxu0
      %870 = vmatprep.mubr.bf16.mxu0 0
      %871 = vmatmul.mubr.bf16.gmra.mxu0 %v728
      %v872 = vpop.f32.mrf.mxu0
      %v873 = vadd.f32 %v661, %v872
      %v874 = vpop.f32.mrf.mxu0
      %v875 = vpop.f32.mrf.mxu0
      %v876 = vadd.f32 %v664, %v875
      %v877 = vpop.f32.mrf.mxu0
      %878 = vmatprep.mubr.bf16.mxu0 0
      %879 = vmatmul.mubr.bf16.gmra.mxu0 %v731
      %v880 = vpop.f32.mrf.mxu0
      %v881 = vadd.f32 %v669, %v880
      %v882 = vpop.f32.mrf.mxu0
      %v883 = vpop.f32.mrf.mxu0
      %v884 = vadd.f32 %v672, %v883
      %v885 = vpop.f32.mrf.mxu0
      %886 = vmatprep.mubr.bf16.mxu0 0
      %887 = vmatmul.mubr.bf16.gmra.mxu0 %v734
      %v888 = vpop.f32.mrf.mxu0
      %v889 = vadd.f32 %v677, %v888
      %v890 = vpop.f32.mrf.mxu0
      %v891 = vpop.f32.mrf.mxu0
      %v892 = vadd.f32 %v680, %v891
      %v893 = vpop.f32.mrf.mxu0
      %894 = vmatprep.mubr.bf16.mxu0 0
      %895 = vmatmul.mubr.bf16.gmra.mxu0 %v737
      %v896 = vpop.f32.mrf.mxu0
      %v897 = vadd.f32 %v685, %v896
      %v898 = vpop.f32.mrf.mxu0
      %v899 = vpop.f32.mrf.mxu0
      %v900 = vadd.f32 %v688, %v899
      %v901 = vpop.f32.mrf.mxu0
      %902 = vdwg.mxu0
      %vm903 = vcmask 1045504
      %v904 = vrot.slane %v227, 2
      %v905 = vrot.slane %v228, 2
      %v906 = vsel %vm903, %v904, %v905
      %v907 = vrot.slane %v229, 2
      %v908 = vsel %vm903, %v905, %v907
      %v909 = vrot.slane %v230, 2
      %v910 = vrot.slane %v231, 2
      %v911 = vsel %vm903, %v909, %v910
      %v912 = vrot.slane %v232, 2
      %v913 = vsel %vm903, %v910, %v912
      %v914 = vrot.slane %v233, 2
      %v915 = vrot.slane %v234, 2
      %v916 = vsel %vm903, %v914, %v915
      %v917 = vrot.slane %v235, 2
      %v918 = vsel %vm903, %v915, %v917
      %v919 = vrot.slane %v236, 2
      %v920 = vrot.slane %v237, 2
      %v921 = vsel %vm903, %v919, %v920
      %v922 = vrot.slane %v238, 2
      %v923 = vsel %vm903, %v920, %v922
      %v924 = vrot.slane %v239, 2
      %v925 = vrot.slane %v240, 2
      %v926 = vsel %vm903, %v924, %v925
      %v927 = vrot.slane %v241, 2
      %v928 = vsel %vm903, %v925, %v927
      %v929 = vrot.slane %v242, 2
      %v930 = vrot.slane %v243, 2
      %v931 = vsel %vm903, %v929, %v930
      %v932 = vrot.slane %v244, 2
      %v933 = vsel %vm903, %v930, %v932
      %v934 = vrot.slane %v245, 2
      %v935 = vrot.slane %v246, 2
      %v936 = vsel %vm903, %v934, %v935
      %v937 = vrot.slane %v247, 2
      %v938 = vsel %vm903, %v935, %v937
      %v939 = vrot.slane %v248, 2
      %v940 = vrot.slane %v249, 2
      %v941 = vsel %vm903, %v939, %v940
      %v942 = vrot.slane %v250, 2
      %v943 = vsel %vm903, %v940, %v942
      %v944 = vrot.slane %v251, 2
      %v945 = vrot.slane %v252, 2
      %v946 = vsel %vm903, %v944, %v945
      %v947 = vrot.slane %v253, 2
      %v948 = vsel %vm903, %v945, %v947
      %v949 = vrot.slane %v254, 2
      %v950 = vrot.slane %v255, 2
      %v951 = vsel %vm903, %v949, %v950
      %v952 = vrot.slane %v256, 2
      %v953 = vsel %vm903, %v950, %v952
      %v954 = vrot.slane %v257, 2
      %v955 = vrot.slane %v258, 2
      %v956 = vsel %vm903, %v954, %v955
      %v957 = vrot.slane %v259, 2
      %v958 = vsel %vm903, %v955, %v957
      %v959 = vrot.slane %v260, 2
      %v960 = vrot.slane %v261, 2
      %v961 = vsel %vm903, %v959, %v960
      %v962 = vrot.slane %v262, 2
      %v963 = vsel %vm903, %v960, %v962
      %v964 = vrot.slane %v263, 2
      %v965 = vrot.slane %v264, 2
      %v966 = vsel %vm903, %v964, %v965
      %v967 = vrot.slane %v265, 2
      %v968 = vsel %vm903, %v965, %v967
      %v969 = vrot.slane %v266, 2
      %v970 = vrot.slane %v267, 2
      %v971 = vsel %vm903, %v969, %v970
      %v972 = vrot.slane %v268, 2
      %v973 = vsel %vm903, %v970, %v972
      %v974 = vrot.slane %v269, 2
      %v975 = vrot.slane %v270, 2
      %v976 = vsel %vm903, %v974, %v975
      %v977 = vrot.slane %v271, 2
      %v978 = vsel %vm903, %v975, %v977
      %v979 = vrot.slane %v272, 2
      %v980 = vrot.slane %v273, 2
      %v981 = vsel %vm903, %v979, %v980
      %v982 = vrot.slane %v274, 2
      %v983 = vsel %vm903, %v980, %v982
      %v1016 = vpack.c.bf16 %v908, %v906
      %v1017 = vpack.c.bf16 %v913, %v911
      %v1018 = vpack.c.bf16 %v918, %v916
      %v1019 = vpack.c.bf16 %v923, %v921
      %v1020 = vpack.c.bf16 %v928, %v926
      %v1021 = vpack.c.bf16 %v933, %v931
      %v1022 = vpack.c.bf16 %v938, %v936
      %v1023 = vpack.c.bf16 %v943, %v941
      %v1024 = vpack.c.bf16 %v948, %v946
      %v1025 = vpack.c.bf16 %v953, %v951
      %v1026 = vpack.c.bf16 %v958, %v956
      %v1027 = vpack.c.bf16 %v963, %v961
      %v1028 = vpack.c.bf16 %v968, %v966
      %v1029 = vpack.c.bf16 %v973, %v971
      %v1030 = vpack.c.bf16 %v978, %v976
      %v1031 = vpack.c.bf16 %v983, %v981
      %s1032 = scalar_lea.vmem %s1, 4
      %v1033 = vld [vmem:[%s1032] sm:$0x3]
      %v1035 = vsel %vm477, %v1016, 0
      %v1038 = vsel %vm477, %v1017, 0
      %v1041 = vsel %vm477, %v1018, 0
      %v1044 = vsel %vm477, %v1019, 0
      %v1047 = vsel %vm477, %v1020, 0
      %v1050 = vsel %vm477, %v1021, 0
      %v1053 = vsel %vm477, %v1022, 0
      %v1056 = vsel %vm477, %v1023, 0
      %v1059 = vsel %vm477, %v1024, 0
      %v1062 = vsel %vm477, %v1025, 0
      %v1065 = vsel %vm477, %v1026, 0
      %v1068 = vsel %vm477, %v1027, 0
      %v1071 = vsel %vm477, %v1028, 0
      %v1074 = vsel %vm477, %v1029, 0
      %v1077 = vsel %vm477, %v1030, 0
      %v1080 = vsel %vm477, %v1031, 0
      %v1083 = vsel %vm526, %v1033, 0
      %1085 = vmatprep.subr.bf16.mxu0 0
      %1086 = vmatpush1.bf16.msra.mxu0 0
      %1087 = vmatprep.subr.bf16.mxu0 0
      %1088 = vmatpush1.bf16.msra.mxu0 0
      %1089 = vmatprep.subr.bf16.mxu0 0
      %1090 = vmatpush1.bf16.msra.mxu0 0
      %1091 = vmatprep.subr.bf16.mxu0 0
      %1092 = vmatpush1.bf16.msra.mxu0 0
      %1093 = vmatprep.subr.bf16.mxu0 0
      %1094 = vmatpush1.bf16.msra.mxu0 0
      %1095 = vmatprep.subr.bf16.mxu0 0
      %1096 = vmatpush1.bf16.msra.mxu0 0
      %1097 = vmatprep.subr.bf16.mxu0 0
      %1098 = vmatpush1.bf16.msra.mxu0 0
      %1099 = vmatprep.subr.bf16.mxu0 0
      %1100 = vmatpush1.bf16.msra.mxu0 %v1083
      %1101 = vmatprep.subr.bf16.mxu0 0
      %1102 = vmatpush2.bf16.msra.mxu0 0
      %1103 = vmatprep.subr.bf16.mxu0 0
      %1104 = vmatpush2.bf16.msra.mxu0 0
      %1105 = vmatprep.subr.bf16.mxu0 0
      %1106 = vmatpush2.bf16.msra.mxu0 0
      %1107 = vmatprep.subr.bf16.mxu0 0
      %1108 = vmatpush2.bf16.msra.mxu0 0
      %1109 = vmatprep.subr.bf16.mxu0 0
      %1110 = vmatpush2.bf16.msra.mxu0 0
      %1111 = vmatprep.subr.bf16.mxu0 0
      %1112 = vmatpush2.bf16.msra.mxu0 0
      %1113 = vmatprep.subr.bf16.mxu0 0
      %1114 = vmatpush2.bf16.msra.mxu0 0
      %1115 = vmatprep.subr.bf16.mxu0 0
      %1116 = vmatpush2.bf16.msra.mxu0 0
      %1117 = vmatprep.mubr.bf16.mxu0 0
      %1118 = vmatmul.mubr.bf16.gmra.mxu0 %v1035
      %v1119 = vpop.f32.mrf.mxu0
      %v1120 = vadd.f32 0.0, %v1119
      %v1121 = vpop.f32.mrf.mxu0
      %v1122 = vpop.f32.mrf.mxu0
      %v1123 = vadd.f32 0.0, %v1122
      %v1124 = vpop.f32.mrf.mxu0
      %1125 = vmatprep.mubr.bf16.mxu0 0
      %1126 = vmatmul.mubr.bf16.gmra.mxu0 %v1038
      %v1127 = vpop.f32.mrf.mxu0
      %v1128 = vadd.f32 0.0, %v1127
      %v1129 = vpop.f32.mrf.mxu0
      %v1130 = vpop.f32.mrf.mxu0
      %v1131 = vadd.f32 0.0, %v1130
      %v1132 = vpop.f32.mrf.mxu0
      %1133 = vmatprep.mubr.bf16.mxu0 0
      %1134 = vmatmul.mubr.bf16.gmra.mxu0 %v1041
      %v1135 = vpop.f32.mrf.mxu0
      %v1136 = vadd.f32 0.0, %v1135
      %v1137 = vpop.f32.mrf.mxu0
      %v1138 = vpop.f32.mrf.mxu0
      %v1139 = vadd.f32 0.0, %v1138
      %v1140 = vpop.f32.mrf.mxu0
      %1141 = vmatprep.mubr.bf16.mxu0 0
      %1142 = vmatmul.mubr.bf16.gmra.mxu0 %v1044
      %v1143 = vpop.f32.mrf.mxu0
      %v1144 = vadd.f32 0.0, %v1143
      %v1145 = vpop.f32.mrf.mxu0
      %v1146 = vpop.f32.mrf.mxu0
      %v1147 = vadd.f32 0.0, %v1146
      %v1148 = vpop.f32.mrf.mxu0
      %1149 = vmatprep.mubr.bf16.mxu0 0
      %1150 = vmatmul.mubr.bf16.gmra.mxu0 %v1047
      %v1151 = vpop.f32.mrf.mxu0
      %v1152 = vadd.f32 0.0, %v1151
      %v1153 = vpop.f32.mrf.mxu0
      %v1154 = vpop.f32.mrf.mxu0
      %v1155 = vadd.f32 0.0, %v1154
      %v1156 = vpop.f32.mrf.mxu0
      %1157 = vmatprep.mubr.bf16.mxu0 0
      %1158 = vmatmul.mubr.bf16.gmra.mxu0 %v1050
      %v1159 = vpop.f32.mrf.mxu0
      %v1160 = vadd.f32 0.0, %v1159
      %v1161 = vpop.f32.mrf.mxu0
      %v1162 = vpop.f32.mrf.mxu0
      %v1163 = vadd.f32 0.0, %v1162
      %v1164 = vpop.f32.mrf.mxu0
      %1165 = vmatprep.mubr.bf16.mxu0 0
      %1166 = vmatmul.mubr.bf16.gmra.mxu0 %v1053
      %v1167 = vpop.f32.mrf.mxu0
      %v1168 = vadd.f32 0.0, %v1167
      %v1169 = vpop.f32.mrf.mxu0
      %v1170 = vpop.f32.mrf.mxu0
      %v1171 = vadd.f32 0.0, %v1170
      %v1172 = vpop.f32.mrf.mxu0
      %1173 = vmatprep.mubr.bf16.mxu0 0
      %1174 = vmatmul.mubr.bf16.gmra.mxu0 %v1056
      %v1175 = vpop.f32.mrf.mxu0
      %v1176 = vadd.f32 0.0, %v1175
      %v1177 = vpop.f32.mrf.mxu0
      %v1178 = vpop.f32.mrf.mxu0
      %v1179 = vadd.f32 0.0, %v1178
      %v1180 = vpop.f32.mrf.mxu0
      %1181 = vmatprep.mubr.bf16.mxu0 0
      %1182 = vmatmul.mubr.bf16.gmra.mxu0 %v1059
      %v1183 = vpop.f32.mrf.mxu0
      %v1184 = vadd.f32 0.0, %v1183
      %v1185 = vpop.f32.mrf.mxu0
      %v1186 = vpop.f32.mrf.mxu0
      %v1187 = vadd.f32 0.0, %v1186
      %v1188 = vpop.f32.mrf.mxu0
      %1189 = vmatprep.mubr.bf16.mxu0 0
      %1190 = vmatmul.mubr.bf16.gmra.mxu0 %v1062
      %v1191 = vpop.f32.mrf.mxu0
      %v1192 = vadd.f32 0.0, %v1191
      %v1193 = vpop.f32.mrf.mxu0
      %v1194 = vpop.f32.mrf.mxu0
      %v1195 = vadd.f32 0.0, %v1194
      %v1196 = vpop.f32.mrf.mxu0
      %1197 = vmatprep.mubr.bf16.mxu0 0
      %1198 = vmatmul.mubr.bf16.gmra.mxu0 %v1065
      %v1199 = vpop.f32.mrf.mxu0
      %v1200 = vadd.f32 0.0, %v1199
      %v1201 = vpop.f32.mrf.mxu0
      %v1202 = vpop.f32.mrf.mxu0
      %v1203 = vadd.f32 0.0, %v1202
      %v1204 = vpop.f32.mrf.mxu0
      %1205 = vmatprep.mubr.bf16.mxu0 0
      %1206 = vmatmul.mubr.bf16.gmra.mxu0 %v1068
      %v1207 = vpop.f32.mrf.mxu0
      %v1208 = vadd.f32 0.0, %v1207
      %v1209 = vpop.f32.mrf.mxu0
      %v1210 = vpop.f32.mrf.mxu0
      %v1211 = vadd.f32 0.0, %v1210
      %v1212 = vpop.f32.mrf.mxu0
      %1213 = vmatprep.mubr.bf16.mxu0 0
      %1214 = vmatmul.mubr.bf16.gmra.mxu0 %v1071
      %v1215 = vpop.f32.mrf.mxu0
      %v1216 = vadd.f32 0.0, %v1215
      %v1217 = vpop.f32.mrf.mxu0
      %v1218 = vpop.f32.mrf.mxu0
      %v1219 = vadd.f32 0.0, %v1218
      %v1220 = vpop.f32.mrf.mxu0
      %1221 = vmatprep.mubr.bf16.mxu0 0
      %1222 = vmatmul.mubr.bf16.gmra.mxu0 %v1074
      %v1223 = vpop.f32.mrf.mxu0
      %v1224 = vadd.f32 0.0, %v1223
      %v1225 = vpop.f32.mrf.mxu0
      %v1226 = vpop.f32.mrf.mxu0
      %v1227 = vadd.f32 0.0, %v1226
      %v1228 = vpop.f32.mrf.mxu0
      %1229 = vmatprep.mubr.bf16.mxu0 0
      %1230 = vmatmul.mubr.bf16.gmra.mxu0 %v1077
      %v1231 = vpop.f32.mrf.mxu0
      %v1232 = vadd.f32 0.0, %v1231
      %v1233 = vpop.f32.mrf.mxu0
      %v1234 = vpop.f32.mrf.mxu0
      %v1235 = vadd.f32 0.0, %v1234
      %v1236 = vpop.f32.mrf.mxu0
      %1237 = vmatprep.mubr.bf16.mxu0 0
      %1238 = vmatmul.mubr.bf16.gmra.mxu0 %v1080
      %v1239 = vpop.f32.mrf.mxu0
      %v1240 = vadd.f32 0.0, %v1239
      %v1241 = vpop.f32.mrf.mxu0
      %v1242 = vpop.f32.mrf.mxu0
      %v1243 = vadd.f32 0.0, %v1242
      %v1244 = vpop.f32.mrf.mxu0
      %1245 = vdwg.mxu0
      %v1246 = vadd.f32 %v777, %v1120
      %v1247 = vadd.f32 %v780, %v1123
      %v1248 = vadd.f32 %v785, %v1128
      %v1249 = vadd.f32 %v788, %v1131
      %v1250 = vadd.f32 %v793, %v1136
      %v1251 = vadd.f32 %v796, %v1139
      %v1252 = vadd.f32 %v801, %v1144
      %v1253 = vadd.f32 %v804, %v1147
      %v1254 = vadd.f32 %v809, %v1152
      %v1255 = vadd.f32 %v812, %v1155
      %v1256 = vadd.f32 %v817, %v1160
      %v1257 = vadd.f32 %v820, %v1163
      %v1258 = vadd.f32 %v825, %v1168
      %v1259 = vadd.f32 %v828, %v1171
      %v1260 = vadd.f32 %v833, %v1176
      %v1261 = vadd.f32 %v836, %v1179
      %v1262 = vadd.f32 %v841, %v1184
      %v1263 = vadd.f32 %v844, %v1187
      %v1264 = vadd.f32 %v849, %v1192
      %v1265 = vadd.f32 %v852, %v1195
      %v1266 = vadd.f32 %v857, %v1200
      %v1267 = vadd.f32 %v860, %v1203
      %v1268 = vadd.f32 %v865, %v1208
      %v1269 = vadd.f32 %v868, %v1211
      %v1270 = vadd.f32 %v873, %v1216
      %v1271 = vadd.f32 %v876, %v1219
      %v1272 = vadd.f32 %v881, %v1224
      %v1273 = vadd.f32 %v884, %v1227
      %v1274 = vadd.f32 %v889, %v1232
      %v1275 = vadd.f32 %v892, %v1235
      %v1276 = vadd.f32 %v897, %v1240
      %v1277 = vadd.f32 %v900, %v1243
      %v1278 = vpack.c.bf16 %v276, %v275
      %s1279 = scalar_lea.vmem %s1, 6
      %v1280 = vld [vmem:[%s1279] sm:$0x3]
      %v1282 = vsel %vm477, %v1278, 0
      %v1285 = vsel %vm526, %v1280, 0
      %1287 = vmatprep.subr.bf16.mxu0 0
      %1288 = vmatpush1.bf16.msra.mxu0 0
      %1289 = vmatprep.subr.bf16.mxu0 0
      %1290 = vmatpush1.bf16.msra.mxu0 0
      %1291 = vmatprep.subr.bf16.mxu0 0
      %1292 = vmatpush1.bf16.msra.mxu0 0
      %1293 = vmatprep.subr.bf16.mxu0 0
      %1294 = vmatpush1.bf16.msra.mxu0 0
      %1295 = vmatprep.subr.bf16.mxu0 0
      %1296 = vmatpush1.bf16.msra.mxu0 0
      %1297 = vmatprep.subr.bf16.mxu0 0
      %1298 = vmatpush1.bf16.msra.mxu0 0
      %1299 = vmatprep.subr.bf16.mxu0 0
      %1300 = vmatpush1.bf16.msra.mxu0 0
      %1301 = vmatprep.subr.bf16.mxu0 0
      %1302 = vmatpush1.bf16.msra.mxu0 %v1285
      %1303 = vmatprep.subr.bf16.mxu0 0
      %1304 = vmatpush2.bf16.msra.mxu0 0
      %1305 = vmatprep.subr.bf16.mxu0 0
      %1306 = vmatpush2.bf16.msra.mxu0 0
      %1307 = vmatprep.subr.bf16.mxu0 0
      %1308 = vmatpush2.bf16.msra.mxu0 0
      %1309 = vmatprep.subr.bf16.mxu0 0
      %1310 = vmatpush2.bf16.msra.mxu0 0
      %1311 = vmatprep.subr.bf16.mxu0 0
      %1312 = vmatpush2.bf16.msra.mxu0 0
      %1313 = vmatprep.subr.bf16.mxu0 0
      %1314 = vmatpush2.bf16.msra.mxu0 0
      %1315 = vmatprep.subr.bf16.mxu0 0
      %1316 = vmatpush2.bf16.msra.mxu0 0
      %1317 = vmatprep.subr.bf16.mxu0 0
      %1318 = vmatpush2.bf16.msra.mxu0 0
      %1319 = vmatprep.mubr.bf16.mxu0 0
      %1320 = vmatmul.mubr.bf16.gmra.mxu0 %v695
      %v1321 = vpop.f32.mrf.mxu0
      %v1322 = vadd.f32 0.0, %v1321
      %v1323 = vpop.f32.mrf.mxu0
      %v1324 = vpop.f32.mrf.mxu0
      %v1325 = vadd.f32 0.0, %v1324
      %v1326 = vpop.f32.mrf.mxu0
      %1327 = vmatprep.mubr.bf16.mxu0 0
      %1328 = vmatmul.mubr.bf16.gmra.mxu0 %v698
      %v1329 = vpop.f32.mrf.mxu0
      %v1330 = vadd.f32 0.0, %v1329
      %v1331 = vpop.f32.mrf.mxu0
      %v1332 = vpop.f32.mrf.mxu0
      %v1333 = vadd.f32 0.0, %v1332
      %v1334 = vpop.f32.mrf.mxu0
      %1335 = vmatprep.mubr.bf16.mxu0 0
      %1336 = vmatmul.mubr.bf16.gmra.mxu0 %v701
      %v1337 = vpop.f32.mrf.mxu0
      %v1338 = vadd.f32 0.0, %v1337
      %v1339 = vpop.f32.mrf.mxu0
      %v1340 = vpop.f32.mrf.mxu0
      %v1341 = vadd.f32 0.0, %v1340
      %v1342 = vpop.f32.mrf.mxu0
      %1343 = vmatprep.mubr.bf16.mxu0 0
      %1344 = vmatmul.mubr.bf16.gmra.mxu0 %v704
      %v1345 = vpop.f32.mrf.mxu0
      %v1346 = vadd.f32 0.0, %v1345
      %v1347 = vpop.f32.mrf.mxu0
      %v1348 = vpop.f32.mrf.mxu0
      %v1349 = vadd.f32 0.0, %v1348
      %v1350 = vpop.f32.mrf.mxu0
      %1351 = vmatprep.mubr.bf16.mxu0 0
      %1352 = vmatmul.mubr.bf16.gmra.mxu0 %v707
      %v1353 = vpop.f32.mrf.mxu0
      %v1354 = vadd.f32 0.0, %v1353
      %v1355 = vpop.f32.mrf.mxu0
      %v1356 = vpop.f32.mrf.mxu0
      %v1357 = vadd.f32 0.0, %v1356
      %v1358 = vpop.f32.mrf.mxu0
      %1359 = vmatprep.mubr.bf16.mxu0 0
      %1360 = vmatmul.mubr.bf16.gmra.mxu0 %v710
      %v1361 = vpop.f32.mrf.mxu0
      %v1362 = vadd.f32 0.0, %v1361
      %v1363 = vpop.f32.mrf.mxu0
      %v1364 = vpop.f32.mrf.mxu0
      %v1365 = vadd.f32 0.0, %v1364
      %v1366 = vpop.f32.mrf.mxu0
      %1367 = vmatprep.mubr.bf16.mxu0 0
      %1368 = vmatmul.mubr.bf16.gmra.mxu0 %v713
      %v1369 = vpop.f32.mrf.mxu0
      %v1370 = vadd.f32 0.0, %v1369
      %v1371 = vpop.f32.mrf.mxu0
      %v1372 = vpop.f32.mrf.mxu0
      %v1373 = vadd.f32 0.0, %v1372
      %v1374 = vpop.f32.mrf.mxu0
      %1375 = vmatprep.mubr.bf16.mxu0 0
      %1376 = vmatmul.mubr.bf16.gmra.mxu0 %v716
      %v1377 = vpop.f32.mrf.mxu0
      %v1378 = vadd.f32 0.0, %v1377
      %v1379 = vpop.f32.mrf.mxu0
      %v1380 = vpop.f32.mrf.mxu0
      %v1381 = vadd.f32 0.0, %v1380
      %v1382 = vpop.f32.mrf.mxu0
      %1383 = vmatprep.mubr.bf16.mxu0 0
      %1384 = vmatmul.mubr.bf16.gmra.mxu0 %v719
      %v1385 = vpop.f32.mrf.mxu0
      %v1386 = vadd.f32 0.0, %v1385
      %v1387 = vpop.f32.mrf.mxu0
      %v1388 = vpop.f32.mrf.mxu0
      %v1389 = vadd.f32 0.0, %v1388
      %v1390 = vpop.f32.mrf.mxu0
      %1391 = vmatprep.mubr.bf16.mxu0 0
      %1392 = vmatmul.mubr.bf16.gmra.mxu0 %v722
      %v1393 = vpop.f32.mrf.mxu0
      %v1394 = vadd.f32 0.0, %v1393
      %v1395 = vpop.f32.mrf.mxu0
      %v1396 = vpop.f32.mrf.mxu0
      %v1397 = vadd.f32 0.0, %v1396
      %v1398 = vpop.f32.mrf.mxu0
      %1399 = vmatprep.mubr.bf16.mxu0 0
      %1400 = vmatmul.mubr.bf16.gmra.mxu0 %v725
      %v1401 = vpop.f32.mrf.mxu0
      %v1402 = vadd.f32 0.0, %v1401
      %v1403 = vpop.f32.mrf.mxu0
      %v1404 = vpop.f32.mrf.mxu0
      %v1405 = vadd.f32 0.0, %v1404
      %v1406 = vpop.f32.mrf.mxu0
      %1407 = vmatprep.mubr.bf16.mxu0 0
      %1408 = vmatmul.mubr.bf16.gmra.mxu0 %v728
      %v1409 = vpop.f32.mrf.mxu0
      %v1410 = vadd.f32 0.0, %v1409
      %v1411 = vpop.f32.mrf.mxu0
      %v1412 = vpop.f32.mrf.mxu0
      %v1413 = vadd.f32 0.0, %v1412
      %v1414 = vpop.f32.mrf.mxu0
      %1415 = vmatprep.mubr.bf16.mxu0 0
      %1416 = vmatmul.mubr.bf16.gmra.mxu0 %v731
      %v1417 = vpop.f32.mrf.mxu0
      %v1418 = vadd.f32 0.0, %v1417
      %v1419 = vpop.f32.mrf.mxu0
      %v1420 = vpop.f32.mrf.mxu0
      %v1421 = vadd.f32 0.0, %v1420
      %v1422 = vpop.f32.mrf.mxu0
      %1423 = vmatprep.mubr.bf16.mxu0 0
      %1424 = vmatmul.mubr.bf16.gmra.mxu0 %v734
      %v1425 = vpop.f32.mrf.mxu0
      %v1426 = vadd.f32 0.0, %v1425
      %v1427 = vpop.f32.mrf.mxu0
      %v1428 = vpop.f32.mrf.mxu0
      %v1429 = vadd.f32 0.0, %v1428
      %v1430 = vpop.f32.mrf.mxu0
      %1431 = vmatprep.mubr.bf16.mxu0 0
      %1432 = vmatmul.mubr.bf16.gmra.mxu0 %v737
      %v1433 = vpop.f32.mrf.mxu0
      %v1434 = vadd.f32 0.0, %v1433
      %v1435 = vpop.f32.mrf.mxu0
      %v1436 = vpop.f32.mrf.mxu0
      %v1437 = vadd.f32 0.0, %v1436
      %v1438 = vpop.f32.mrf.mxu0
      %1439 = vmatprep.mubr.bf16.mxu0 0
      %1440 = vmatmul.mubr.bf16.gmra.mxu0 %v1282
      %v1441 = vpop.f32.mrf.mxu0
      %v1442 = vadd.f32 0.0, %v1441
      %v1443 = vpop.f32.mrf.mxu0
      %v1444 = vpop.f32.mrf.mxu0
      %v1445 = vadd.f32 0.0, %v1444
      %v1446 = vpop.f32.mrf.mxu0
      %1447 = vdwg.mxu0
      %v1448 = vadd.f32 %v1246, %v1322
      %v1449 = vadd.f32 %v1247, %v1325
      %v1450 = vadd.f32 %v1248, %v1330
      %v1451 = vadd.f32 %v1249, %v1333
      %v1452 = vadd.f32 %v1250, %v1338
      %v1453 = vadd.f32 %v1251, %v1341
      %v1454 = vadd.f32 %v1252, %v1346
      %v1455 = vadd.f32 %v1253, %v1349
      %v1456 = vadd.f32 %v1254, %v1354
      %v1457 = vadd.f32 %v1255, %v1357
      %v1458 = vadd.f32 %v1256, %v1362
      %v1459 = vadd.f32 %v1257, %v1365
      %v1460 = vadd.f32 %v1258, %v1370
      %v1461 = vadd.f32 %v1259, %v1373
      %v1462 = vadd.f32 %v1260, %v1378
      %v1463 = vadd.f32 %v1261, %v1381
      %v1464 = vadd.f32 %v1262, %v1386
      %v1465 = vadd.f32 %v1263, %v1389
      %v1466 = vadd.f32 %v1264, %v1394
      %v1467 = vadd.f32 %v1265, %v1397
      %v1468 = vadd.f32 %v1266, %v1402
      %v1469 = vadd.f32 %v1267, %v1405
      %v1470 = vadd.f32 %v1268, %v1410
      %v1471 = vadd.f32 %v1269, %v1413
      %v1472 = vadd.f32 %v1270, %v1418
      %v1473 = vadd.f32 %v1271, %v1421
      %v1474 = vadd.f32 %v1272, %v1426
      %v1475 = vadd.f32 %v1273, %v1429
      %v1476 = vadd.f32 %v1274, %v1434
      %v1477 = vadd.f32 %v1275, %v1437
      %v1478 = vadd.f32 %v1276, %v1442
      %v1479 = vadd.f32 %v1277, %v1445
      %v1483 = vrot.slane %v275, 1
      %v1484 = vrot.slane %v276, 1
      %v1485 = vsel %vm346, %v1483, %v1484
      %v1486 = vrot.slane %v277, 1
      %v1487 = vsel %vm346, %v1484, %v1486
      %v1490 = vpack.c.bf16 %v1487, %v1485
      %s1491 = scalar_lea.vmem %s1, 8
      %v1492 = vld [vmem:[%s1491] sm:$0x3]
      %v1494 = vsel %vm477, %v1490, 0
      %v1497 = vsel %vm526, %v1492, 0
      %1499 = vmatprep.subr.bf16.mxu0 0
      %1500 = vmatpush1.bf16.msra.mxu0 0
      %1501 = vmatprep.subr.bf16.mxu0 0
      %1502 = vmatpush1.bf16.msra.mxu0 0
      %1503 = vmatprep.subr.bf16.mxu0 0
      %1504 = vmatpush1.bf16.msra.mxu0 0
      %1505 = vmatprep.subr.bf16.mxu0 0
      %1506 = vmatpush1.bf16.msra.mxu0 0
      %1507 = vmatprep.subr.bf16.mxu0 0
      %1508 = vmatpush1.bf16.msra.mxu0 0
      %1509 = vmatprep.subr.bf16.mxu0 0
      %1510 = vmatpush1.bf16.msra.mxu0 0
      %1511 = vmatprep.subr.bf16.mxu0 0
      %1512 = vmatpush1.bf16.msra.mxu0 0
      %1513 = vmatprep.subr.bf16.mxu0 0
      %1514 = vmatpush1.bf16.msra.mxu0 %v1497
      %1515 = vmatprep.subr.bf16.mxu0 0
      %1516 = vmatpush2.bf16.msra.mxu0 0
      %1517 = vmatprep.subr.bf16.mxu0 0
      %1518 = vmatpush2.bf16.msra.mxu0 0
      %1519 = vmatprep.subr.bf16.mxu0 0
      %1520 = vmatpush2.bf16.msra.mxu0 0
      %1521 = vmatprep.subr.bf16.mxu0 0
      %1522 = vmatpush2.bf16.msra.mxu0 0
      %1523 = vmatprep.subr.bf16.mxu0 0
      %1524 = vmatpush2.bf16.msra.mxu0 0
      %1525 = vmatprep.subr.bf16.mxu0 0
      %1526 = vmatpush2.bf16.msra.mxu0 0
      %1527 = vmatprep.subr.bf16.mxu0 0
      %1528 = vmatpush2.bf16.msra.mxu0 0
      %1529 = vmatprep.subr.bf16.mxu0 0
      %1530 = vmatpush2.bf16.msra.mxu0 0
      %1531 = vmatprep.mubr.bf16.mxu0 0
      %1532 = vmatmul.mubr.bf16.gmra.mxu0 %v482
      %v1533 = vpop.f32.mrf.mxu0
      %v1534 = vadd.f32 0.0, %v1533
      %v1535 = vpop.f32.mrf.mxu0
      %v1536 = vpop.f32.mrf.mxu0
      %v1537 = vadd.f32 0.0, %v1536
      %v1538 = vpop.f32.mrf.mxu0
      %1539 = vmatprep.mubr.bf16.mxu0 0
      %1540 = vmatmul.mubr.bf16.gmra.mxu0 %v485
      %v1541 = vpop.f32.mrf.mxu0
      %v1542 = vadd.f32 0.0, %v1541
      %v1543 = vpop.f32.mrf.mxu0
      %v1544 = vpop.f32.mrf.mxu0
      %v1545 = vadd.f32 0.0, %v1544
      %v1546 = vpop.f32.mrf.mxu0
      %1547 = vmatprep.mubr.bf16.mxu0 0
      %1548 = vmatmul.mubr.bf16.gmra.mxu0 %v488
      %v1549 = vpop.f32.mrf.mxu0
      %v1550 = vadd.f32 0.0, %v1549
      %v1551 = vpop.f32.mrf.mxu0
      %v1552 = vpop.f32.mrf.mxu0
      %v1553 = vadd.f32 0.0, %v1552
      %v1554 = vpop.f32.mrf.mxu0
      %1555 = vmatprep.mubr.bf16.mxu0 0
      %1556 = vmatmul.mubr.bf16.gmra.mxu0 %v491
      %v1557 = vpop.f32.mrf.mxu0
      %v1558 = vadd.f32 0.0, %v1557
      %v1559 = vpop.f32.mrf.mxu0
      %v1560 = vpop.f32.mrf.mxu0
      %v1561 = vadd.f32 0.0, %v1560
      %v1562 = vpop.f32.mrf.mxu0
      %1563 = vmatprep.mubr.bf16.mxu0 0
      %1564 = vmatmul.mubr.bf16.gmra.mxu0 %v494
      %v1565 = vpop.f32.mrf.mxu0
      %v1566 = vadd.f32 0.0, %v1565
      %v1567 = vpop.f32.mrf.mxu0
      %v1568 = vpop.f32.mrf.mxu0
      %v1569 = vadd.f32 0.0, %v1568
      %v1570 = vpop.f32.mrf.mxu0
      %1571 = vmatprep.mubr.bf16.mxu0 0
      %1572 = vmatmul.mubr.bf16.gmra.mxu0 %v497
      %v1573 = vpop.f32.mrf.mxu0
      %v1574 = vadd.f32 0.0, %v1573
      %v1575 = vpop.f32.mrf.mxu0
      %v1576 = vpop.f32.mrf.mxu0
      %v1577 = vadd.f32 0.0, %v1576
      %v1578 = vpop.f32.mrf.mxu0
      %1579 = vmatprep.mubr.bf16.mxu0 0
      %1580 = vmatmul.mubr.bf16.gmra.mxu0 %v500
      %v1581 = vpop.f32.mrf.mxu0
      %v1582 = vadd.f32 0.0, %v1581
      %v1583 = vpop.f32.mrf.mxu0
      %v1584 = vpop.f32.mrf.mxu0
      %v1585 = vadd.f32 0.0, %v1584
      %v1586 = vpop.f32.mrf.mxu0
      %1587 = vmatprep.mubr.bf16.mxu0 0
      %1588 = vmatmul.mubr.bf16.gmra.mxu0 %v503
      %v1589 = vpop.f32.mrf.mxu0
      %v1590 = vadd.f32 0.0, %v1589
      %v1591 = vpop.f32.mrf.mxu0
      %v1592 = vpop.f32.mrf.mxu0
      %v1593 = vadd.f32 0.0, %v1592
      %v1594 = vpop.f32.mrf.mxu0
      %1595 = vmatprep.mubr.bf16.mxu0 0
      %1596 = vmatmul.mubr.bf16.gmra.mxu0 %v506
      %v1597 = vpop.f32.mrf.mxu0
      %v1598 = vadd.f32 0.0, %v1597
      %v1599 = vpop.f32.mrf.mxu0
      %v1600 = vpop.f32.mrf.mxu0
      %v1601 = vadd.f32 0.0, %v1600
      %v1602 = vpop.f32.mrf.mxu0
      %1603 = vmatprep.mubr.bf16.mxu0 0
      %1604 = vmatmul.mubr.bf16.gmra.mxu0 %v509
      %v1605 = vpop.f32.mrf.mxu0
      %v1606 = vadd.f32 0.0, %v1605
      %v1607 = vpop.f32.mrf.mxu0
      %v1608 = vpop.f32.mrf.mxu0
      %v1609 = vadd.f32 0.0, %v1608
      %v1610 = vpop.f32.mrf.mxu0
      %1611 = vmatprep.mubr.bf16.mxu0 0
      %1612 = vmatmul.mubr.bf16.gmra.mxu0 %v512
      %v1613 = vpop.f32.mrf.mxu0
      %v1614 = vadd.f32 0.0, %v1613
      %v1615 = vpop.f32.mrf.mxu0
      %v1616 = vpop.f32.mrf.mxu0
      %v1617 = vadd.f32 0.0, %v1616
      %v1618 = vpop.f32.mrf.mxu0
      %1619 = vmatprep.mubr.bf16.mxu0 0
      %1620 = vmatmul.mubr.bf16.gmra.mxu0 %v515
      %v1621 = vpop.f32.mrf.mxu0
      %v1622 = vadd.f32 0.0, %v1621
      %v1623 = vpop.f32.mrf.mxu0
      %v1624 = vpop.f32.mrf.mxu0
      %v1625 = vadd.f32 0.0, %v1624
      %v1626 = vpop.f32.mrf.mxu0
      %1627 = vmatprep.mubr.bf16.mxu0 0
      %1628 = vmatmul.mubr.bf16.gmra.mxu0 %v518
      %v1629 = vpop.f32.mrf.mxu0
      %v1630 = vadd.f32 0.0, %v1629
      %v1631 = vpop.f32.mrf.mxu0
      %v1632 = vpop.f32.mrf.mxu0
      %v1633 = vadd.f32 0.0, %v1632
      %v1634 = vpop.f32.mrf.mxu0
      %1635 = vmatprep.mubr.bf16.mxu0 0
      %1636 = vmatmul.mubr.bf16.gmra.mxu0 %v521
      %v1637 = vpop.f32.mrf.mxu0
      %v1638 = vadd.f32 0.0, %v1637
      %v1639 = vpop.f32.mrf.mxu0
      %v1640 = vpop.f32.mrf.mxu0
      %v1641 = vadd.f32 0.0, %v1640
      %v1642 = vpop.f32.mrf.mxu0
      %1643 = vmatprep.mubr.bf16.mxu0 0
      %1644 = vmatmul.mubr.bf16.gmra.mxu0 %v524
      %v1645 = vpop.f32.mrf.mxu0
      %v1646 = vadd.f32 0.0, %v1645
      %v1647 = vpop.f32.mrf.mxu0
      %v1648 = vpop.f32.mrf.mxu0
      %v1649 = vadd.f32 0.0, %v1648
      %v1650 = vpop.f32.mrf.mxu0
      %1651 = vmatprep.mubr.bf16.mxu0 0
      %1652 = vmatmul.mubr.bf16.gmra.mxu0 %v1494
      %v1653 = vpop.f32.mrf.mxu0
      %v1654 = vadd.f32 0.0, %v1653
      %v1655 = vpop.f32.mrf.mxu0
      %v1656 = vpop.f32.mrf.mxu0
      %v1657 = vadd.f32 0.0, %v1656
      %v1658 = vpop.f32.mrf.mxu0
      %1659 = vdwg.mxu0
      %v1660 = vadd.f32 %v1448, %v1534
      %v1661 = vadd.f32 %v1449, %v1537
      %v1662 = vadd.f32 %v1450, %v1542
      %v1663 = vadd.f32 %v1451, %v1545
      %v1664 = vadd.f32 %v1452, %v1550
      %v1665 = vadd.f32 %v1453, %v1553
      %v1666 = vadd.f32 %v1454, %v1558
      %v1667 = vadd.f32 %v1455, %v1561
      %v1668 = vadd.f32 %v1456, %v1566
      %v1669 = vadd.f32 %v1457, %v1569
      %v1670 = vadd.f32 %v1458, %v1574
      %v1671 = vadd.f32 %v1459, %v1577
      %v1672 = vadd.f32 %v1460, %v1582
      %v1673 = vadd.f32 %v1461, %v1585
      %v1674 = vadd.f32 %v1462, %v1590
      %v1675 = vadd.f32 %v1463, %v1593
      %v1676 = vadd.f32 %v1464, %v1598
      %v1677 = vadd.f32 %v1465, %v1601
      %v1678 = vadd.f32 %v1466, %v1606
      %v1679 = vadd.f32 %v1467, %v1609
      %v1680 = vadd.f32 %v1468, %v1614
      %v1681 = vadd.f32 %v1469, %v1617
      %v1682 = vadd.f32 %v1470, %v1622
      %v1683 = vadd.f32 %v1471, %v1625
      %v1684 = vadd.f32 %v1472, %v1630
      %v1685 = vadd.f32 %v1473, %v1633
      %v1686 = vadd.f32 %v1474, %v1638
      %v1687 = vadd.f32 %v1475, %v1641
      %v1688 = vadd.f32 %v1476, %v1646
      %v1689 = vadd.f32 %v1477, %v1649
      %v1690 = vadd.f32 %v1478, %v1654
      %v1691 = vadd.f32 %v1479, %v1657
      %v1692 = vrot.slane %v275, 2
      %v1693 = vrot.slane %v276, 2
      %v1694 = vsel %vm903, %v1692, %v1693
      %v1695 = vrot.slane %v277, 2
      %v1696 = vsel %vm903, %v1693, %v1695
      %v1699 = vpack.c.bf16 %v1696, %v1694
      %s1700 = scalar_lea.vmem %s1, 10
      %v1701 = vld [vmem:[%s1700] sm:$0x3]
      %v1703 = vsel %vm477, %v1699, 0
      %v1706 = vsel %vm526, %v1701, 0
      %1708 = vmatprep.subr.bf16.mxu0 0
      %1709 = vmatpush1.bf16.msra.mxu0 0
      %1710 = vmatprep.subr.bf16.mxu0 0
      %1711 = vmatpush1.bf16.msra.mxu0 0
      %1712 = vmatprep.subr.bf16.mxu0 0
      %1713 = vmatpush1.bf16.msra.mxu0 0
      %1714 = vmatprep.subr.bf16.mxu0 0
      %1715 = vmatpush1.bf16.msra.mxu0 0
      %1716 = vmatprep.subr.bf16.mxu0 0
      %1717 = vmatpush1.bf16.msra.mxu0 0
      %1718 = vmatprep.subr.bf16.mxu0 0
      %1719 = vmatpush1.bf16.msra.mxu0 0
      %1720 = vmatprep.subr.bf16.mxu0 0
      %1721 = vmatpush1.bf16.msra.mxu0 0
      %1722 = vmatprep.subr.bf16.mxu0 0
      %1723 = vmatpush1.bf16.msra.mxu0 %v1706
      %1724 = vmatprep.subr.bf16.mxu0 0
      %1725 = vmatpush2.bf16.msra.mxu0 0
      %1726 = vmatprep.subr.bf16.mxu0 0
      %1727 = vmatpush2.bf16.msra.mxu0 0
      %1728 = vmatprep.subr.bf16.mxu0 0
      %1729 = vmatpush2.bf16.msra.mxu0 0
      %1730 = vmatprep.subr.bf16.mxu0 0
      %1731 = vmatpush2.bf16.msra.mxu0 0
      %1732 = vmatprep.subr.bf16.mxu0 0
      %1733 = vmatpush2.bf16.msra.mxu0 0
      %1734 = vmatprep.subr.bf16.mxu0 0
      %1735 = vmatpush2.bf16.msra.mxu0 0
      %1736 = vmatprep.subr.bf16.mxu0 0
      %1737 = vmatpush2.bf16.msra.mxu0 0
      %1738 = vmatprep.subr.bf16.mxu0 0
      %1739 = vmatpush2.bf16.msra.mxu0 0
      %1740 = vmatprep.mubr.bf16.mxu0 0
      %1741 = vmatmul.mubr.bf16.gmra.mxu0 %v1038
      %v1742 = vpop.f32.mrf.mxu0
      %v1743 = vadd.f32 0.0, %v1742
      %v1744 = vpop.f32.mrf.mxu0
      %v1745 = vpop.f32.mrf.mxu0
      %v1746 = vadd.f32 0.0, %v1745
      %v1747 = vpop.f32.mrf.mxu0
      %1748 = vmatprep.mubr.bf16.mxu0 0
      %1749 = vmatmul.mubr.bf16.gmra.mxu0 %v1041
      %v1750 = vpop.f32.mrf.mxu0
      %v1751 = vadd.f32 0.0, %v1750
      %v1752 = vpop.f32.mrf.mxu0
      %v1753 = vpop.f32.mrf.mxu0
      %v1754 = vadd.f32 0.0, %v1753
      %v1755 = vpop.f32.mrf.mxu0
      %1756 = vmatprep.mubr.bf16.mxu0 0
      %1757 = vmatmul.mubr.bf16.gmra.mxu0 %v1044
      %v1758 = vpop.f32.mrf.mxu0
      %v1759 = vadd.f32 0.0, %v1758
      %v1760 = vpop.f32.mrf.mxu0
      %v1761 = vpop.f32.mrf.mxu0
      %v1762 = vadd.f32 0.0, %v1761
      %v1763 = vpop.f32.mrf.mxu0
      %1764 = vmatprep.mubr.bf16.mxu0 0
      %1765 = vmatmul.mubr.bf16.gmra.mxu0 %v1047
      %v1766 = vpop.f32.mrf.mxu0
      %v1767 = vadd.f32 0.0, %v1766
      %v1768 = vpop.f32.mrf.mxu0
      %v1769 = vpop.f32.mrf.mxu0
      %v1770 = vadd.f32 0.0, %v1769
      %v1771 = vpop.f32.mrf.mxu0
      %1772 = vmatprep.mubr.bf16.mxu0 0
      %1773 = vmatmul.mubr.bf16.gmra.mxu0 %v1050
      %v1774 = vpop.f32.mrf.mxu0
      %v1775 = vadd.f32 0.0, %v1774
      %v1776 = vpop.f32.mrf.mxu0
      %v1777 = vpop.f32.mrf.mxu0
      %v1778 = vadd.f32 0.0, %v1777
      %v1779 = vpop.f32.mrf.mxu0
      %1780 = vmatprep.mubr.bf16.mxu0 0
      %1781 = vmatmul.mubr.bf16.gmra.mxu0 %v1053
      %v1782 = vpop.f32.mrf.mxu0
      %v1783 = vadd.f32 0.0, %v1782
      %v1784 = vpop.f32.mrf.mxu0
      %v1785 = vpop.f32.mrf.mxu0
      %v1786 = vadd.f32 0.0, %v1785
      %v1787 = vpop.f32.mrf.mxu0
      %1788 = vmatprep.mubr.bf16.mxu0 0
      %1789 = vmatmul.mubr.bf16.gmra.mxu0 %v1056
      %v1790 = vpop.f32.mrf.mxu0
      %v1791 = vadd.f32 0.0, %v1790
      %v1792 = vpop.f32.mrf.mxu0
      %v1793 = vpop.f32.mrf.mxu0
      %v1794 = vadd.f32 0.0, %v1793
      %v1795 = vpop.f32.mrf.mxu0
      %1796 = vmatprep.mubr.bf16.mxu0 0
      %1797 = vmatmul.mubr.bf16.gmra.mxu0 %v1059
      %v1798 = vpop.f32.mrf.mxu0
      %v1799 = vadd.f32 0.0, %v1798
      %v1800 = vpop.f32.mrf.mxu0
      %v1801 = vpop.f32.mrf.mxu0
      %v1802 = vadd.f32 0.0, %v1801
      %v1803 = vpop.f32.mrf.mxu0
      %1804 = vmatprep.mubr.bf16.mxu0 0
      %1805 = vmatmul.mubr.bf16.gmra.mxu0 %v1062
      %v1806 = vpop.f32.mrf.mxu0
      %v1807 = vadd.f32 0.0, %v1806
      %v1808 = vpop.f32.mrf.mxu0
      %v1809 = vpop.f32.mrf.mxu0
      %v1810 = vadd.f32 0.0, %v1809
      %v1811 = vpop.f32.mrf.mxu0
      %1812 = vmatprep.mubr.bf16.mxu0 0
      %1813 = vmatmul.mubr.bf16.gmra.mxu0 %v1065
      %v1814 = vpop.f32.mrf.mxu0
      %v1815 = vadd.f32 0.0, %v1814
      %v1816 = vpop.f32.mrf.mxu0
      %v1817 = vpop.f32.mrf.mxu0
      %v1818 = vadd.f32 0.0, %v1817
      %v1819 = vpop.f32.mrf.mxu0
      %1820 = vmatprep.mubr.bf16.mxu0 0
      %1821 = vmatmul.mubr.bf16.gmra.mxu0 %v1068
      %v1822 = vpop.f32.mrf.mxu0
      %v1823 = vadd.f32 0.0, %v1822
      %v1824 = vpop.f32.mrf.mxu0
      %v1825 = vpop.f32.mrf.mxu0
      %v1826 = vadd.f32 0.0, %v1825
      %v1827 = vpop.f32.mrf.mxu0
      %1828 = vmatprep.mubr.bf16.mxu0 0
      %1829 = vmatmul.mubr.bf16.gmra.mxu0 %v1071
      %v1830 = vpop.f32.mrf.mxu0
      %v1831 = vadd.f32 0.0, %v1830
      %v1832 = vpop.f32.mrf.mxu0
      %v1833 = vpop.f32.mrf.mxu0
      %v1834 = vadd.f32 0.0, %v1833
      %v1835 = vpop.f32.mrf.mxu0
      %1836 = vmatprep.mubr.bf16.mxu0 0
      %1837 = vmatmul.mubr.bf16.gmra.mxu0 %v1074
      %v1838 = vpop.f32.mrf.mxu0
      %v1839 = vadd.f32 0.0, %v1838
      %v1840 = vpop.f32.mrf.mxu0
      %v1841 = vpop.f32.mrf.mxu0
      %v1842 = vadd.f32 0.0, %v1841
      %v1843 = vpop.f32.mrf.mxu0
      %1844 = vmatprep.mubr.bf16.mxu0 0
      %1845 = vmatmul.mubr.bf16.gmra.mxu0 %v1077
      %v1846 = vpop.f32.mrf.mxu0
      %v1847 = vadd.f32 0.0, %v1846
      %v1848 = vpop.f32.mrf.mxu0
      %v1849 = vpop.f32.mrf.mxu0
      %v1850 = vadd.f32 0.0, %v1849
      %v1851 = vpop.f32.mrf.mxu0
      %1852 = vmatprep.mubr.bf16.mxu0 0
      %1853 = vmatmul.mubr.bf16.gmra.mxu0 %v1080
      %v1854 = vpop.f32.mrf.mxu0
      %v1855 = vadd.f32 0.0, %v1854
      %v1856 = vpop.f32.mrf.mxu0
      %v1857 = vpop.f32.mrf.mxu0
      %v1858 = vadd.f32 0.0, %v1857
      %v1859 = vpop.f32.mrf.mxu0
      %1860 = vmatprep.mubr.bf16.mxu0 0
      %1861 = vmatmul.mubr.bf16.gmra.mxu0 %v1703
      %v1862 = vpop.f32.mrf.mxu0
      %v1863 = vadd.f32 0.0, %v1862
      %v1864 = vpop.f32.mrf.mxu0
      %v1865 = vpop.f32.mrf.mxu0
      %v1866 = vadd.f32 0.0, %v1865
      %v1867 = vpop.f32.mrf.mxu0
      %1868 = vdwg.mxu0
      %v1869 = vadd.f32 %v1660, %v1743
      %v1870 = vadd.f32 %v1661, %v1746
      %v1871 = vadd.f32 %v1662, %v1751
      %v1872 = vadd.f32 %v1663, %v1754
      %v1873 = vadd.f32 %v1664, %v1759
      %v1874 = vadd.f32 %v1665, %v1762
      %v1875 = vadd.f32 %v1666, %v1767
      %v1876 = vadd.f32 %v1667, %v1770
      %v1877 = vadd.f32 %v1668, %v1775
      %v1878 = vadd.f32 %v1669, %v1778
      %v1879 = vadd.f32 %v1670, %v1783
      %v1880 = vadd.f32 %v1671, %v1786
      %v1881 = vadd.f32 %v1672, %v1791
      %v1882 = vadd.f32 %v1673, %v1794
      %v1883 = vadd.f32 %v1674, %v1799
      %v1884 = vadd.f32 %v1675, %v1802
      %v1885 = vadd.f32 %v1676, %v1807
      %v1886 = vadd.f32 %v1677, %v1810
      %v1887 = vadd.f32 %v1678, %v1815
      %v1888 = vadd.f32 %v1679, %v1818
      %v1889 = vadd.f32 %v1680, %v1823
      %v1890 = vadd.f32 %v1681, %v1826
      %v1891 = vadd.f32 %v1682, %v1831
      %v1892 = vadd.f32 %v1683, %v1834
      %v1893 = vadd.f32 %v1684, %v1839
      %v1894 = vadd.f32 %v1685, %v1842
      %v1895 = vadd.f32 %v1686, %v1847
      %v1896 = vadd.f32 %v1687, %v1850
      %v1897 = vadd.f32 %v1688, %v1855
      %v1898 = vadd.f32 %v1689, %v1858
      %v1899 = vadd.f32 %v1690, %v1863
      %v1900 = vadd.f32 %v1691, %v1866
      %v1901 = vpack.c.bf16 %v279, %v278
      %s1902 = scalar_lea.vmem %s1, 12
      %v1903 = vld [vmem:[%s1902] sm:$0x3]
      %v1905 = vsel %vm477, %v1901, 0
      %v1908 = vsel %vm526, %v1903, 0
      %1910 = vmatprep.subr.bf16.mxu0 0
      %1911 = vmatpush1.bf16.msra.mxu0 0
      %1912 = vmatprep.subr.bf16.mxu0 0
      %1913 = vmatpush1.bf16.msra.mxu0 0
      %1914 = vmatprep.subr.bf16.mxu0 0
      %1915 = vmatpush1.bf16.msra.mxu0 0
      %1916 = vmatprep.subr.bf16.mxu0 0
      %1917 = vmatpush1.bf16.msra.mxu0 0
      %1918 = vmatprep.subr.bf16.mxu0 0
      %1919 = vmatpush1.bf16.msra.mxu0 0
      %1920 = vmatprep.subr.bf16.mxu0 0
      %1921 = vmatpush1.bf16.msra.mxu0 0
      %1922 = vmatprep.subr.bf16.mxu0 0
      %1923 = vmatpush1.bf16.msra.mxu0 0
      %1924 = vmatprep.subr.bf16.mxu0 0
      %1925 = vmatpush1.bf16.msra.mxu0 %v1908
      %1926 = vmatprep.subr.bf16.mxu0 0
      %1927 = vmatpush2.bf16.msra.mxu0 0
      %1928 = vmatprep.subr.bf16.mxu0 0
      %1929 = vmatpush2.bf16.msra.mxu0 0
      %1930 = vmatprep.subr.bf16.mxu0 0
      %1931 = vmatpush2.bf16.msra.mxu0 0
      %1932 = vmatprep.subr.bf16.mxu0 0
      %1933 = vmatpush2.bf16.msra.mxu0 0
      %1934 = vmatprep.subr.bf16.mxu0 0
      %1935 = vmatpush2.bf16.msra.mxu0 0
      %1936 = vmatprep.subr.bf16.mxu0 0
      %1937 = vmatpush2.bf16.msra.mxu0 0
      %1938 = vmatprep.subr.bf16.mxu0 0
      %1939 = vmatpush2.bf16.msra.mxu0 0
      %1940 = vmatprep.subr.bf16.mxu0 0
      %1941 = vmatpush2.bf16.msra.mxu0 0
      %1942 = vmatprep.mubr.bf16.mxu0 0
      %1943 = vmatmul.mubr.bf16.gmra.mxu0 %v698
      %v1944 = vpop.f32.mrf.mxu0
      %v1945 = vadd.f32 0.0, %v1944
      %v1946 = vpop.f32.mrf.mxu0
      %v1947 = vpop.f32.mrf.mxu0
      %v1948 = vadd.f32 0.0, %v1947
      %v1949 = vpop.f32.mrf.mxu0
      %1950 = vmatprep.mubr.bf16.mxu0 0
      %1951 = vmatmul.mubr.bf16.gmra.mxu0 %v701
      %v1952 = vpop.f32.mrf.mxu0
      %v1953 = vadd.f32 0.0, %v1952
      %v1954 = vpop.f32.mrf.mxu0
      %v1955 = vpop.f32.mrf.mxu0
      %v1956 = vadd.f32 0.0, %v1955
      %v1957 = vpop.f32.mrf.mxu0
      %1958 = vmatprep.mubr.bf16.mxu0 0
      %1959 = vmatmul.mubr.bf16.gmra.mxu0 %v704
      %v1960 = vpop.f32.mrf.mxu0
      %v1961 = vadd.f32 0.0, %v1960
      %v1962 = vpop.f32.mrf.mxu0
      %v1963 = vpop.f32.mrf.mxu0
      %v1964 = vadd.f32 0.0, %v1963
      %v1965 = vpop.f32.mrf.mxu0
      %1966 = vmatprep.mubr.bf16.mxu0 0
      %1967 = vmatmul.mubr.bf16.gmra.mxu0 %v707
      %v1968 = vpop.f32.mrf.mxu0
      %v1969 = vadd.f32 0.0, %v1968
      %v1970 = vpop.f32.mrf.mxu0
      %v1971 = vpop.f32.mrf.mxu0
      %v1972 = vadd.f32 0.0, %v1971
      %v1973 = vpop.f32.mrf.mxu0
      %1974 = vmatprep.mubr.bf16.mxu0 0
      %1975 = vmatmul.mubr.bf16.gmra.mxu0 %v710
      %v1976 = vpop.f32.mrf.mxu0
      %v1977 = vadd.f32 0.0, %v1976
      %v1978 = vpop.f32.mrf.mxu0
      %v1979 = vpop.f32.mrf.mxu0
      %v1980 = vadd.f32 0.0, %v1979
      %v1981 = vpop.f32.mrf.mxu0
      %1982 = vmatprep.mubr.bf16.mxu0 0
      %1983 = vmatmul.mubr.bf16.gmra.mxu0 %v713
      %v1984 = vpop.f32.mrf.mxu0
      %v1985 = vadd.f32 0.0, %v1984
      %v1986 = vpop.f32.mrf.mxu0
      %v1987 = vpop.f32.mrf.mxu0
      %v1988 = vadd.f32 0.0, %v1987
      %v1989 = vpop.f32.mrf.mxu0
      %1990 = vmatprep.mubr.bf16.mxu0 0
      %1991 = vmatmul.mubr.bf16.gmra.mxu0 %v716
      %v1992 = vpop.f32.mrf.mxu0
      %v1993 = vadd.f32 0.0, %v1992
      %v1994 = vpop.f32.mrf.mxu0
      %v1995 = vpop.f32.mrf.mxu0
      %v1996 = vadd.f32 0.0, %v1995
      %v1997 = vpop.f32.mrf.mxu0
      %1998 = vmatprep.mubr.bf16.mxu0 0
      %1999 = vmatmul.mubr.bf16.gmra.mxu0 %v719
      %v2000 = vpop.f32.mrf.mxu0
      %v2001 = vadd.f32 0.0, %v2000
      %v2002 = vpop.f32.mrf.mxu0
      %v2003 = vpop.f32.mrf.mxu0
      %v2004 = vadd.f32 0.0, %v2003
      %v2005 = vpop.f32.mrf.mxu0
      %2006 = vmatprep.mubr.bf16.mxu0 0
      %2007 = vmatmul.mubr.bf16.gmra.mxu0 %v722
      %v2008 = vpop.f32.mrf.mxu0
      %v2009 = vadd.f32 0.0, %v2008
      %v2010 = vpop.f32.mrf.mxu0
      %v2011 = vpop.f32.mrf.mxu0
      %v2012 = vadd.f32 0.0, %v2011
      %v2013 = vpop.f32.mrf.mxu0
      %2014 = vmatprep.mubr.bf16.mxu0 0
      %2015 = vmatmul.mubr.bf16.gmra.mxu0 %v725
      %v2016 = vpop.f32.mrf.mxu0
      %v2017 = vadd.f32 0.0, %v2016
      %v2018 = vpop.f32.mrf.mxu0
      %v2019 = vpop.f32.mrf.mxu0
      %v2020 = vadd.f32 0.0, %v2019
      %v2021 = vpop.f32.mrf.mxu0
      %2022 = vmatprep.mubr.bf16.mxu0 0
      %2023 = vmatmul.mubr.bf16.gmra.mxu0 %v728
      %v2024 = vpop.f32.mrf.mxu0
      %v2025 = vadd.f32 0.0, %v2024
      %v2026 = vpop.f32.mrf.mxu0
      %v2027 = vpop.f32.mrf.mxu0
      %v2028 = vadd.f32 0.0, %v2027
      %v2029 = vpop.f32.mrf.mxu0
      %2030 = vmatprep.mubr.bf16.mxu0 0
      %2031 = vmatmul.mubr.bf16.gmra.mxu0 %v731
      %v2032 = vpop.f32.mrf.mxu0
      %v2033 = vadd.f32 0.0, %v2032
      %v2034 = vpop.f32.mrf.mxu0
      %v2035 = vpop.f32.mrf.mxu0
      %v2036 = vadd.f32 0.0, %v2035
      %v2037 = vpop.f32.mrf.mxu0
      %2038 = vmatprep.mubr.bf16.mxu0 0
      %2039 = vmatmul.mubr.bf16.gmra.mxu0 %v734
      %v2040 = vpop.f32.mrf.mxu0
      %v2041 = vadd.f32 0.0, %v2040
      %v2042 = vpop.f32.mrf.mxu0
      %v2043 = vpop.f32.mrf.mxu0
      %v2044 = vadd.f32 0.0, %v2043
      %v2045 = vpop.f32.mrf.mxu0
      %2046 = vmatprep.mubr.bf16.mxu0 0
      %2047 = vmatmul.mubr.bf16.gmra.mxu0 %v737
      %v2048 = vpop.f32.mrf.mxu0
      %v2049 = vadd.f32 0.0, %v2048
      %v2050 = vpop.f32.mrf.mxu0
      %v2051 = vpop.f32.mrf.mxu0
      %v2052 = vadd.f32 0.0, %v2051
      %v2053 = vpop.f32.mrf.mxu0
      %2054 = vmatprep.mubr.bf16.mxu0 0
      %2055 = vmatmul.mubr.bf16.gmra.mxu0 %v1282
      %v2056 = vpop.f32.mrf.mxu0
      %v2057 = vadd.f32 0.0, %v2056
      %v2058 = vpop.f32.mrf.mxu0
      %v2059 = vpop.f32.mrf.mxu0
      %v2060 = vadd.f32 0.0, %v2059
      %v2061 = vpop.f32.mrf.mxu0
      %2062 = vmatprep.mubr.bf16.mxu0 0
      %2063 = vmatmul.mubr.bf16.gmra.mxu0 %v1905
      %v2064 = vpop.f32.mrf.mxu0
      %v2065 = vadd.f32 0.0, %v2064
      %v2066 = vpop.f32.mrf.mxu0
      %v2067 = vpop.f32.mrf.mxu0
      %v2068 = vadd.f32 0.0, %v2067
      %v2069 = vpop.f32.mrf.mxu0
      %2070 = vdwg.mxu0
      %v2071 = vadd.f32 %v1869, %v1945
      %v2072 = vadd.f32 %v1870, %v1948
      %v2073 = vadd.f32 %v1871, %v1953
      %v2074 = vadd.f32 %v1872, %v1956
      %v2075 = vadd.f32 %v1873, %v1961
      %v2076 = vadd.f32 %v1874, %v1964
      %v2077 = vadd.f32 %v1875, %v1969
      %v2078 = vadd.f32 %v1876, %v1972
      %v2079 = vadd.f32 %v1877, %v1977
      %v2080 = vadd.f32 %v1878, %v1980
      %v2081 = vadd.f32 %v1879, %v1985
      %v2082 = vadd.f32 %v1880, %v1988
      %v2083 = vadd.f32 %v1881, %v1993
      %v2084 = vadd.f32 %v1882, %v1996
      %v2085 = vadd.f32 %v1883, %v2001
      %v2086 = vadd.f32 %v1884, %v2004
      %v2087 = vadd.f32 %v1885, %v2009
      %v2088 = vadd.f32 %v1886, %v2012
      %v2089 = vadd.f32 %v1887, %v2017
      %v2090 = vadd.f32 %v1888, %v2020
      %v2091 = vadd.f32 %v1889, %v2025
      %v2092 = vadd.f32 %v1890, %v2028
      %v2093 = vadd.f32 %v1891, %v2033
      %v2094 = vadd.f32 %v1892, %v2036
      %v2095 = vadd.f32 %v1893, %v2041
      %v2096 = vadd.f32 %v1894, %v2044
      %v2097 = vadd.f32 %v1895, %v2049
      %v2098 = vadd.f32 %v1896, %v2052
      %v2099 = vadd.f32 %v1897, %v2057
      %v2100 = vadd.f32 %v1898, %v2060
      %v2101 = vadd.f32 %v1899, %v2065
      %v2102 = vadd.f32 %v1900, %v2068
      %v2106 = vrot.slane %v278, 1
      %v2107 = vrot.slane %v279, 1
      %v2108 = vsel %vm346, %v2106, %v2107
      %v2109 = vrot.slane %v280, 1
      %v2110 = vsel %vm346, %v2107, %v2109
      %v2113 = vpack.c.bf16 %v2110, %v2108
      %s2114 = scalar_lea.vmem %s1, 14
      %v2115 = vld [vmem:[%s2114] sm:$0x3]
      %v2117 = vsel %vm477, %v2113, 0
      %v2120 = vsel %vm526, %v2115, 0
      %2122 = vmatprep.subr.bf16.mxu0 0
      %2123 = vmatpush1.bf16.msra.mxu0 0
      %2124 = vmatprep.subr.bf16.mxu0 0
      %2125 = vmatpush1.bf16.msra.mxu0 0
      %2126 = vmatprep.subr.bf16.mxu0 0
      %2127 = vmatpush1.bf16.msra.mxu0 0
      %2128 = vmatprep.subr.bf16.mxu0 0
      %2129 = vmatpush1.bf16.msra.mxu0 0
      %2130 = vmatprep.subr.bf16.mxu0 0
      %2131 = vmatpush1.bf16.msra.mxu0 0
      %2132 = vmatprep.subr.bf16.mxu0 0
      %2133 = vmatpush1.bf16.msra.mxu0 0
      %2134 = vmatprep.subr.bf16.mxu0 0
      %2135 = vmatpush1.bf16.msra.mxu0 0
      %2136 = vmatprep.subr.bf16.mxu0 0
      %2137 = vmatpush1.bf16.msra.mxu0 %v2120
      %2138 = vmatprep.subr.bf16.mxu0 0
      %2139 = vmatpush2.bf16.msra.mxu0 0
      %2140 = vmatprep.subr.bf16.mxu0 0
      %2141 = vmatpush2.bf16.msra.mxu0 0
      %2142 = vmatprep.subr.bf16.mxu0 0
      %2143 = vmatpush2.bf16.msra.mxu0 0
      %2144 = vmatprep.subr.bf16.mxu0 0
      %2145 = vmatpush2.bf16.msra.mxu0 0
      %2146 = vmatprep.subr.bf16.mxu0 0
      %2147 = vmatpush2.bf16.msra.mxu0 0
      %2148 = vmatprep.subr.bf16.mxu0 0
      %2149 = vmatpush2.bf16.msra.mxu0 0
      %2150 = vmatprep.subr.bf16.mxu0 0
      %2151 = vmatpush2.bf16.msra.mxu0 0
      %2152 = vmatprep.subr.bf16.mxu0 0
      %2153 = vmatpush2.bf16.msra.mxu0 0
      %2154 = vmatprep.mubr.bf16.mxu0 0
      %2155 = vmatmul.mubr.bf16.gmra.mxu0 %v485
      %v2156 = vpop.f32.mrf.mxu0
      %v2157 = vadd.f32 0.0, %v2156
      %v2158 = vpop.f32.mrf.mxu0
      %v2159 = vpop.f32.mrf.mxu0
      %v2160 = vadd.f32 0.0, %v2159
      %v2161 = vpop.f32.mrf.mxu0
      %2162 = vmatprep.mubr.bf16.mxu0 0
      %2163 = vmatmul.mubr.bf16.gmra.mxu0 %v488
      %v2164 = vpop.f32.mrf.mxu0
      %v2165 = vadd.f32 0.0, %v2164
      %v2166 = vpop.f32.mrf.mxu0
      %v2167 = vpop.f32.mrf.mxu0
      %v2168 = vadd.f32 0.0, %v2167
      %v2169 = vpop.f32.mrf.mxu0
      %2170 = vmatprep.mubr.bf16.mxu0 0
      %2171 = vmatmul.mubr.bf16.gmra.mxu0 %v491
      %v2172 = vpop.f32.mrf.mxu0
      %v2173 = vadd.f32 0.0, %v2172
      %v2174 = vpop.f32.mrf.mxu0
      %v2175 = vpop.f32.mrf.mxu0
      %v2176 = vadd.f32 0.0, %v2175
      %v2177 = vpop.f32.mrf.mxu0
      %2178 = vmatprep.mubr.bf16.mxu0 0
      %2179 = vmatmul.mubr.bf16.gmra.mxu0 %v494
      %v2180 = vpop.f32.mrf.mxu0
      %v2181 = vadd.f32 0.0, %v2180
      %v2182 = vpop.f32.mrf.mxu0
      %v2183 = vpop.f32.mrf.mxu0
      %v2184 = vadd.f32 0.0, %v2183
      %v2185 = vpop.f32.mrf.mxu0
      %2186 = vmatprep.mubr.bf16.mxu0 0
      %2187 = vmatmul.mubr.bf16.gmra.mxu0 %v497
      %v2188 = vpop.f32.mrf.mxu0
      %v2189 = vadd.f32 0.0, %v2188
      %v2190 = vpop.f32.mrf.mxu0
      %v2191 = vpop.f32.mrf.mxu0
      %v2192 = vadd.f32 0.0, %v2191
      %v2193 = vpop.f32.mrf.mxu0
      %2194 = vmatprep.mubr.bf16.mxu0 0
      %2195 = vmatmul.mubr.bf16.gmra.mxu0 %v500
      %v2196 = vpop.f32.mrf.mxu0
      %v2197 = vadd.f32 0.0, %v2196
      %v2198 = vpop.f32.mrf.mxu0
      %v2199 = vpop.f32.mrf.mxu0
      %v2200 = vadd.f32 0.0, %v2199
      %v2201 = vpop.f32.mrf.mxu0
      %2202 = vmatprep.mubr.bf16.mxu0 0
      %2203 = vmatmul.mubr.bf16.gmra.mxu0 %v503
      %v2204 = vpop.f32.mrf.mxu0
      %v2205 = vadd.f32 0.0, %v2204
      %v2206 = vpop.f32.mrf.mxu0
      %v2207 = vpop.f32.mrf.mxu0
      %v2208 = vadd.f32 0.0, %v2207
      %v2209 = vpop.f32.mrf.mxu0
      %2210 = vmatprep.mubr.bf16.mxu0 0
      %2211 = vmatmul.mubr.bf16.gmra.mxu0 %v506
      %v2212 = vpop.f32.mrf.mxu0
      %v2213 = vadd.f32 0.0, %v2212
      %v2214 = vpop.f32.mrf.mxu0
      %v2215 = vpop.f32.mrf.mxu0
      %v2216 = vadd.f32 0.0, %v2215
      %v2217 = vpop.f32.mrf.mxu0
      %2218 = vmatprep.mubr.bf16.mxu0 0
      %2219 = vmatmul.mubr.bf16.gmra.mxu0 %v509
      %v2220 = vpop.f32.mrf.mxu0
      %v2221 = vadd.f32 0.0, %v2220
      %v2222 = vpop.f32.mrf.mxu0
      %v2223 = vpop.f32.mrf.mxu0
      %v2224 = vadd.f32 0.0, %v2223
      %v2225 = vpop.f32.mrf.mxu0
      %2226 = vmatprep.mubr.bf16.mxu0 0
      %2227 = vmatmul.mubr.bf16.gmra.mxu0 %v512
      %v2228 = vpop.f32.mrf.mxu0
      %v2229 = vadd.f32 0.0, %v2228
      %v2230 = vpop.f32.mrf.mxu0
      %v2231 = vpop.f32.mrf.mxu0
      %v2232 = vadd.f32 0.0, %v2231
      %v2233 = vpop.f32.mrf.mxu0
      %2234 = vmatprep.mubr.bf16.mxu0 0
      %2235 = vmatmul.mubr.bf16.gmra.mxu0 %v515
      %v2236 = vpop.f32.mrf.mxu0
      %v2237 = vadd.f32 0.0, %v2236
      %v2238 = vpop.f32.mrf.mxu0
      %v2239 = vpop.f32.mrf.mxu0
      %v2240 = vadd.f32 0.0, %v2239
      %v2241 = vpop.f32.mrf.mxu0
      %2242 = vmatprep.mubr.bf16.mxu0 0
      %2243 = vmatmul.mubr.bf16.gmra.mxu0 %v518
      %v2244 = vpop.f32.mrf.mxu0
      %v2245 = vadd.f32 0.0, %v2244
      %v2246 = vpop.f32.mrf.mxu0
      %v2247 = vpop.f32.mrf.mxu0
      %v2248 = vadd.f32 0.0, %v2247
      %v2249 = vpop.f32.mrf.mxu0
      %2250 = vmatprep.mubr.bf16.mxu0 0
      %2251 = vmatmul.mubr.bf16.gmra.mxu0 %v521
      %v2252 = vpop.f32.mrf.mxu0
      %v2253 = vadd.f32 0.0, %v2252
      %v2254 = vpop.f32.mrf.mxu0
      %v2255 = vpop.f32.mrf.mxu0
      %v2256 = vadd.f32 0.0, %v2255
      %v2257 = vpop.f32.mrf.mxu0
      %2258 = vmatprep.mubr.bf16.mxu0 0
      %2259 = vmatmul.mubr.bf16.gmra.mxu0 %v524
      %v2260 = vpop.f32.mrf.mxu0
      %v2261 = vadd.f32 0.0, %v2260
      %v2262 = vpop.f32.mrf.mxu0
      %v2263 = vpop.f32.mrf.mxu0
      %v2264 = vadd.f32 0.0, %v2263
      %v2265 = vpop.f32.mrf.mxu0
      %2266 = vmatprep.mubr.bf16.mxu0 0
      %2267 = vmatmul.mubr.bf16.gmra.mxu0 %v1494
      %v2268 = vpop.f32.mrf.mxu0
      %v2269 = vadd.f32 0.0, %v2268
      %v2270 = vpop.f32.mrf.mxu0
      %v2271 = vpop.f32.mrf.mxu0
      %v2272 = vadd.f32 0.0, %v2271
      %v2273 = vpop.f32.mrf.mxu0
      %2274 = vmatprep.mubr.bf16.mxu0 0
      %2275 = vmatmul.mubr.bf16.gmra.mxu0 %v2117
      %v2276 = vpop.f32.mrf.mxu0
      %v2277 = vadd.f32 0.0, %v2276
      %v2278 = vpop.f32.mrf.mxu0
      %v2279 = vpop.f32.mrf.mxu0
      %v2280 = vadd.f32 0.0, %v2279
      %v2281 = vpop.f32.mrf.mxu0
      %2282 = vdwg.mxu0
      %v2283 = vadd.f32 %v2071, %v2157
      %v2284 = vadd.f32 %v2072, %v2160
      %v2285 = vadd.f32 %v2073, %v2165
      %v2286 = vadd.f32 %v2074, %v2168
      %v2287 = vadd.f32 %v2075, %v2173
      %v2288 = vadd.f32 %v2076, %v2176
      %v2289 = vadd.f32 %v2077, %v2181
      %v2290 = vadd.f32 %v2078, %v2184
      %v2291 = vadd.f32 %v2079, %v2189
      %v2292 = vadd.f32 %v2080, %v2192
      %v2293 = vadd.f32 %v2081, %v2197
      %v2294 = vadd.f32 %v2082, %v2200
      %v2295 = vadd.f32 %v2083, %v2205
      %v2296 = vadd.f32 %v2084, %v2208
      %v2297 = vadd.f32 %v2085, %v2213
      %v2298 = vadd.f32 %v2086, %v2216
      %v2299 = vadd.f32 %v2087, %v2221
      %v2300 = vadd.f32 %v2088, %v2224
      %v2301 = vadd.f32 %v2089, %v2229
      %v2302 = vadd.f32 %v2090, %v2232
      %v2303 = vadd.f32 %v2091, %v2237
      %v2304 = vadd.f32 %v2092, %v2240
      %v2305 = vadd.f32 %v2093, %v2245
      %v2306 = vadd.f32 %v2094, %v2248
      %v2307 = vadd.f32 %v2095, %v2253
      %v2308 = vadd.f32 %v2096, %v2256
      %v2309 = vadd.f32 %v2097, %v2261
      %v2310 = vadd.f32 %v2098, %v2264
      %v2311 = vadd.f32 %v2099, %v2269
      %v2312 = vadd.f32 %v2100, %v2272
      %v2313 = vadd.f32 %v2101, %v2277
      %v2314 = vadd.f32 %v2102, %v2280
      %v2315 = vrot.slane %v278, 2
      %v2316 = vrot.slane %v279, 2
      %v2317 = vsel %vm903, %v2315, %v2316
      %v2318 = vrot.slane %v280, 2
      %v2319 = vsel %vm903, %v2316, %v2318
      %v2322 = vpack.c.bf16 %v2319, %v2317
      %s2323 = scalar_lea.vmem %s1, 16
      %v2324 = vld [vmem:[%s2323] sm:$0x3]
      %v2326 = vsel %vm477, %v2322, 0
      %v2329 = vsel %vm526, %v2324, 0
      %2331 = vmatprep.subr.bf16.mxu0 0
      %2332 = vmatpush1.bf16.msra.mxu0 0
      %2333 = vmatprep.subr.bf16.mxu0 0
      %2334 = vmatpush1.bf16.msra.mxu0 0
      %2335 = vmatprep.subr.bf16.mxu0 0
      %2336 = vmatpush1.bf16.msra.mxu0 0
      %2337 = vmatprep.subr.bf16.mxu0 0
      %2338 = vmatpush1.bf16.msra.mxu0 0
      %2339 = vmatprep.subr.bf16.mxu0 0
      %2340 = vmatpush1.bf16.msra.mxu0 0
      %2341 = vmatprep.subr.bf16.mxu0 0
      %2342 = vmatpush1.bf16.msra.mxu0 0
      %2343 = vmatprep.subr.bf16.mxu0 0
      %2344 = vmatpush1.bf16.msra.mxu0 0
      %2345 = vmatprep.subr.bf16.mxu0 0
      %2346 = vmatpush1.bf16.msra.mxu0 %v2329
      %2347 = vmatprep.subr.bf16.mxu0 0
      %2348 = vmatpush2.bf16.msra.mxu0 0
      %2349 = vmatprep.subr.bf16.mxu0 0
      %2350 = vmatpush2.bf16.msra.mxu0 0
      %2351 = vmatprep.subr.bf16.mxu0 0
      %2352 = vmatpush2.bf16.msra.mxu0 0
      %2353 = vmatprep.subr.bf16.mxu0 0
      %2354 = vmatpush2.bf16.msra.mxu0 0
      %2355 = vmatprep.subr.bf16.mxu0 0
      %2356 = vmatpush2.bf16.msra.mxu0 0
      %2357 = vmatprep.subr.bf16.mxu0 0
      %2358 = vmatpush2.bf16.msra.mxu0 0
      %2359 = vmatprep.subr.bf16.mxu0 0
      %2360 = vmatpush2.bf16.msra.mxu0 0
      %2361 = vmatprep.subr.bf16.mxu0 0
      %2362 = vmatpush2.bf16.msra.mxu0 0
      %2363 = vmatprep.mubr.bf16.mxu0 0
      %2364 = vmatmul.mubr.bf16.gmra.mxu0 %v1041
      %v2365 = vpop.f32.mrf.mxu0
      %v2366 = vadd.f32 0.0, %v2365
      %v2367 = vpop.f32.mrf.mxu0
      %v2368 = vpop.f32.mrf.mxu0
      %v2369 = vadd.f32 0.0, %v2368
      %v2370 = vpop.f32.mrf.mxu0
      %2371 = vmatprep.mubr.bf16.mxu0 0
      %2372 = vmatmul.mubr.bf16.gmra.mxu0 %v1044
      %v2373 = vpop.f32.mrf.mxu0
      %v2374 = vadd.f32 0.0, %v2373
      %v2375 = vpop.f32.mrf.mxu0
      %v2376 = vpop.f32.mrf.mxu0
      %v2377 = vadd.f32 0.0, %v2376
      %v2378 = vpop.f32.mrf.mxu0
      %2379 = vmatprep.mubr.bf16.mxu0 0
      %2380 = vmatmul.mubr.bf16.gmra.mxu0 %v1047
      %v2381 = vpop.f32.mrf.mxu0
      %v2382 = vadd.f32 0.0, %v2381
      %v2383 = vpop.f32.mrf.mxu0
      %v2384 = vpop.f32.mrf.mxu0
      %v2385 = vadd.f32 0.0, %v2384
      %v2386 = vpop.f32.mrf.mxu0
      %2387 = vmatprep.mubr.bf16.mxu0 0
      %2388 = vmatmul.mubr.bf16.gmra.mxu0 %v1050
      %v2389 = vpop.f32.mrf.mxu0
      %v2390 = vadd.f32 0.0, %v2389
      %v2391 = vpop.f32.mrf.mxu0
      %v2392 = vpop.f32.mrf.mxu0
      %v2393 = vadd.f32 0.0, %v2392
      %v2394 = vpop.f32.mrf.mxu0
      %2395 = vmatprep.mubr.bf16.mxu0 0
      %2396 = vmatmul.mubr.bf16.gmra.mxu0 %v1053
      %v2397 = vpop.f32.mrf.mxu0
      %v2398 = vadd.f32 0.0, %v2397
      %v2399 = vpop.f32.mrf.mxu0
      %v2400 = vpop.f32.mrf.mxu0
      %v2401 = vadd.f32 0.0, %v2400
      %v2402 = vpop.f32.mrf.mxu0
      %2403 = vmatprep.mubr.bf16.mxu0 0
      %2404 = vmatmul.mubr.bf16.gmra.mxu0 %v1056
      %v2405 = vpop.f32.mrf.mxu0
      %v2406 = vadd.f32 0.0, %v2405
      %v2407 = vpop.f32.mrf.mxu0
      %v2408 = vpop.f32.mrf.mxu0
      %v2409 = vadd.f32 0.0, %v2408
      %v2410 = vpop.f32.mrf.mxu0
      %2411 = vmatprep.mubr.bf16.mxu0 0
      %2412 = vmatmul.mubr.bf16.gmra.mxu0 %v1059
      %v2413 = vpop.f32.mrf.mxu0
      %v2414 = vadd.f32 0.0, %v2413
      %v2415 = vpop.f32.mrf.mxu0
      %v2416 = vpop.f32.mrf.mxu0
      %v2417 = vadd.f32 0.0, %v2416
      %v2418 = vpop.f32.mrf.mxu0
      %2419 = vmatprep.mubr.bf16.mxu0 0
      %2420 = vmatmul.mubr.bf16.gmra.mxu0 %v1062
      %v2421 = vpop.f32.mrf.mxu0
      %v2422 = vadd.f32 0.0, %v2421
      %v2423 = vpop.f32.mrf.mxu0
      %v2424 = vpop.f32.mrf.mxu0
      %v2425 = vadd.f32 0.0, %v2424
      %v2426 = vpop.f32.mrf.mxu0
      %2427 = vmatprep.mubr.bf16.mxu0 0
      %2428 = vmatmul.mubr.bf16.gmra.mxu0 %v1065
      %v2429 = vpop.f32.mrf.mxu0
      %v2430 = vadd.f32 0.0, %v2429
      %v2431 = vpop.f32.mrf.mxu0
      %v2432 = vpop.f32.mrf.mxu0
      %v2433 = vadd.f32 0.0, %v2432
      %v2434 = vpop.f32.mrf.mxu0
      %2435 = vmatprep.mubr.bf16.mxu0 0
      %2436 = vmatmul.mubr.bf16.gmra.mxu0 %v1068
      %v2437 = vpop.f32.mrf.mxu0
      %v2438 = vadd.f32 0.0, %v2437
      %v2439 = vpop.f32.mrf.mxu0
      %v2440 = vpop.f32.mrf.mxu0
      %v2441 = vadd.f32 0.0, %v2440
      %v2442 = vpop.f32.mrf.mxu0
      %2443 = vmatprep.mubr.bf16.mxu0 0
      %2444 = vmatmul.mubr.bf16.gmra.mxu0 %v1071
      %v2445 = vpop.f32.mrf.mxu0
      %v2446 = vadd.f32 0.0, %v2445
      %v2447 = vpop.f32.mrf.mxu0
      %v2448 = vpop.f32.mrf.mxu0
      %v2449 = vadd.f32 0.0, %v2448
      %v2450 = vpop.f32.mrf.mxu0
      %2451 = vmatprep.mubr.bf16.mxu0 0
      %2452 = vmatmul.mubr.bf16.gmra.mxu0 %v1074
      %v2453 = vpop.f32.mrf.mxu0
      %v2454 = vadd.f32 0.0, %v2453
      %v2455 = vpop.f32.mrf.mxu0
      %v2456 = vpop.f32.mrf.mxu0
      %v2457 = vadd.f32 0.0, %v2456
      %v2458 = vpop.f32.mrf.mxu0
      %2459 = vmatprep.mubr.bf16.mxu0 0
      %2460 = vmatmul.mubr.bf16.gmra.mxu0 %v1077
      %v2461 = vpop.f32.mrf.mxu0
      %v2462 = vadd.f32 0.0, %v2461
      %v2463 = vpop.f32.mrf.mxu0
      %v2464 = vpop.f32.mrf.mxu0
      %v2465 = vadd.f32 0.0, %v2464
      %v2466 = vpop.f32.mrf.mxu0
      %2467 = vmatprep.mubr.bf16.mxu0 0
      %2468 = vmatmul.mubr.bf16.gmra.mxu0 %v1080
      %v2469 = vpop.f32.mrf.mxu0
      %v2470 = vadd.f32 0.0, %v2469
      %v2471 = vpop.f32.mrf.mxu0
      %v2472 = vpop.f32.mrf.mxu0
      %v2473 = vadd.f32 0.0, %v2472
      %v2474 = vpop.f32.mrf.mxu0
      %2475 = vmatprep.mubr.bf16.mxu0 0
      %2476 = vmatmul.mubr.bf16.gmra.mxu0 %v1703
      %v2477 = vpop.f32.mrf.mxu0
      %v2478 = vadd.f32 0.0, %v2477
      %v2479 = vpop.f32.mrf.mxu0
      %v2480 = vpop.f32.mrf.mxu0
      %v2481 = vadd.f32 0.0, %v2480
      %v2482 = vpop.f32.mrf.mxu0
      %2483 = vmatprep.mubr.bf16.mxu0 0
      %2484 = vmatmul.mubr.bf16.gmra.mxu0 %v2326
      %v2485 = vpop.f32.mrf.mxu0
      %v2486 = vadd.f32 0.0, %v2485
      %v2487 = vpop.f32.mrf.mxu0
      %v2488 = vpop.f32.mrf.mxu0
      %v2489 = vadd.f32 0.0, %v2488
      %v2490 = vpop.f32.mrf.mxu0
      %2491 = vdwg.mxu0
      %v2492 = vadd.f32 %v2283, %v2366
      %v2493 = vadd.f32 %v2284, %v2369
      %v2494 = vadd.f32 %v2285, %v2374
      %v2495 = vadd.f32 %v2286, %v2377
      %v2496 = vadd.f32 %v2287, %v2382
      %v2497 = vadd.f32 %v2288, %v2385
      %v2498 = vadd.f32 %v2289, %v2390
      %v2499 = vadd.f32 %v2290, %v2393
      %v2500 = vadd.f32 %v2291, %v2398
      %v2501 = vadd.f32 %v2292, %v2401
      %v2502 = vadd.f32 %v2293, %v2406
      %v2503 = vadd.f32 %v2294, %v2409
      %v2504 = vadd.f32 %v2295, %v2414
      %v2505 = vadd.f32 %v2296, %v2417
      %v2506 = vadd.f32 %v2297, %v2422
      %v2507 = vadd.f32 %v2298, %v2425
      %v2508 = vadd.f32 %v2299, %v2430
      %v2509 = vadd.f32 %v2300, %v2433
      %v2510 = vadd.f32 %v2301, %v2438
      %v2511 = vadd.f32 %v2302, %v2441
      %v2512 = vadd.f32 %v2303, %v2446
      %v2513 = vadd.f32 %v2304, %v2449
      %v2514 = vadd.f32 %v2305, %v2454
      %v2515 = vadd.f32 %v2306, %v2457
      %v2516 = vadd.f32 %v2307, %v2462
      %v2517 = vadd.f32 %v2308, %v2465
      %v2518 = vadd.f32 %v2309, %v2470
      %v2519 = vadd.f32 %v2310, %v2473
      %v2520 = vadd.f32 %v2311, %v2478
      %v2521 = vadd.f32 %v2312, %v2481
      %v2522 = vadd.f32 %v2313, %v2486
      %v2523 = vadd.f32 %v2314, %v2489
      %v2524 = vld [vmem:[%s2] sm:$0x1]
      %v2526 = vlaneseq
      %v2527 = vshrl.u32 %v2526, 7
      %v2528 = vsub.s32 0, %v2527
      %v2529 = vrot.slane %v2524, %v2528
      %v2531 = vadd.f32 %v2492, %v2529
      %v2532 = vadd.f32 %v2493, %v2529
      %v2533 = vadd.f32 %v2494, %v2529
      %v2534 = vadd.f32 %v2495, %v2529
      %v2535 = vadd.f32 %v2496, %v2529
      %v2536 = vadd.f32 %v2497, %v2529
      %v2537 = vadd.f32 %v2498, %v2529
      %v2538 = vadd.f32 %v2499, %v2529
      %v2539 = vadd.f32 %v2500, %v2529
      %v2540 = vadd.f32 %v2501, %v2529
      %v2541 = vadd.f32 %v2502, %v2529
      %v2542 = vadd.f32 %v2503, %v2529
      %v2543 = vadd.f32 %v2504, %v2529
      %v2544 = vadd.f32 %v2505, %v2529
      %v2545 = vadd.f32 %v2506, %v2529
      %v2546 = vadd.f32 %v2507, %v2529
      %v2547 = vadd.f32 %v2508, %v2529
      %v2548 = vadd.f32 %v2509, %v2529
      %v2549 = vadd.f32 %v2510, %v2529
      %v2550 = vadd.f32 %v2511, %v2529
      %v2551 = vadd.f32 %v2512, %v2529
      %v2552 = vadd.f32 %v2513, %v2529
      %v2553 = vadd.f32 %v2514, %v2529
      %v2554 = vadd.f32 %v2515, %v2529
      %v2555 = vadd.f32 %v2516, %v2529
      %v2556 = vadd.f32 %v2517, %v2529
      %v2557 = vadd.f32 %v2518, %v2529
      %v2558 = vadd.f32 %v2519, %v2529
      %v2559 = vadd.f32 %v2520, %v2529
      %v2560 = vadd.f32 %v2521, %v2529
      %v2561 = vadd.f32 %v2522, %v2529
      %v2562 = vadd.f32 %v2523, %v2529
      %v2563 = vmax.f32 %v2531, 0.0
      %v2564 = vmax.f32 %v2532, 0.0
      %v2565 = vmax.f32 %v2533, 0.0
      %v2566 = vmax.f32 %v2534, 0.0
      %v2567 = vmax.f32 %v2535, 0.0
      %v2568 = vmax.f32 %v2536, 0.0
      %v2569 = vmax.f32 %v2537, 0.0
      %v2570 = vmax.f32 %v2538, 0.0
      %v2571 = vmax.f32 %v2539, 0.0
      %v2572 = vmax.f32 %v2540, 0.0
      %v2573 = vmax.f32 %v2541, 0.0
      %v2574 = vmax.f32 %v2542, 0.0
      %v2575 = vmax.f32 %v2543, 0.0
      %v2576 = vmax.f32 %v2544, 0.0
      %v2577 = vmax.f32 %v2545, 0.0
      %v2578 = vmax.f32 %v2546, 0.0
      %v2579 = vmax.f32 %v2547, 0.0
      %v2580 = vmax.f32 %v2548, 0.0
      %v2581 = vmax.f32 %v2549, 0.0
      %v2582 = vmax.f32 %v2550, 0.0
      %v2583 = vmax.f32 %v2551, 0.0
      %v2584 = vmax.f32 %v2552, 0.0
      %v2585 = vmax.f32 %v2553, 0.0
      %v2586 = vmax.f32 %v2554, 0.0
      %v2587 = vmax.f32 %v2555, 0.0
      %v2588 = vmax.f32 %v2556, 0.0
      %v2589 = vmax.f32 %v2557, 0.0
      %v2590 = vmax.f32 %v2558, 0.0
      %v2591 = vmax.f32 %v2559, 0.0
      %v2592 = vmax.f32 %v2560, 0.0
      %v2593 = vmax.f32 %v2561, 0.0
      %v2594 = vmax.f32 %v2562, 0.0
      %v2595 = vpack.c.bf16 %v2564, %v2563
      %v2596 = vpack.c.bf16 %v2566, %v2565
      %v2597 = vpack.c.bf16 %v2568, %v2567
      %v2598 = vpack.c.bf16 %v2570, %v2569
      %v2599 = vpack.c.bf16 %v2572, %v2571
      %v2600 = vpack.c.bf16 %v2574, %v2573
      %v2601 = vpack.c.bf16 %v2576, %v2575
      %v2602 = vpack.c.bf16 %v2578, %v2577
      %v2603 = vpack.c.bf16 %v2580, %v2579
      %v2604 = vpack.c.bf16 %v2582, %v2581
      %v2605 = vpack.c.bf16 %v2584, %v2583
      %v2606 = vpack.c.bf16 %v2586, %v2585
      %v2607 = vpack.c.bf16 %v2588, %v2587
      %v2608 = vpack.c.bf16 %v2590, %v2589
      %v2609 = vpack.c.bf16 %v2592, %v2591
      %v2610 = vpack.c.bf16 %v2594, %v2593
      %v2627 = vunpack.c.l.b16 %v2595
      %v2628 = vunpack.c.h.b16 %v2595
      %v2629 = vunpack.c.l.b16 %v2596
      %v2630 = vunpack.c.h.b16 %v2596
      %v2631 = vunpack.c.l.b16 %v2597
      %v2632 = vunpack.c.h.b16 %v2597
      %v2633 = vunpack.c.l.b16 %v2598
      %v2634 = vunpack.c.h.b16 %v2598
      %v2635 = vunpack.c.l.b16 %v2599
      %v2636 = vunpack.c.h.b16 %v2599
      %v2637 = vunpack.c.l.b16 %v2600
      %v2638 = vunpack.c.h.b16 %v2600
      %v2639 = vunpack.c.l.b16 %v2601
      %v2640 = vunpack.c.h.b16 %v2601
      %v2641 = vunpack.c.l.b16 %v2602
      %v2642 = vunpack.c.h.b16 %v2602
      %v2643 = vunpack.c.l.b16 %v2603
      %v2644 = vunpack.c.h.b16 %v2603
      %v2645 = vunpack.c.l.b16 %v2604
      %v2646 = vunpack.c.h.b16 %v2604
      %v2647 = vunpack.c.l.b16 %v2605
      %v2648 = vunpack.c.h.b16 %v2605
      %v2649 = vunpack.c.l.b16 %v2606
      %v2650 = vunpack.c.h.b16 %v2606
      %v2651 = vunpack.c.l.b16 %v2607
      %v2652 = vunpack.c.h.b16 %v2607
      %v2653 = vunpack.c.l.b16 %v2608
      %v2654 = vunpack.c.h.b16 %v2608
      %v2655 = vunpack.c.l.b16 %v2609
      %v2656 = vunpack.c.h.b16 %v2609
      %v2657 = vunpack.c.l.b16 %v2610
      %v2658 = vunpack.c.h.b16 %v2610
      %v2659 = vpack.c.b16 %v2627, %v2627
      %v2660 = vpack.c.b16 %v2628, %v2628
      %v2661 = vpack.c.b16 %v2629, %v2629
      %v2662 = vpack.c.b16 %v2630, %v2630
      %v2663 = vpack.c.b16 %v2631, %v2631
      %v2664 = vpack.c.b16 %v2632, %v2632
      %v2665 = vpack.c.b16 %v2633, %v2633
      %v2666 = vpack.c.b16 %v2634, %v2634
      %v2667 = vpack.c.b16 %v2635, %v2635
      %v2668 = vpack.c.b16 %v2636, %v2636
      %v2669 = vpack.c.b16 %v2637, %v2637
      %v2670 = vpack.c.b16 %v2638, %v2638
      %v2671 = vpack.c.b16 %v2639, %v2639
      %v2672 = vpack.c.b16 %v2640, %v2640
      %v2673 = vpack.c.b16 %v2641, %v2641
      %v2674 = vpack.c.b16 %v2642, %v2642
      %v2675 = vpack.c.b16 %v2643, %v2643
      %v2676 = vpack.c.b16 %v2644, %v2644
      %v2677 = vpack.c.b16 %v2645, %v2645
      %v2678 = vpack.c.b16 %v2646, %v2646
      %v2679 = vpack.c.b16 %v2647, %v2647
      %v2680 = vpack.c.b16 %v2648, %v2648
      %v2681 = vpack.c.b16 %v2649, %v2649
      %v2682 = vpack.c.b16 %v2650, %v2650
      %v2683 = vpack.c.b16 %v2651, %v2651
      %v2684 = vpack.c.b16 %v2652, %v2652
      %v2685 = vpack.c.b16 %v2653, %v2653
      %v2686 = vpack.c.b16 %v2654, %v2654
      %v2687 = vpack.c.b16 %v2655, %v2655
      %v2688 = vpack.c.b16 %v2656, %v2656
      %v2689 = vpack.c.b16 %v2657, %v2657
      %v2690 = vpack.c.b16 %v2658, %v2658
      %vm2723 = vcmask 27648
      %2724 = vst.msk [vmem:[%s170] sm:$0xf] %vm2723, %v2659
      %2725 = vst.msk [vmem:[%s170 + $0x4] sm:$0xf] %vm2723, %v2660
      %2726 = vst.msk [vmem:[%s170 + $0x8] sm:$0xf] %vm2723, %v2661
      %2727 = vst.msk [vmem:[%s170 + $0xc] sm:$0xf] %vm2723, %v2662
      %2728 = vst.msk [vmem:[%s170 + $0x10] sm:$0xf] %vm2723, %v2663
      %2729 = vst.msk [vmem:[%s170 + $0x14] sm:$0xf] %vm2723, %v2664
      %2730 = vst.msk [vmem:[%s170 + $0x18] sm:$0xf] %vm2723, %v2665
      %2731 = vst.msk [vmem:[%s170 + $0x1c] sm:$0xf] %vm2723, %v2666
      %2732 = vst.msk [vmem:[%s170 + $0x20] sm:$0xf] %vm2723, %v2667
      %2733 = vst.msk [vmem:[%s170 + $0x24] sm:$0xf] %vm2723, %v2668
      %2734 = vst.msk [vmem:[%s170 + $0x28] sm:$0xf] %vm2723, %v2669
      %2735 = vst.msk [vmem:[%s170 + $0x2c] sm:$0xf] %vm2723, %v2670
      %2736 = vst.msk [vmem:[%s170 + $0x30] sm:$0xf] %vm2723, %v2671
      %2737 = vst.msk [vmem:[%s170 + $0x34] sm:$0xf] %vm2723, %v2672
      %2738 = vst.msk [vmem:[%s170 + $0x38] sm:$0xf] %vm2723, %v2673
      %2739 = vst.msk [vmem:[%s170 + $0x3c] sm:$0xf] %vm2723, %v2674
      %2740 = vst.msk [vmem:[%s170 + $0x40] sm:$0xf] %vm2723, %v2675
      %2741 = vst.msk [vmem:[%s170 + $0x44] sm:$0xf] %vm2723, %v2676
      %2742 = vst.msk [vmem:[%s170 + $0x48] sm:$0xf] %vm2723, %v2677
      %2743 = vst.msk [vmem:[%s170 + $0x4c] sm:$0xf] %vm2723, %v2678
      %2744 = vst.msk [vmem:[%s170 + $0x50] sm:$0xf] %vm2723, %v2679
      %2745 = vst.msk [vmem:[%s170 + $0x54] sm:$0xf] %vm2723, %v2680
      %2746 = vst.msk [vmem:[%s170 + $0x58] sm:$0xf] %vm2723, %v2681
      %2747 = vst.msk [vmem:[%s170 + $0x5c] sm:$0xf] %vm2723, %v2682
      %2748 = vst.msk [vmem:[%s170 + $0x60] sm:$0xf] %vm2723, %v2683
      %2749 = vst.msk [vmem:[%s170 + $0x64] sm:$0xf] %vm2723, %v2684
      %2750 = vst.msk [vmem:[%s170 + $0x68] sm:$0xf] %vm2723, %v2685
      %2751 = vst.msk [vmem:[%s170 + $0x6c] sm:$0xf] %vm2723, %v2686
      %2752 = vst.msk [vmem:[%s170 + $0x70] sm:$0xf] %vm2723, %v2687
      %2753 = vst.msk [vmem:[%s170 + $0x74] sm:$0xf] %vm2723, %v2688
      %2754 = vst.msk [vmem:[%s170 + $0x78] sm:$0xf] %vm2723, %v2689
      %2755 = vst.msk [vmem:[%s170 + $0x7c] sm:$0xf] %vm2723, %v2690
      %s2756 = smul.u32 32, %s14
      %p2757 = scmp.lt.s32.totalorder %s2756, 63
      %s2758 = scalar_select %p2757, %s2756, 63
      %s2759 = smul.addr %s2758, 4
      %s2760 = scalar_lea.vmem %s3, %s2759
      // Predicated region
      $region33: #{bottleneck_forward.6} parent=31 // pred_check
        %p2761 = pneg %p100
      $region34: #{bottleneck_forward.6} parent=31 // pred_check_branch
        %2763 = sbr.rel (%p2761) target = $region36
      $region35: #{bottleneck_forward.6} parent=31 // pred_region
        %s2764 = smul.u32 32, %s14
      $region36: #{bottleneck_forward.6} parent=31 // pred_fallthru
        _
    $region32: #{bottleneck_forward.6} parent=5 // pred_fallthru
      _
    %p2765 = scmp.le.s32.totalorder 2, %s9
    // Predicated region
    $region37: #{bottleneck_forward.6} parent=5 // pred_check
      %p2766 = pneg %p2765
    $region38: #{bottleneck_forward.6} parent=5 // pred_check_branch
      %2768 = sbr.rel (%p2766) target = $region40
    $region39: #{bottleneck_forward.6} parent=5 // pred_region
      %s2769 = ssub.s32 %s9, 2
      // Predicated region
      $region41: #{bottleneck_forward.6} parent=39 // pred_check
        %p2770 = pneg %p106
      $region42: #{bottleneck_forward.6} parent=39 // pred_check_branch
        %2772 = sbr.rel (%p2770) target = $region44
      $region43: #{bottleneck_forward.6} parent=39 // pred_region
        %s2773 = smul.u32 32, %s15
        %p2774 = scmp.lt.s32.totalorder %s2773, 63
        %s2775 = scalar_select %p2774, %s2773, 63
        %s2776 = smul.addr %s2775, 4
        %s2777 = scalar_lea.vmem %s3, %s2776
      $region44: #{bottleneck_forward.6} parent=39 // pred_fallthru
        _
    $region40: #{bottleneck_forward.6} parent=5 // pred_fallthru
      _
  $region6: #{bottleneck_forward.6} parent=0 // loop_footer
    %s13 = sadd.s32 1, %s9
  $region7: #{bottleneck_forward.6} parent=0 // loop_footer_branch
    %8 = sbr.rel target = $region3
  $region8: #{bottleneck_forward.6} parent=0 // loop_exit
    _

// kernel: bottleneck_forward.4
$region0: #{bottleneck_forward.4}
  #allocation0 [shape = 'u32[]', space=smem, size = 0x4, offset = 0x4, fixed_abs, tag = 'smem constant byte address 0x4 - core index']
  #allocation1 [shape = 'u32[144,128]{1,0:T(1,128)}', space=vmem, size = 0x12000, scoped, tag = 'internal scratch']
  %s0 = inlined_call_operand.vmem [shape: bf16[512,4], index: 0, kind: input, shape index: {}]
  %s1 = inlined_call_operand.vmem [shape: bf16[4,16], index: 1, kind: input, shape index: {}]
  %s2 = inlined_call_operand.vmem [shape: f32[1,16], index: 2, kind: input, shape index: {}]
  %s3 = inlined_call_operand.vmem [shape: f32[512,16], index: 3, kind: output, shape index: {}]
  %s4 = sld [smem:[#allocation0]]
  $region22: #{bottleneck_forward.4} parent=0
    _
  %s6 = ssub.s32 1, %s4
  %s7 = scalar_select 0, %s6, %s4
  // Predicated region
  $region2: #{bottleneck_forward.4} parent=0 // pred_check
    _
  $region3: #{bottleneck_forward.4} parent=0 // pred_check_branch
    %9 = sbr.rel (0) target = $region5
  $region4: #{bottleneck_forward.4} parent=0 // pred_region
    _
  $region5: #{bottleneck_forward.4} parent=0 // pred_fallthru
    _
  // Predicated region
  $region6: #{bottleneck_forward.4} parent=0 // pred_check
    _
  $region7: #{bottleneck_forward.4} parent=0 // pred_check_branch
    %11 = sbr.rel (0) target = $region9
  $region8: #{bottleneck_forward.4} parent=0 // pred_region
    _
  $region9: #{bottleneck_forward.4} parent=0 // pred_fallthru
    _
  // Predicated region
  $region10: #{bottleneck_forward.4} parent=0 // pred_check
    _
  $region11: #{bottleneck_forward.4} parent=0 // pred_check_branch
    %13 = sbr.rel (0) target = $region13
  $region12: #{bottleneck_forward.4} parent=0 // pred_region
    _
  $region13: #{bottleneck_forward.4} parent=0 // pred_fallthru
    _
  %v15 = vld [vmem:[%s0] sm:$0xf]
  %v16 = vld [vmem:[%s0 + $0x4] sm:$0xf]
  %v17 = vld [vmem:[%s0 + $0x8] sm:$0xf]
  %v18 = vld [vmem:[%s0 + $0xc] sm:$0xf]
  %v19 = vld [vmem:[%s0 + $0x10] sm:$0xf]
  %v20 = vld [vmem:[%s0 + $0x14] sm:$0xf]
  %v21 = vld [vmem:[%s0 + $0x18] sm:$0xf]
  %v22 = vld [vmem:[%s0 + $0x1c] sm:$0xf]
  %v23 = vld [vmem:[%s0 + $0x20] sm:$0xf]
  %v24 = vld [vmem:[%s0 + $0x24] sm:$0xf]
  %v25 = vld [vmem:[%s0 + $0x28] sm:$0xf]
  %v26 = vld [vmem:[%s0 + $0x2c] sm:$0xf]
  %v27 = vld [vmem:[%s0 + $0x30] sm:$0xf]
  %v28 = vld [vmem:[%s0 + $0x34] sm:$0xf]
  %v29 = vld [vmem:[%s0 + $0x38] sm:$0xf]
  %v30 = vld [vmem:[%s0 + $0x3c] sm:$0xf]
  %v31 = vld [vmem:[%s0 + $0x40] sm:$0xf]
  %v32 = vld [vmem:[%s0 + $0x44] sm:$0xf]
  %v33 = vld [vmem:[%s0 + $0x48] sm:$0xf]
  %v34 = vld [vmem:[%s0 + $0x4c] sm:$0xf]
  %v35 = vld [vmem:[%s0 + $0x50] sm:$0xf]
  %v36 = vld [vmem:[%s0 + $0x54] sm:$0xf]
  %v37 = vld [vmem:[%s0 + $0x58] sm:$0xf]
  %v38 = vld [vmem:[%s0 + $0x5c] sm:$0xf]
  %v39 = vld [vmem:[%s0 + $0x60] sm:$0xf]
  %v40 = vld [vmem:[%s0 + $0x64] sm:$0xf]
  %v41 = vld [vmem:[%s0 + $0x68] sm:$0xf]
  %v42 = vld [vmem:[%s0 + $0x6c] sm:$0xf]
  %v43 = vld [vmem:[%s0 + $0x70] sm:$0xf]
  %v44 = vld [vmem:[%s0 + $0x74] sm:$0xf]
  %v45 = vld [vmem:[%s0 + $0x78] sm:$0xf]
  %v46 = vld [vmem:[%s0 + $0x7c] sm:$0xf]
  %v47 = vld [vmem:[%s0 + $0x80] sm:$0xf]
  %v48 = vld [vmem:[%s0 + $0x84] sm:$0xf]
  %v49 = vld [vmem:[%s0 + $0x88] sm:$0xf]
  %v50 = vld [vmem:[%s0 + $0x8c] sm:$0xf]
  %v51 = vld [vmem:[%s0 + $0x90] sm:$0xf]
  %v52 = vld [vmem:[%s0 + $0x94] sm:$0xf]
  %v53 = vld [vmem:[%s0 + $0x98] sm:$0xf]
  %v54 = vld [vmem:[%s0 + $0x9c] sm:$0xf]
  %v55 = vld [vmem:[%s0 + $0xa0] sm:$0xf]
  %v56 = vld [vmem:[%s0 + $0xa4] sm:$0xf]
  %v57 = vld [vmem:[%s0 + $0xa8] sm:$0xf]
  %v58 = vld [vmem:[%s0 + $0xac] sm:$0xf]
  %v59 = vld [vmem:[%s0 + $0xb0] sm:$0xf]
  %v60 = vld [vmem:[%s0 + $0xb4] sm:$0xf]
  %v61 = vld [vmem:[%s0 + $0xb8] sm:$0xf]
  %v62 = vld [vmem:[%s0 + $0xbc] sm:$0xf]
  %v63 = vld [vmem:[%s0 + $0xc0] sm:$0xf]
  %v64 = vld [vmem:[%s0 + $0xc4] sm:$0xf]
  %v65 = vld [vmem:[%s0 + $0xc8] sm:$0xf]
  %v66 = vld [vmem:[%s0 + $0xcc] sm:$0xf]
  %v67 = vld [vmem:[%s0 + $0xd0] sm:$0xf]
  %v68 = vld [vmem:[%s0 + $0xd4] sm:$0xf]
  %v69 = vld [vmem:[%s0 + $0xd8] sm:$0xf]
  %v70 = vld [vmem:[%s0 + $0xdc] sm:$0xf]
  %v71 = vld [vmem:[%s0 + $0xe0] sm:$0xf]
  %v72 = vld [vmem:[%s0 + $0xe4] sm:$0xf]
  %v73 = vld [vmem:[%s0 + $0xe8] sm:$0xf]
  %v74 = vld [vmem:[%s0 + $0xec] sm:$0xf]
  %v75 = vld [vmem:[%s0 + $0xf0] sm:$0xf]
  %v76 = vld [vmem:[%s0 + $0xf4] sm:$0xf]
  %v77 = vld [vmem:[%s0 + $0xf8] sm:$0xf]
  %v78 = vld [vmem:[%s0 + $0xfc] sm:$0xf]
  %v79 = vld [vmem:[%s1] sm:$0x3]
  %v80 = vld [vmem:[%s2] sm:$0x1]
  %v82 = vlaneseq
  %v83 = vshrl.u32 %v82, 7
  %v84 = vsub.s32 0, %v83
  %v85 = vrot.slane %v80, %v84
  %v151 = vunpack.c.l.b16 %v15
  %v152 = vunpack.c.l.b16 %v16
  %v153 = vunpack.c.l.b16 %v17
  %v154 = vunpack.c.l.b16 %v18
  %v155 = vunpack.c.l.b16 %v19
  %v156 = vunpack.c.l.b16 %v20
  %v157 = vunpack.c.l.b16 %v21
  %v158 = vunpack.c.l.b16 %v22
  %v159 = vunpack.c.l.b16 %v23
  %v160 = vunpack.c.l.b16 %v24
  %v161 = vunpack.c.l.b16 %v25
  %v162 = vunpack.c.l.b16 %v26
  %v163 = vunpack.c.l.b16 %v27
  %v164 = vunpack.c.l.b16 %v28
  %v165 = vunpack.c.l.b16 %v29
  %v166 = vunpack.c.l.b16 %v30
  %v167 = vunpack.c.l.b16 %v31
  %v168 = vunpack.c.l.b16 %v32
  %v169 = vunpack.c.l.b16 %v33
  %v170 = vunpack.c.l.b16 %v34
  %v171 = vunpack.c.l.b16 %v35
  %v172 = vunpack.c.l.b16 %v36
  %v173 = vunpack.c.l.b16 %v37
  %v174 = vunpack.c.l.b16 %v38
  %v175 = vunpack.c.l.b16 %v39
  %v176 = vunpack.c.l.b16 %v40
  %v177 = vunpack.c.l.b16 %v41
  %v178 = vunpack.c.l.b16 %v42
  %v179 = vunpack.c.l.b16 %v43
  %v180 = vunpack.c.l.b16 %v44
  %v181 = vunpack.c.l.b16 %v45
  %v182 = vunpack.c.l.b16 %v46
  %v183 = vunpack.c.l.b16 %v47
  %v184 = vunpack.c.l.b16 %v48
  %v185 = vunpack.c.l.b16 %v49
  %v186 = vunpack.c.l.b16 %v50
  %v187 = vunpack.c.l.b16 %v51
  %v188 = vunpack.c.l.b16 %v52
  %v189 = vunpack.c.l.b16 %v53
  %v190 = vunpack.c.l.b16 %v54
  %v191 = vunpack.c.l.b16 %v55
  %v192 = vunpack.c.l.b16 %v56
  %v193 = vunpack.c.l.b16 %v57
  %v194 = vunpack.c.l.b16 %v58
  %v195 = vunpack.c.l.b16 %v59
  %v196 = vunpack.c.l.b16 %v60
  %v197 = vunpack.c.l.b16 %v61
  %v198 = vunpack.c.l.b16 %v62
  %v199 = vunpack.c.l.b16 %v63
  %v200 = vunpack.c.l.b16 %v64
  %v201 = vunpack.c.l.b16 %v65
  %v202 = vunpack.c.l.b16 %v66
  %v203 = vunpack.c.l.b16 %v67
  %v204 = vunpack.c.l.b16 %v68
  %v205 = vunpack.c.l.b16 %v69
  %v206 = vunpack.c.l.b16 %v70
  %v207 = vunpack.c.l.b16 %v71
  %v208 = vunpack.c.l.b16 %v72
  %v209 = vunpack.c.l.b16 %v73
  %v210 = vunpack.c.l.b16 %v74
  %v211 = vunpack.c.l.b16 %v75
  %v212 = vunpack.c.l.b16 %v76
  %v213 = vunpack.c.l.b16 %v77
  %v214 = vunpack.c.l.b16 %v78
  %v215 = vpack.c.b16 %v152, %v151
  %v216 = vpack.c.b16 %v154, %v153
  %v217 = vpack.c.b16 %v156, %v155
  %v218 = vpack.c.b16 %v158, %v157
  %v219 = vpack.c.b16 %v160, %v159
  %v220 = vpack.c.b16 %v162, %v161
  %v221 = vpack.c.b16 %v164, %v163
  %v222 = vpack.c.b16 %v166, %v165
  %v223 = vpack.c.b16 %v168, %v167
  %v224 = vpack.c.b16 %v170, %v169
  %v225 = vpack.c.b16 %v172, %v171
  %v226 = vpack.c.b16 %v174, %v173
  %v227 = vpack.c.b16 %v176, %v175
  %v228 = vpack.c.b16 %v178, %v177
  %v229 = vpack.c.b16 %v180, %v179
  %v230 = vpack.c.b16 %v182, %v181
  %v231 = vpack.c.b16 %v184, %v183
  %v232 = vpack.c.b16 %v186, %v185
  %v233 = vpack.c.b16 %v188, %v187
  %v234 = vpack.c.b16 %v190, %v189
  %v235 = vpack.c.b16 %v192, %v191
  %v236 = vpack.c.b16 %v194, %v193
  %v237 = vpack.c.b16 %v196, %v195
  %v238 = vpack.c.b16 %v198, %v197
  %v239 = vpack.c.b16 %v200, %v199
  %v240 = vpack.c.b16 %v202, %v201
  %v241 = vpack.c.b16 %v204, %v203
  %v242 = vpack.c.b16 %v206, %v205
  %v243 = vpack.c.b16 %v208, %v207
  %v244 = vpack.c.b16 %v210, %v209
  %v245 = vpack.c.b16 %v212, %v211
  %v246 = vpack.c.b16 %v214, %v213
  %vm247 = vcmask 31744
  %v249 = vsel %vm247, %v215, 0
  %v252 = vsel %vm247, %v216, 0
  %v255 = vsel %vm247, %v217, 0
  %v258 = vsel %vm247, %v218, 0
  %v261 = vsel %vm247, %v219, 0
  %v264 = vsel %vm247, %v220, 0
  %v267 = vsel %vm247, %v221, 0
  %v270 = vsel %vm247, %v222, 0
  %v273 = vsel %vm247, %v223, 0
  %v276 = vsel %vm247, %v224, 0
  %v279 = vsel %vm247, %v225, 0
  %v282 = vsel %vm247, %v226, 0
  %v285 = vsel %vm247, %v227, 0
  %v288 = vsel %vm247, %v228, 0
  %v291 = vsel %vm247, %v229, 0
  %v294 = vsel %vm247, %v230, 0
  %v297 = vsel %vm247, %v231, 0
  %v300 = vsel %vm247, %v232, 0
  %v303 = vsel %vm247, %v233, 0
  %v306 = vsel %vm247, %v234, 0
  %v309 = vsel %vm247, %v235, 0
  %v312 = vsel %vm247, %v236, 0
  %v315 = vsel %vm247, %v237, 0
  %v318 = vsel %vm247, %v238, 0
  %v321 = vsel %vm247, %v239, 0
  %v324 = vsel %vm247, %v240, 0
  %v327 = vsel %vm247, %v241, 0
  %v330 = vsel %vm247, %v242, 0
  %v333 = vsel %vm247, %v243, 0
  %v336 = vsel %vm247, %v244, 0
  %v339 = vsel %vm247, %v245, 0
  %v342 = vsel %vm247, %v246, 0
  %vm344 = vcmask 1041408
  %v346 = vsel %vm344, %v79, 0
  %348 = vmatprep.subr.bf16.mxu0 0
  %349 = vmatpush1.bf16.msra.mxu0 0
  %350 = vmatprep.subr.bf16.mxu0 0
  %351 = vmatpush1.bf16.msra.mxu0 0
  %352 = vmatprep.subr.bf16.mxu0 0
  %353 = vmatpush1.bf16.msra.mxu0 0
  %354 = vmatprep.subr.bf16.mxu0 0
  %355 = vmatpush1.bf16.msra.mxu0 0
  %356 = vmatprep.subr.bf16.mxu0 0
  %357 = vmatpush1.bf16.msra.mxu0 0
  %358 = vmatprep.subr.bf16.mxu0 0
  %359 = vmatpush1.bf16.msra.mxu0 0
  %360 = vmatprep.subr.bf16.mxu0 0
  %361 = vmatpush1.bf16.msra.mxu0 0
  %362 = vmatprep.subr.bf16.mxu0 0
  %363 = vmatpush1.bf16.msra.mxu0 %v346
  %364 = vmatprep.subr.bf16.mxu0 0
  %365 = vmatpush2.bf16.msra.mxu0 0
  %366 = vmatprep.subr.bf16.mxu0 0
  %367 = vmatpush2.bf16.msra.mxu0 0
  %368 = vmatprep.subr.bf16.mxu0 0
  %369 = vmatpush2.bf16.msra.mxu0 0
  %370 = vmatprep.subr.bf16.mxu0 0
  %371 = vmatpush2.bf16.msra.mxu0 0
  %372 = vmatprep.subr.bf16.mxu0 0
  %373 = vmatpush2.bf16.msra.mxu0 0
  %374 = vmatprep.subr.bf16.mxu0 0
  %375 = vmatpush2.bf16.msra.mxu0 0
  %376 = vmatprep.subr.bf16.mxu0 0
  %377 = vmatpush2.bf16.msra.mxu0 0
  %378 = vmatprep.subr.bf16.mxu0 0
  %379 = vmatpush2.bf16.msra.mxu0 0
  %380 = vmatprep.mubr.bf16.mxu0 0
  %381 = vmatmul.mubr.bf16.gmra.mxu0 %v249
  %v382 = vpop.f32.mrf.mxu0
  %v383 = vadd.f32 %v85, %v382
  %v384 = vpop.f32.mrf.mxu0
  %v385 = vpop.f32.mrf.mxu0
  %v386 = vadd.f32 %v85, %v385
  %v387 = vpop.f32.mrf.mxu0
  %388 = vmatprep.mubr.bf16.mxu0 0
  %389 = vmatmul.mubr.bf16.gmra.mxu0 %v252
  %v390 = vpop.f32.mrf.mxu0
  %v391 = vadd.f32 %v85, %v390
  %v392 = vpop.f32.mrf.mxu0
  %v393 = vpop.f32.mrf.mxu0
  %v394 = vadd.f32 %v85, %v393
  %v395 = vpop.f32.mrf.mxu0
  %396 = vmatprep.mubr.bf16.mxu0 0
  %397 = vmatmul.mubr.bf16.gmra.mxu0 %v255
  %v398 = vpop.f32.mrf.mxu0
  %v399 = vadd.f32 %v85, %v398
  %v400 = vpop.f32.mrf.mxu0
  %v401 = vpop.f32.mrf.mxu0
  %v402 = vadd.f32 %v85, %v401
  %v403 = vpop.f32.mrf.mxu0
  %404 = vmatprep.mubr.bf16.mxu0 0
  %405 = vmatmul.mubr.bf16.gmra.mxu0 %v258
  %v406 = vpop.f32.mrf.mxu0
  %v407 = vadd.f32 %v85, %v406
  %v408 = vpop.f32.mrf.mxu0
  %v409 = vpop.f32.mrf.mxu0
  %v410 = vadd.f32 %v85, %v409
  %v411 = vpop.f32.mrf.mxu0
  %412 = vmatprep.mubr.bf16.mxu0 0
  %413 = vmatmul.mubr.bf16.gmra.mxu0 %v261
  %v414 = vpop.f32.mrf.mxu0
  %v415 = vadd.f32 %v85, %v414
  %v416 = vpop.f32.mrf.mxu0
  %v417 = vpop.f32.mrf.mxu0
  %v418 = vadd.f32 %v85, %v417
  %v419 = vpop.f32.mrf.mxu0
  %420 = vmatprep.mubr.bf16.mxu0 0
  %421 = vmatmul.mubr.bf16.gmra.mxu0 %v264
  %v422 = vpop.f32.mrf.mxu0
  %v423 = vadd.f32 %v85, %v422
  %v424 = vpop.f32.mrf.mxu0
  %v425 = vpop.f32.mrf.mxu0
  %v426 = vadd.f32 %v85, %v425
  %v427 = vpop.f32.mrf.mxu0
  %428 = vmatprep.mubr.bf16.mxu0 0
  %429 = vmatmul.mubr.bf16.gmra.mxu0 %v267
  %v430 = vpop.f32.mrf.mxu0
  %v431 = vadd.f32 %v85, %v430
  %v432 = vpop.f32.mrf.mxu0
  %v433 = vpop.f32.mrf.mxu0
  %v434 = vadd.f32 %v85, %v433
  %v435 = vpop.f32.mrf.mxu0
  %436 = vmatprep.mubr.bf16.mxu0 0
  %437 = vmatmul.mubr.bf16.gmra.mxu0 %v270
  %v438 = vpop.f32.mrf.mxu0
  %v439 = vadd.f32 %v85, %v438
  %v440 = vpop.f32.mrf.mxu0
  %v441 = vpop.f32.mrf.mxu0
  %v442 = vadd.f32 %v85, %v441
  %v443 = vpop.f32.mrf.mxu0
  %444 = vmatprep.mubr.bf16.mxu0 0
  %445 = vmatmul.mubr.bf16.gmra.mxu0 %v273
  %v446 = vpop.f32.mrf.mxu0
  %v447 = vadd.f32 %v85, %v446
  %v448 = vpop.f32.mrf.mxu0
  %v449 = vpop.f32.mrf.mxu0
  %v450 = vadd.f32 %v85, %v449
  %v451 = vpop.f32.mrf.mxu0
  %452 = vmatprep.mubr.bf16.mxu0 0
  %453 = vmatmul.mubr.bf16.gmra.mxu0 %v276
  %v454 = vpop.f32.mrf.mxu0
  %v455 = vadd.f32 %v85, %v454
  %v456 = vpop.f32.mrf.mxu0
  %v457 = vpop.f32.mrf.mxu0
  %v458 = vadd.f32 %v85, %v457
  %v459 = vpop.f32.mrf.mxu0
  %460 = vmatprep.mubr.bf16.mxu0 0
  %461 = vmatmul.mubr.bf16.gmra.mxu0 %v279
  %v462 = vpop.f32.mrf.mxu0
  %v463 = vadd.f32 %v85, %v462
  %v464 = vpop.f32.mrf.mxu0
  %v465 = vpop.f32.mrf.mxu0
  %v466 = vadd.f32 %v85, %v465
  %v467 = vpop.f32.mrf.mxu0
  %468 = vmatprep.mubr.bf16.mxu0 0
  %469 = vmatmul.mubr.bf16.gmra.mxu0 %v282
  %v470 = vpop.f32.mrf.mxu0
  %v471 = vadd.f32 %v85, %v470
  %v472 = vpop.f32.mrf.mxu0
  %v473 = vpop.f32.mrf.mxu0
  %v474 = vadd.f32 %v85, %v473
  %v475 = vpop.f32.mrf.mxu0
  %476 = vmatprep.mubr.bf16.mxu0 0
  %477 = vmatmul.mubr.bf16.gmra.mxu0 %v285
  %v478 = vpop.f32.mrf.mxu0
  %v479 = vadd.f32 %v85, %v478
  %v480 = vpop.f32.mrf.mxu0
  %v481 = vpop.f32.mrf.mxu0
  %v482 = vadd.f32 %v85, %v481
  %v483 = vpop.f32.mrf.mxu0
  %484 = vmatprep.mubr.bf16.mxu0 0
  %485 = vmatmul.mubr.bf16.gmra.mxu0 %v288
  %v486 = vpop.f32.mrf.mxu0
  %v487 = vadd.f32 %v85, %v486
  %v488 = vpop.f32.mrf.mxu0
  %v489 = vpop.f32.mrf.mxu0
  %v490 = vadd.f32 %v85, %v489
  %v491 = vpop.f32.mrf.mxu0
  %492 = vmatprep.mubr.bf16.mxu0 0
  %493 = vmatmul.mubr.bf16.gmra.mxu0 %v291
  %v494 = vpop.f32.mrf.mxu0
  %v495 = vadd.f32 %v85, %v494
  %v496 = vpop.f32.mrf.mxu0
  %v497 = vpop.f32.mrf.mxu0
  %v498 = vadd.f32 %v85, %v497
  %v499 = vpop.f32.mrf.mxu0
  %500 = vmatprep.mubr.bf16.mxu0 0
  %501 = vmatmul.mubr.bf16.gmra.mxu0 %v294
  %v502 = vpop.f32.mrf.mxu0
  %v503 = vadd.f32 %v85, %v502
  %v504 = vpop.f32.mrf.mxu0
  %v505 = vpop.f32.mrf.mxu0
  %v506 = vadd.f32 %v85, %v505
  %v507 = vpop.f32.mrf.mxu0
  %508 = vmatprep.mubr.bf16.mxu0 0
  %509 = vmatmul.mubr.bf16.gmra.mxu0 %v297
  %v510 = vpop.f32.mrf.mxu0
  %v511 = vadd.f32 %v85, %v510
  %v512 = vpop.f32.mrf.mxu0
  %v513 = vpop.f32.mrf.mxu0
  %v514 = vadd.f32 %v85, %v513
  %v515 = vpop.f32.mrf.mxu0
  %516 = vmatprep.mubr.bf16.mxu0 0
  %517 = vmatmul.mubr.bf16.gmra.mxu0 %v300
  %v518 = vpop.f32.mrf.mxu0
  %v519 = vadd.f32 %v85, %v518
  %v520 = vpop.f32.mrf.mxu0
  %v521 = vpop.f32.mrf.mxu0
  %v522 = vadd.f32 %v85, %v521
  %v523 = vpop.f32.mrf.mxu0
  %524 = vmatprep.mubr.bf16.mxu0 0
  %525 = vmatmul.mubr.bf16.gmra.mxu0 %v303
  %v526 = vpop.f32.mrf.mxu0
  %v527 = vadd.f32 %v85, %v526
  %v528 = vpop.f32.mrf.mxu0
  %v529 = vpop.f32.mrf.mxu0
  %v530 = vadd.f32 %v85, %v529
  %v531 = vpop.f32.mrf.mxu0
  %532 = vmatprep.mubr.bf16.mxu0 0
  %533 = vmatmul.mubr.bf16.gmra.mxu0 %v306
  %v534 = vpop.f32.mrf.mxu0
  %v535 = vadd.f32 %v85, %v534
  %v536 = vpop.f32.mrf.mxu0
  %v537 = vpop.f32.mrf.mxu0
  %v538 = vadd.f32 %v85, %v537
  %v539 = vpop.f32.mrf.mxu0
  %540 = vmatprep.mubr.bf16.mxu0 0
  %541 = vmatmul.mubr.bf16.gmra.mxu0 %v309
  %v542 = vpop.f32.mrf.mxu0
  %v543 = vadd.f32 %v85, %v542
  %v544 = vpop.f32.mrf.mxu0
  %v545 = vpop.f32.mrf.mxu0
  %v546 = vadd.f32 %v85, %v545
  %v547 = vpop.f32.mrf.mxu0
  %548 = vmatprep.mubr.bf16.mxu0 0
  %549 = vmatmul.mubr.bf16.gmra.mxu0 %v312
  %v550 = vpop.f32.mrf.mxu0
  %v551 = vadd.f32 %v85, %v550
  %v552 = vpop.f32.mrf.mxu0
  %v553 = vpop.f32.mrf.mxu0
  %v554 = vadd.f32 %v85, %v553
  %v555 = vpop.f32.mrf.mxu0
  %556 = vmatprep.mubr.bf16.mxu0 0
  %557 = vmatmul.mubr.bf16.gmra.mxu0 %v315
  %v558 = vpop.f32.mrf.mxu0
  %v559 = vadd.f32 %v85, %v558
  %v560 = vpop.f32.mrf.mxu0
  %v561 = vpop.f32.mrf.mxu0
  %v562 = vadd.f32 %v85, %v561
  %v563 = vpop.f32.mrf.mxu0
  %564 = vmatprep.mubr.bf16.mxu0 0
  %565 = vmatmul.mubr.bf16.gmra.mxu0 %v318
  %v566 = vpop.f32.mrf.mxu0
  %v567 = vadd.f32 %v85, %v566
  %v568 = vpop.f32.mrf.mxu0
  %v569 = vpop.f32.mrf.mxu0
  %v570 = vadd.f32 %v85, %v569
  %v571 = vpop.f32.mrf.mxu0
  %572 = vmatprep.mubr.bf16.mxu0 0
  %573 = vmatmul.mubr.bf16.gmra.mxu0 %v321
  %v574 = vpop.f32.mrf.mxu0
  %v575 = vadd.f32 %v85, %v574
  %v576 = vpop.f32.mrf.mxu0
  %v577 = vpop.f32.mrf.mxu0
  %v578 = vadd.f32 %v85, %v577
  %v579 = vpop.f32.mrf.mxu0
  %580 = vmatprep.mubr.bf16.mxu0 0
  %581 = vmatmul.mubr.bf16.gmra.mxu0 %v324
  %v582 = vpop.f32.mrf.mxu0
  %v583 = vadd.f32 %v85, %v582
  %v584 = vpop.f32.mrf.mxu0
  %v585 = vpop.f32.mrf.mxu0
  %v586 = vadd.f32 %v85, %v585
  %v587 = vpop.f32.mrf.mxu0
  %588 = vmatprep.mubr.bf16.mxu0 0
  %589 = vmatmul.mubr.bf16.gmra.mxu0 %v327
  %v590 = vpop.f32.mrf.mxu0
  %v591 = vadd.f32 %v85, %v590
  %v592 = vpop.f32.mrf.mxu0
  %v593 = vpop.f32.mrf.mxu0
  %v594 = vadd.f32 %v85, %v593
  %v595 = vpop.f32.mrf.mxu0
  %596 = vmatprep.mubr.bf16.mxu0 0
  %597 = vmatmul.mubr.bf16.gmra.mxu0 %v330
  %v598 = vpop.f32.mrf.mxu0
  %v599 = vadd.f32 %v85, %v598
  %v600 = vpop.f32.mrf.mxu0
  %v601 = vpop.f32.mrf.mxu0
  %v602 = vadd.f32 %v85, %v601
  %v603 = vpop.f32.mrf.mxu0
  %604 = vmatprep.mubr.bf16.mxu0 0
  %605 = vmatmul.mubr.bf16.gmra.mxu0 %v333
  %v606 = vpop.f32.mrf.mxu0
  %v607 = vadd.f32 %v85, %v606
  %v608 = vpop.f32.mrf.mxu0
  %v609 = vpop.f32.mrf.mxu0
  %v610 = vadd.f32 %v85, %v609
  %v611 = vpop.f32.mrf.mxu0
  %612 = vmatprep.mubr.bf16.mxu0 0
  %613 = vmatmul.mubr.bf16.gmra.mxu0 %v336
  %v614 = vpop.f32.mrf.mxu0
  %v615 = vadd.f32 %v85, %v614
  %v616 = vpop.f32.mrf.mxu0
  %v617 = vpop.f32.mrf.mxu0
  %v618 = vadd.f32 %v85, %v617
  %v619 = vpop.f32.mrf.mxu0
  %620 = vmatprep.mubr.bf16.mxu0 0
  %621 = vmatmul.mubr.bf16.gmra.mxu0 %v339
  %v622 = vpop.f32.mrf.mxu0
  %v623 = vadd.f32 %v85, %v622
  %v624 = vpop.f32.mrf.mxu0
  %v625 = vpop.f32.mrf.mxu0
  %v626 = vadd.f32 %v85, %v625
  %v627 = vpop.f32.mrf.mxu0
  %628 = vmatprep.mubr.bf16.mxu0 0
  %629 = vmatmul.mubr.bf16.gmra.mxu0 %v342
  %v630 = vpop.f32.mrf.mxu0
  %v631 = vadd.f32 %v85, %v630
  %v632 = vpop.f32.mrf.mxu0
  %v633 = vpop.f32.mrf.mxu0
  %v634 = vadd.f32 %v85, %v633
  %v635 = vpop.f32.mrf.mxu0
  %636 = vdwg.mxu0
  %v637 = vmax.f32 %v383, 0.0
  %v638 = vmax.f32 %v386, 0.0
  %v639 = vmax.f32 %v391, 0.0
  %v640 = vmax.f32 %v394, 0.0
  %v641 = vmax.f32 %v399, 0.0
  %v642 = vmax.f32 %v402, 0.0
  %v643 = vmax.f32 %v407, 0.0
  %v644 = vmax.f32 %v410, 0.0
  %v645 = vmax.f32 %v415, 0.0
  %v646 = vmax.f32 %v418, 0.0
  %v647 = vmax.f32 %v423, 0.0
  %v648 = vmax.f32 %v426, 0.0
  %v649 = vmax.f32 %v431, 0.0
  %v650 = vmax.f32 %v434, 0.0
  %v651 = vmax.f32 %v439, 0.0
  %v652 = vmax.f32 %v442, 0.0
  %v653 = vmax.f32 %v447, 0.0
  %v654 = vmax.f32 %v450, 0.0
  %v655 = vmax.f32 %v455, 0.0
  %v656 = vmax.f32 %v458, 0.0
  %v657 = vmax.f32 %v463, 0.0
  %v658 = vmax.f32 %v466, 0.0
  %v659 = vmax.f32 %v471, 0.0
  %v660 = vmax.f32 %v474, 0.0
  %v661 = vmax.f32 %v479, 0.0
  %v662 = vmax.f32 %v482, 0.0
  %v663 = vmax.f32 %v487, 0.0
  %v664 = vmax.f32 %v490, 0.0
  %v665 = vmax.f32 %v495, 0.0
  %v666 = vmax.f32 %v498, 0.0
  %v667 = vmax.f32 %v503, 0.0
  %v668 = vmax.f32 %v506, 0.0
  %v669 = vmax.f32 %v511, 0.0
  %v670 = vmax.f32 %v514, 0.0
  %v671 = vmax.f32 %v519, 0.0
  %v672 = vmax.f32 %v522, 0.0
  %v673 = vmax.f32 %v527, 0.0
  %v674 = vmax.f32 %v530, 0.0
  %v675 = vmax.f32 %v535, 0.0
  %v676 = vmax.f32 %v538, 0.0
  %v677 = vmax.f32 %v543, 0.0
  %v678 = vmax.f32 %v546, 0.0
  %v679 = vmax.f32 %v551, 0.0
  %v680 = vmax.f32 %v554, 0.0
  %v681 = vmax.f32 %v559, 0.0
  %v682 = vmax.f32 %v562, 0.0
  %v683 = vmax.f32 %v567, 0.0
  %v684 = vmax.f32 %v570, 0.0
  %v685 = vmax.f32 %v575, 0.0
  %v686 = vmax.f32 %v578, 0.0
  %v687 = vmax.f32 %v583, 0.0
  %v688 = vmax.f32 %v586, 0.0
  %v689 = vmax.f32 %v591, 0.0
  %v690 = vmax.f32 %v594, 0.0
  %v691 = vmax.f32 %v599, 0.0
  %v692 = vmax.f32 %v602, 0.0
  %v693 = vmax.f32 %v607, 0.0
  %v694 = vmax.f32 %v610, 0.0
  %v695 = vmax.f32 %v615, 0.0
  %v696 = vmax.f32 %v618, 0.0
  %v697 = vmax.f32 %v623, 0.0
  %v698 = vmax.f32 %v626, 0.0
  %v699 = vmax.f32 %v631, 0.0
  %v700 = vmax.f32 %v634, 0.0
  %vm701 = vcmask 130048
  %702 = vst.msk [vmem:[%s3] sm:$0xff] %vm701, %v637
  %703 = vst.msk [vmem:[%s3 + $0x8] sm:$0xff] %vm701, %v638
  %704 = vst.msk [vmem:[%s3 + $0x10] sm:$0xff] %vm701, %v639
  %705 = vst.msk [vmem:[%s3 + $0x18] sm:$0xff] %vm701, %v640
  %706 = vst.msk [vmem:[%s3 + $0x20] sm:$0xff] %vm701, %v641
  %707 = vst.msk [vmem:[%s3 + $0x28] sm:$0xff] %vm701, %v642
  %708 = vst.msk [vmem:[%s3 + $0x30] sm:$0xff] %vm701, %v643
  %709 = vst.msk [vmem:[%s3 + $0x38] sm:$0xff] %vm701, %v644
  %710 = vst.msk [vmem:[%s3 + $0x40] sm:$0xff] %vm701, %v645
  %711 = vst.msk [vmem:[%s3 + $0x48] sm:$0xff] %vm701, %v646
  %712 = vst.msk [vmem:[%s3 + $0x50] sm:$0xff] %vm701, %v647
  %713 = vst.msk [vmem:[%s3 + $0x58] sm:$0xff] %vm701, %v648
  %714 = vst.msk [vmem:[%s3 + $0x60] sm:$0xff] %vm701, %v649
  %715 = vst.msk [vmem:[%s3 + $0x68] sm:$0xff] %vm701, %v650
  %716 = vst.msk [vmem:[%s3 + $0x70] sm:$0xff] %vm701, %v651
  %717 = vst.msk [vmem:[%s3 + $0x78] sm:$0xff] %vm701, %v652
  %718 = vst.msk [vmem:[%s3 + $0x80] sm:$0xff] %vm701, %v653
  %719 = vst.msk [vmem:[%s3 + $0x88] sm:$0xff] %vm701, %v654
  %720 = vst.msk [vmem:[%s3 + $0x90] sm:$0xff] %vm701, %v655
  %721 = vst.msk [vmem:[%s3 + $0x98] sm:$0xff] %vm701, %v656
  %722 = vst.msk [vmem:[%s3 + $0xa0] sm:$0xff] %vm701, %v657
  %723 = vst.msk [vmem:[%s3 + $0xa8] sm:$0xff] %vm701, %v658
  %724 = vst.msk [vmem:[%s3 + $0xb0] sm:$0xff] %vm701, %v659
  %725 = vst.msk [vmem:[%s3 + $0xb8] sm:$0xff] %vm701, %v660
  %726 = vst.msk [vmem:[%s3 + $0xc0] sm:$0xff] %vm701, %v661
  %727 = vst.msk [vmem:[%s3 + $0xc8] sm:$0xff] %vm701, %v662
  %728 = vst.msk [vmem:[%s3 + $0xd0] sm:$0xff] %vm701, %v663
  %729 = vst.msk [vmem:[%s3 + $0xd8] sm:$0xff] %vm701, %v664
  %730 = vst.msk [vmem:[%s3 + $0xe0] sm:$0xff] %vm701, %v665
  %731 = vst.msk [vmem:[%s3 + $0xe8] sm:$0xff] %vm701, %v666
  %732 = vst.msk [vmem:[%s3 + $0xf0] sm:$0xff] %vm701, %v667
  %733 = vst.msk [vmem:[%s3 + $0xf8] sm:$0xff] %vm701, %v668
  %734 = vst.msk [vmem:[%s3 + $0x100] sm:$0xff] %vm701, %v669
  %735 = vst.msk [vmem:[%s3 + $0x108] sm:$0xff] %vm701, %v670
  %736 = vst.msk [vmem:[%s3 + $0x110] sm:$0xff] %vm701, %v671
  %737 = vst.msk [vmem:[%s3 + $0x118] sm:$0xff] %vm701, %v672
  %738 = vst.msk [vmem:[%s3 + $0x120] sm:$0xff] %vm701, %v673
  %739 = vst.msk [vmem:[%s3 + $0x128] sm:$0xff] %vm701, %v674
  %740 = vst.msk [vmem:[%s3 + $0x130] sm:$0xff] %vm701, %v675
  %741 = vst.msk [vmem:[%s3 + $0x138] sm:$0xff] %vm701, %v676
  %742 = vst.msk [vmem:[%s3 + $0x140] sm:$0xff] %vm701, %v677
  %743 = vst.msk [vmem:[%s3 + $0x148] sm:$0xff] %vm701, %v678
  %744 = vst.msk [vmem:[%s3 + $0x150] sm:$0xff] %vm701, %v679
  %745 = vst.msk [vmem:[%s3 + $0x158] sm:$0xff] %vm701, %v680
  %746 = vst.msk [vmem:[%s3 + $0x160] sm:$0xff] %vm701, %v681
  %747 = vst.msk [vmem:[%s3 + $0x168] sm:$0xff] %vm701, %v682
  %748 = vst.msk [vmem:[%s3 + $0x170] sm:$0xff] %vm701, %v683
  %749 = vst.msk [vmem:[%s3 + $0x178] sm:$0xff] %vm701, %v684
  %750 = vst.msk [vmem:[%s3 + $0x180] sm:$0xff] %vm701, %v685
  %751 = vst.msk [vmem:[%s3 + $0x188] sm:$0xff] %vm701, %v686
  %752 = vst.msk [vmem:[%s3 + $0x190] sm:$0xff] %vm701, %v687
  %753 = vst.msk [vmem:[%s3 + $0x198] sm:$0xff] %vm701, %v688
  %754 = vst.msk [vmem:[%s3 + $0x1a0] sm:$0xff] %vm701, %v689
  %755 = vst.msk [vmem:[%s3 + $0x1a8] sm:$0xff] %vm701, %v690
  %756 = vst.msk [vmem:[%s3 + $0x1b0] sm:$0xff] %vm701, %v691
  %757 = vst.msk [vmem:[%s3 + $0x1b8] sm:$0xff] %vm701, %v692
  %758 = vst.msk [vmem:[%s3 + $0x1c0] sm:$0xff] %vm701, %v693
  %759 = vst.msk [vmem:[%s3 + $0x1c8] sm:$0xff] %vm701, %v694
  %760 = vst.msk [vmem:[%s3 + $0x1d0] sm:$0xff] %vm701, %v695
  %761 = vst.msk [vmem:[%s3 + $0x1d8] sm:$0xff] %vm701, %v696
  %762 = vst.msk [vmem:[%s3 + $0x1e0] sm:$0xff] %vm701, %v697
  %763 = vst.msk [vmem:[%s3 + $0x1e8] sm:$0xff] %vm701, %v698
  %764 = vst.msk [vmem:[%s3 + $0x1f0] sm:$0xff] %vm701, %v699
  %765 = vst.msk [vmem:[%s3 + $0x1f8] sm:$0xff] %vm701, %v700
  // Predicated region
  $region14: #{bottleneck_forward.4} parent=0 // pred_check
    _
  $region15: #{bottleneck_forward.4} parent=0 // pred_check_branch
    %767 = sbr.rel (0) target = $region17
  $region16: #{bottleneck_forward.4} parent=0 // pred_region
    _
  $region17: #{bottleneck_forward.4} parent=0 // pred_fallthru
    _
  // Predicated region
  $region18: #{bottleneck_forward.4} parent=0 // pred_check
    _
  $region19: #{bottleneck_forward.4} parent=0 // pred_check_branch
    %769 = sbr.rel (0) target = $region21
  $region20: #{bottleneck_forward.4} parent=0 // pred_region
    _
  $region21: #{bottleneck_forward.4} parent=0 // pred_fallthru
    _

</llo_original>
